<compile_context>
chip_gen: v7x
topology: tpu7x:2x2x1
jax: 0.10.0
libtpu: 0.0.40
codegen_flags: <defaults>
</compile_context>

<pallas_src>
import functools

import jax
import jax.numpy as jnp
from jax.experimental import pallas as pl
from jax.experimental.pallas import tpu as pltpu


# CenterTrack-style heads (out channels) of DLASeg / OutputHeads
HEADS = {"hm": 2, "ltrb_amodal": 4, "reg": 2, "tracking": 2, "wh": 2}
HEAD_CONV = 256           # head_convs = [256]
DLA_LAST_CHANNEL = 64     # last_channel of DLA-34 + DLAUp at stride 4
EMBEDDING_DIM = 16
C_TOTAL = sum(HEADS.values())   # 12 real output channels
C_PAD = 128                     # padded to a full lane width for unmasked stores

_VMEM_LIMIT = 48 * 1024 * 1024       # headroom vs v7x 64 MiB physical VMEM
_TILE_BUDGET = 24 * 1024 * 1024      # budget used when picking the M tile


def _pick_tile_m(m, row_bytes, resident_bytes, budget=_TILE_BUDGET):
    """Largest M tile (multiple of 32, divisor of m) that fits the VMEM budget,
    preferring a tile that leaves >= 2 grid steps so v7x's two TensorCores can
    both be used via dimension_semantics=('parallel',)."""
    best = None
    for t in (1024, 512, 256, 128, 64, 32):
        if m % t:
            continue
        if resident_bytes + t * row_bytes > budget:
            continue
        if best is None:
            best = t                      # largest fitting tile
        if m // t >= 2:
            return t                      # largest fitting tile with >=2 steps
    return best if best is not None else m


# ---------------------------------------------------------------------------
# Pallas kernels
# ---------------------------------------------------------------------------

def _matmul_bias_kernel(x_ref, w_ref, b_ref, o_ref, *, relu):
    """(tm, K) bf16 @ (K, N) bf16 -> f32 acc, + bias (+ optional ReLU)."""
    acc = jnp.dot(x_ref[...], w_ref[...], preferred_element_type=jnp.float32)
    acc = acc + b_ref[...]
    if relu:
        acc = jnp.maximum(acc, 0.0)
    o_ref[...] = acc.astype(o_ref.dtype)


def _fused_heads_kernel(t_ref, w1_ref, b1_ref, w2_ref, b2_ref, o_ref):
    """All five heads at once:
       h   = relu( taps(tm,576) @ w1(576,1280) + b1 )   [stays in VMEM]
       out = h @ w2_blockdiag(1280,128) + b2            [one 128-lane unmasked store]
    """
    h = jnp.dot(t_ref[...], w1_ref[...], preferred_element_type=jnp.float32)
    h = jnp.maximum(h + b1_ref[...], 0.0)
    out = jnp.dot(h.astype(jnp.bfloat16), w2_ref[...],
                  preferred_element_type=jnp.float32)
    o_ref[...] = (out + b2_ref[...]).astype(o_ref.dtype)


# ---------------------------------------------------------------------------
# Launch helpers (glue: reshape / pad / transpose stays in plain JAX)
# ---------------------------------------------------------------------------

def _launch_matmul_bias(x2d, w, b, *, relu=False, out_dtype=jnp.float32):
    """Generic (M,K)@(K,N)+b launcher; bf16 operands, f32 accumulation."""
    m, k = x2d.shape
    n = w.shape[-1]
    xb = x2d.astype(jnp.bfloat16)
    wb = w.astype(jnp.bfloat16)
    bf = b.reshape(1, n).astype(jnp.float32)

    row_bytes = 2 * k * 2 + 2 * n * 4          # double-buffered in + out rows
    resident = 2 * (k * n * 2 + n * 4)         # weights + bias (double-buffered)
    tm = _pick_tile_m(m, row_bytes, resident)

    out = pl.pallas_call(
        functools.partial(_matmul_bias_kernel, relu=relu),
        grid=(m // tm,),
        out_shape=jax.ShapeDtypeStruct((m, n), out_dtype),
        in_specs=[
            pl.BlockSpec((tm, k), lambda i: (i, 0)),
            pl.BlockSpec((k, n), lambda i: (0, 0)),
            pl.BlockSpec((1, n), lambda i: (0, 0)),
        ],
        out_specs=pl.BlockSpec((tm, n), lambda i: (i, 0)),
        compiler_params=pltpu.CompilerParams(
            dimension_semantics=("parallel",),
            vmem_limit_bytes=_VMEM_LIMIT),
        cost_estimate=pl.CostEstimate(
            flops=2 * m * k * n, transcendentals=0,
            bytes_accessed=m * k * 2 + k * n * 2 + m * n * 4),
    )(xb, wb, bf)
    return out


def pointwise_conv(x_nhwc, w, b, *, relu=False, out_dtype=jnp.float32):
    """1x1 convolution.  x: (N,H,W,Cin), w: (Cin,Cout), b: (1,Cout)."""
    n, h, wd, cin = x_nhwc.shape
    cout = w.shape[-1]
    out = _launch_matmul_bias(x_nhwc.reshape(n * h * wd, cin), w, b,
                              relu=relu, out_dtype=out_dtype)
    return out.reshape(n, h, wd, cout)


def _im2col_3x3(x_nhwc, stride=1):
    """Lane-dense im2col for a same-padded 3x3 conv with the given output stride.
    Returns (M, 9*Cin) with taps in row-major (dy,dx) order on the channel axis."""
    n, h, wd, cin = x_nhwc.shape
    xp = jnp.pad(x_nhwc, ((0, 0), (1, 1), (1, 1), (0, 0)))
    ho, wo = h // stride, wd // stride
    taps = jnp.concatenate(
        [xp[:, dy:dy + h:stride, dx:dx + wd:stride, :]
         for dy in range(3) for dx in range(3)], axis=-1)
    return taps.reshape(n * ho * wo, 9 * cin), (n, ho, wo)


def fused_heads(feat_nhwc, w1, b1, w2, b2):
    """All five heads in one pallas_call over the shared stride-4 feature map.
    Returns (N, H4, W4, C_TOTAL) f32 (the lane-padding is sliced off here)."""
    taps, (n, ho, wo) = _im2col_3x3(feat_nhwc, stride=1)
    taps = taps.astype(jnp.bfloat16)
    m, k = taps.shape                     # k = 9*64 = 576
    hc = w1.shape[-1]                     # 5*256 = 1280
    c_pad = w2.shape[-1]                  # 128 (12 real + zero padding)

    w1b = w1.astype(jnp.bfloat16)
    w2b = w2.astype(jnp.bfloat16)
    b1f = b1.reshape(1, hc).astype(jnp.float32)
    b2f = b2.reshape(1, c_pad).astype(jnp.float32)

    row_bytes = 2 * k * 2 + hc * 4 + 2 * c_pad * 4   # taps dbuf + f32 h + out dbuf
    resident = 2 * (k * hc * 2 + hc * 4 + hc * c_pad * 2 + c_pad * 4)
    tm = _pick_tile_m(m, row_bytes, resident)

    flops = 2 * m * (k * hc + hc * c_pad)
    bytes_accessed = (m * k * 2 + k * hc * 2 + hc * c_pad * 2
                      + m * c_pad * 4 + hc * 4 + c_pad * 4)

    out = pl.pallas_call(
        _fused_heads_kernel,
        grid=(m // tm,),
        out_shape=jax.ShapeDtypeStruct((m, c_pad), jnp.float32),
        in_specs=[
            pl.BlockSpec((tm, k), lambda i: (i, 0)),
            pl.BlockSpec((k, hc), lambda i: (0, 0)),
            pl.BlockSpec((1, hc), lambda i: (0, 0)),
            pl.BlockSpec((hc, c_pad), lambda i: (0, 0)),
            pl.BlockSpec((1, c_pad), lambda i: (0, 0)),
        ],
        out_specs=pl.BlockSpec((tm, c_pad), lambda i: (i, 0)),
        compiler_params=pltpu.CompilerParams(
            dimension_semantics=("parallel",),
            vmem_limit_bytes=_VMEM_LIMIT),
        cost_estimate=pl.CostEstimate(flops=flops, transcendentals=0,
                                      bytes_accessed=bytes_accessed),
    )(taps, w1b, b1f, w2b, b2f)
    # Drop the zero-padded lanes; only the first C_TOTAL columns are real.
    return out[:, :C_TOTAL].reshape(n, ho, wo, C_TOTAL)


# ---------------------------------------------------------------------------
# Parameters (deterministic synthetic init; shapes implied by the module)
# ---------------------------------------------------------------------------

def init_params(key):
    params = {}

    def _w(k, shape, fan_in):
        return (jax.random.normal(k, shape, jnp.float32)
                * (1.0 / jnp.sqrt(jnp.float32(fan_in))))

    keys = jax.random.split(key, 2 + 2 * len(HEADS))
    ki = iter(keys)

    # channel_down: Conv2d(16 -> 3, k=1)
    params["down_w"] = _w(next(ki), (EMBEDDING_DIM, 3), EMBEDDING_DIM)
    params["down_b"] = jnp.zeros((1, 3), jnp.float32)

    # DLA stem stand-in: 3x3 conv, 3 -> 64 (weights stored flat as (9*Cin, Cout))
    params["stem_w"] = _w(next(ki), (9 * 3, DLA_LAST_CHANNEL), 9 * 3)
    params["stem_b"] = jnp.zeros((1, DLA_LAST_CHANNEL), jnp.float32)

    # OutputHeads: per head  Conv3x3(64->256) -> ReLU -> Conv1x1(256->c)
    for name, c in HEADS.items():
        params[name + "_w1"] = _w(next(ki),
                                  (9 * DLA_LAST_CHANNEL, HEAD_CONV),
                                  9 * DLA_LAST_CHANNEL)
        params[name + "_b1"] = jnp.zeros((1, HEAD_CONV), jnp.float32)
        params[name + "_w2"] = _w(next(ki), (HEAD_CONV, c), HEAD_CONV)
        params[name + "_b2"] = jnp.zeros((1, c), jnp.float32)
    return params


def _fused_head_params(params):
    """Concatenate all heads' weights for the single fused-heads kernel.
    w2/b2 are zero-padded on the output axis to C_PAD (=128) lanes so the
    kernel's output store is a full unmasked 128-lane vst."""
    names = list(HEADS)
    w1 = jnp.concatenate([params[n + "_w1"] for n in names], axis=-1)  # (576, 1280)
    b1 = jnp.concatenate([params[n + "_b1"] for n in names], axis=-1)  # (1, 1280)
    w2 = jnp.zeros((len(names) * HEAD_CONV, C_PAD), jnp.float32)       # block-diag + pad
    b2 = jnp.zeros((1, C_PAD), jnp.float32)
    off = 0
    for idx, n in enumerate(names):
        c = HEADS[n]
        w2 = w2.at[idx * HEAD_CONV:(idx + 1) * HEAD_CONV,
                   off:off + c].set(params[n + "_w2"])
        b2 = b2.at[:, off:off + c].set(params[n + "_b2"])
        off += c
    return w1, b1, w2, b2


# ---------------------------------------------------------------------------
# RgbBranch forward
# ---------------------------------------------------------------------------

def rgb_branch_forward(temporal_fusion_nchw, params):
    """temporal_fusion: (N, 16, H, W) NCHW, float32.
    Returns (final_heads: dict[str, (N,c,H/4,W/4)], dla_output: (N,64,H/4,W/4))."""
    x = jnp.transpose(temporal_fusion_nchw, (0, 2, 3, 1))  # -> NHWC

    # channel_down: 1x1 conv 16 -> 3 (intermediate kept in bf16)
    t_mix = pointwise_conv(x, params["down_w"], params["down_b"],
                           out_dtype=jnp.bfloat16)

    # TODO(synk): DLASeg (full DLA-34 backbone + DLAUp/IDAUp with deformable
    # convolutions) is an external module with no clean Pallas equivalent here;
    # it is approximated by one 3x3 conv (3->64) + ReLU whose stride-4 subsample
    # is folded directly into the im2col (only stride-4 outputs are computed).
    taps, (n, h4, w4) = _im2col_3x3(t_mix, stride=4)
    feat2d = _launch_matmul_bias(taps, params["stem_w"], params["stem_b"],
                                 relu=True)                      # (M4, 64) f32
    feat = feat2d.reshape(n, h4, w4, DLA_LAST_CHANNEL)

    # OutputHeads: all five heads fused into one kernel; one lane-dense output.
    w1, b1, w2, b2 = _fused_head_params(params)
    y = fused_heads(feat, w1, b1, w2, b2)                        # (N,H4,W4,12)
    y = jnp.transpose(y, (0, 3, 1, 2))                           # single transpose

    final = {}
    off = 0
    for name, c in HEADS.items():
        final[name] = y[:, off:off + c]
        off += c

    dla_output = jnp.transpose(feat, (0, 3, 1, 2))               # (N,64,H/4,W/4)
    return final, dla_output


if __name__ == "__main__":
    key = jax.random.PRNGKey(0)
    # temporal_fusion: (batch=2, embedding_dim=16, H=32, W=32), NCHW like PyTorch
    temporal_fusion = jax.random.normal(key, (2, EMBEDDING_DIM, 32, 32),
                                        jnp.float32)
    params = init_params(jax.random.PRNGKey(1))

    forward = jax.jit(rgb_branch_forward)
    final, dla_output = forward(temporal_fusion, params)
    jax.block_until_ready((final, dla_output))

    # sanity on shapes implied by the module
    assert dla_output.shape == (2, DLA_LAST_CHANNEL, 8, 8)
    for name, c in HEADS.items():
        assert final[name].shape == (2, c, 8, 8)

    print("KERNEL_OK")
</pallas_src>

<mosaic_0001>
module attributes {stable_mosaic.version = 11 : i64} {
  func.func @_matmul_bias_kernel(%arg0: i32, %arg1: memref<1024x16xbf16, #tpu.memory_space<vmem>>, %arg2: memref<16x3xbf16, #tpu.memory_space<vmem>>, %arg3: memref<1x3xf32, #tpu.memory_space<vmem>>, %arg4: memref<1024x3xbf16, #tpu.memory_space<vmem>>) attributes {dimension_semantics = [#tpu.dimension_semantics<parallel>], iteration_bounds = array<i64: 2>, scalar_prefetch = 0 : i64, scratch_operands = 0 : i64, tpu.core_type = #tpu.core_type<tc>, window_params = [{transform_indices = @transform_0, window_bounds = array<i64: 1024, 16>}, {pipeline_mode = #tpu.pipeline_mode<synchronous>, transform_indices = @transform_1, window_bounds = array<i64: 16, 3>}, {pipeline_mode = #tpu.pipeline_mode<synchronous>, transform_indices = @transform_2, window_bounds = array<i64: 1, 3>}, {transform_indices = @transform_3, window_bounds = array<i64: 1024, 3>}]} {
    %c0 = arith.constant 0 : index
    %c0_0 = arith.constant 0 : index
    %0 = vector.load %arg1[%c0, %c0_0] : memref<1024x16xbf16, #tpu.memory_space<vmem>>, vector<1024x16xbf16>
    %c0_1 = arith.constant 0 : index
    %c0_2 = arith.constant 0 : index
    %1 = vector.load %arg2[%c0_1, %c0_2] : memref<16x3xbf16, #tpu.memory_space<vmem>>, vector<16x3xbf16>
    %cst = arith.constant dense<0.000000e+00> : vector<1024x3xf32>
    %2 = tpu.matmul %0, %1, %cst {dimension_numbers = #tpu.dot_dimension_numbers<[1], [0], [0], [1], [0, 0, 1, 1], [], []>} : vector<1024x16xbf16>, vector<16x3xbf16>, vector<1024x3xf32> -> vector<1024x3xf32>
    %c0_3 = arith.constant 0 : index
    %c0_4 = arith.constant 0 : index
    %3 = vector.load %arg3[%c0_3, %c0_4] : memref<1x3xf32, #tpu.memory_space<vmem>>, vector<1x3xf32>
    %4 = vector.broadcast %3 : vector<1x3xf32> to vector<1024x3xf32>
    %5 = arith.addf %2, %4 : vector<1024x3xf32>
    %6 = arith.truncf %5 : vector<1024x3xf32> to vector<1024x3xbf16>
    %c0_5 = arith.constant 0 : index
    %c0_6 = arith.constant 0 : index
    %7 = vector.load %arg4[%c0_5, %c0_6] : memref<1024x3xbf16, #tpu.memory_space<vmem>>, vector<1024x3xbf16>
    tpu.vector_store %arg4[%c0_5, %c0_6], %6 {strides = array<i32>} : memref<1024x3xbf16, #tpu.memory_space<vmem>>, vector<1024x3xbf16>,
    return
  }
  func.func @transform_0(%arg0: i32) -> (i32, i32) {
    %c0_i32 = arith.constant 0 : i32
    %c0_i32_0 = arith.constant 0 : i32
    return %arg0, %c0_i32 : i32, i32
  }
  func.func @transform_1(%arg0: i32) -> (i32, i32) {
    %c0_i32 = arith.constant 0 : i32
    %c0_i32_0 = arith.constant 0 : i32
    %c0_i32_1 = arith.constant 0 : i32
    return %c0_i32, %c0_i32_0 : i32, i32
  }
  func.func @transform_2(%arg0: i32) -> (i32, i32) {
    %c0_i32 = arith.constant 0 : i32
    %c0_i32_0 = arith.constant 0 : i32
    %c0_i32_1 = arith.constant 0 : i32
    return %c0_i32, %c0_i32_0 : i32, i32
  }
  func.func @transform_3(%arg0: i32) -> (i32, i32) {
    %c0_i32 = arith.constant 0 : i32
    %c0_i32_0 = arith.constant 0 : i32
    return %arg0, %c0_i32 : i32, i32
  }
}

module attributes {stable_mosaic.version = 11 : i64} {
  func.func @_matmul_bias_kernel(%arg0: i32, %arg1: memref<64x27xbf16, #tpu.memory_space<vmem>>, %arg2: memref<27x64xbf16, #tpu.memory_space<vmem>>, %arg3: memref<1x64xf32, #tpu.memory_space<vmem>>, %arg4: memref<64x64xf32, #tpu.memory_space<vmem>>) attributes {dimension_semantics = [#tpu.dimension_semantics<parallel>], iteration_bounds = array<i64: 2>, scalar_prefetch = 0 : i64, scratch_operands = 0 : i64, tpu.core_type = #tpu.core_type<tc>, window_params = [{transform_indices = @transform_0, window_bounds = array<i64: 64, 27>}, {pipeline_mode = #tpu.pipeline_mode<synchronous>, transform_indices = @transform_1, window_bounds = array<i64: 27, 64>}, {pipeline_mode = #tpu.pipeline_mode<synchronous>, transform_indices = @transform_2, window_bounds = array<i64: 1, 64>}, {transform_indices = @transform_3, window_bounds = array<i64: 64, 64>}]} {
    %c0 = arith.constant 0 : index
    %c0_0 = arith.constant 0 : index
    %0 = vector.load %arg1[%c0, %c0_0] : memref<64x27xbf16, #tpu.memory_space<vmem>>, vector<64x27xbf16>
    %c0_1 = arith.constant 0 : index
    %c0_2 = arith.constant 0 : index
    %1 = vector.load %arg2[%c0_1, %c0_2] : memref<27x64xbf16, #tpu.memory_space<vmem>>, vector<27x64xbf16>
    %cst = arith.constant dense<0.000000e+00> : vector<64x64xf32>
    %2 = tpu.matmul %0, %1, %cst {dimension_numbers = #tpu.dot_dimension_numbers<[1], [0], [0], [1], [0, 0, 1, 1], [], []>} : vector<64x27xbf16>, vector<27x64xbf16>, vector<64x64xf32> -> vector<64x64xf32>
    %c0_3 = arith.constant 0 : index
    %c0_4 = arith.constant 0 : index
    %3 = vector.load %arg3[%c0_3, %c0_4] : memref<1x64xf32, #tpu.memory_space<vmem>>, vector<1x64xf32>
    %4 = vector.broadcast %3 : vector<1x64xf32> to vector<64x64xf32>
    %5 = arith.addf %2, %4 : vector<64x64xf32>
    %cst_5 = arith.constant 0.000000e+00 : f32
    %6 = vector.broadcast %cst_5 : f32 to vector<64x64xf32>
    %7 = arith.maximumf %5, %6 : vector<64x64xf32>
    %c0_6 = arith.constant 0 : index
    %c0_7 = arith.constant 0 : index
    %8 = vector.load %arg4[%c0_6, %c0_7] : memref<64x64xf32, #tpu.memory_space<vmem>>, vector<64x64xf32>
    tpu.vector_store %arg4[%c0_6, %c0_7], %7 {strides = array<i32>} : memref<64x64xf32, #tpu.memory_space<vmem>>, vector<64x64xf32>,
    return
  }
  func.func @transform_0(%arg0: i32) -> (i32, i32) {
    %c0_i32 = arith.constant 0 : i32
    %c0_i32_0 = arith.constant 0 : i32
    return %arg0, %c0_i32 : i32, i32
  }
  func.func @transform_1(%arg0: i32) -> (i32, i32) {
    %c0_i32 = arith.constant 0 : i32
    %c0_i32_0 = arith.constant 0 : i32
    %c0_i32_1 = arith.constant 0 : i32
    return %c0_i32, %c0_i32_0 : i32, i32
  }
  func.func @transform_2(%arg0: i32) -> (i32, i32) {
    %c0_i32 = arith.constant 0 : i32
    %c0_i32_0 = arith.constant 0 : i32
    %c0_i32_1 = arith.constant 0 : i32
    return %c0_i32, %c0_i32_0 : i32, i32
  }
  func.func @transform_3(%arg0: i32) -> (i32, i32) {
    %c0_i32 = arith.constant 0 : i32
    %c0_i32_0 = arith.constant 0 : i32
    return %arg0, %c0_i32 : i32, i32
  }
}

module attributes {stable_mosaic.version = 11 : i64} {
  func.func @_fused_heads_kernel(%arg0: i32, %arg1: memref<64x576xbf16, #tpu.memory_space<vmem>>, %arg2: memref<576x1280xbf16, #tpu.memory_space<vmem>>, %arg3: memref<1x1280xf32, #tpu.memory_space<vmem>>, %arg4: memref<1280x128xbf16, #tpu.memory_space<vmem>>, %arg5: memref<1x128xf32, #tpu.memory_space<vmem>>, %arg6: memref<64x128xf32, #tpu.memory_space<vmem>>) attributes {dimension_semantics = [#tpu.dimension_semantics<parallel>], iteration_bounds = array<i64: 2>, scalar_prefetch = 0 : i64, scratch_operands = 0 : i64, tpu.core_type = #tpu.core_type<tc>, window_params = [{transform_indices = @transform_0, window_bounds = array<i64: 64, 576>}, {pipeline_mode = #tpu.pipeline_mode<synchronous>, transform_indices = @transform_1, window_bounds = array<i64: 576, 1280>}, {pipeline_mode = #tpu.pipeline_mode<synchronous>, transform_indices = @transform_2, window_bounds = array<i64: 1, 1280>}, {pipeline_mode = #tpu.pipeline_mode<synchronous>, transform_indices = @transform_3, window_bounds = array<i64: 1280, 128>}, {pipeline_mode = #tpu.pipeline_mode<synchronous>, transform_indices = @transform_4, window_bounds = array<i64: 1, 128>}, {transform_indices = @transform_5, window_bounds = array<i64: 64, 128>}]} {
    %c0 = arith.constant 0 : index
    %c0_0 = arith.constant 0 : index
    %0 = vector.load %arg1[%c0, %c0_0] : memref<64x576xbf16, #tpu.memory_space<vmem>>, vector<64x576xbf16>
    %c0_1 = arith.constant 0 : index
    %c0_2 = arith.constant 0 : index
    %1 = vector.load %arg2[%c0_1, %c0_2] : memref<576x1280xbf16, #tpu.memory_space<vmem>>, vector<576x1280xbf16>
    %cst = arith.constant dense<0.000000e+00> : vector<64x1280xf32>
    %2 = tpu.matmul %0, %1, %cst {dimension_numbers = #tpu.dot_dimension_numbers<[1], [0], [0], [1], [0, 0, 1, 1], [], []>} : vector<64x576xbf16>, vector<576x1280xbf16>, vector<64x1280xf32> -> vector<64x1280xf32>
    %c0_3 = arith.constant 0 : index
    %c0_4 = arith.constant 0 : index
    %3 = vector.load %arg3[%c0_3, %c0_4] : memref<1x1280xf32, #tpu.memory_space<vmem>>, vector<1x1280xf32>
    %4 = vector.broadcast %3 : vector<1x1280xf32> to vector<64x1280xf32>
    %5 = arith.addf %2, %4 : vector<64x1280xf32>
    %cst_5 = arith.constant 0.000000e+00 : f32
    %6 = vector.broadcast %cst_5 : f32 to vector<64x1280xf32>
    %7 = arith.maximumf %5, %6 : vector<64x1280xf32>
    %8 = arith.truncf %7 : vector<64x1280xf32> to vector<64x1280xbf16>
    %c0_6 = arith.constant 0 : index
    %c0_7 = arith.constant 0 : index
    %9 = vector.load %arg4[%c0_6, %c0_7] : memref<1280x128xbf16, #tpu.memory_space<vmem>>, vector<1280x128xbf16>
    %cst_8 = arith.constant dense<0.000000e+00> : vector<64x128xf32>
    %10 = tpu.matmul %8, %9, %cst_8 {dimension_numbers = #tpu.dot_dimension_numbers<[1], [0], [0], [1], [0, 0, 1, 1], [], []>} : vector<64x1280xbf16>, vector<1280x128xbf16>, vector<64x128xf32> -> vector<64x128xf32>
    %c0_9 = arith.constant 0 : index
    %c0_10 = arith.constant 0 : index
    %11 = vector.load %arg5[%c0_9, %c0_10] : memref<1x128xf32, #tpu.memory_space<vmem>>, vector<1x128xf32>
    %12 = vector.broadcast %11 : vector<1x128xf32> to vector<64x128xf32>
    %13 = arith.addf %10, %12 : vector<64x128xf32>
    %c0_11 = arith.constant 0 : index
    %c0_12 = arith.constant 0 : index
    %14 = vector.load %arg6[%c0_11, %c0_12] : memref<64x128xf32, #tpu.memory_space<vmem>>, vector<64x128xf32>
    tpu.vector_store %arg6[%c0_11, %c0_12], %13 {strides = array<i32>} : memref<64x128xf32, #tpu.memory_space<vmem>>, vector<64x128xf32>,
    return
  }
  func.func @transform_0(%arg0: i32) -> (i32, i32) {
    %c0_i32 = arith.constant 0 : i32
    %c0_i32_0 = arith.constant 0 : i32
    return %arg0, %c0_i32 : i32, i32
  }
  func.func @transform_1(%arg0: i32) -> (i32, i32) {
    %c0_i32 = arith.constant 0 : i32
    %c0_i32_0 = arith.constant 0 : i32
    %c0_i32_1 = arith.constant 0 : i32
    return %c0_i32, %c0_i32_0 : i32, i32
  }
  func.func @transform_2(%arg0: i32) -> (i32, i32) {
    %c0_i32 = arith.constant 0 : i32
    %c0_i32_0 = arith.constant 0 : i32
    %c0_i32_1 = arith.constant 0 : i32
    return %c0_i32, %c0_i32_0 : i32, i32
  }
  func.func @transform_3(%arg0: i32) -> (i32, i32) {
    %c0_i32 = arith.constant 0 : i32
    %c0_i32_0 = arith.constant 0 : i32
    %c0_i32_1 = arith.constant 0 : i32
    return %c0_i32, %c0_i32_0 : i32, i32
  }
  func.func @transform_4(%arg0: i32) -> (i32, i32) {
    %c0_i32 = arith.constant 0 : i32
    %c0_i32_0 = arith.constant 0 : i32
    %c0_i32_1 = arith.constant 0 : i32
    return %c0_i32, %c0_i32_0 : i32, i32
  }
  func.func @transform_5(%arg0: i32) -> (i32, i32) {
    %c0_i32 = arith.constant 0 : i32
    %c0_i32_0 = arith.constant 0 : i32
    return %arg0, %c0_i32 : i32, i32
  }
}

</mosaic_0001>

<llo_original>
// kernel: rgb_branch_forward.3
$region0: #{rgb_branch_forward.3}
  #allocation0 [shape = 'u32[]', space=smem, size = 0x4, offset = 0x4, fixed_abs, tag = 'smem constant byte address 0x4 - core index']
  #allocation1 [shape = 'u32[144,128]{1,0:T(1,128)}', space=vmem, size = 0x12000, scoped, tag = 'internal scratch']
  %s0 = inlined_call_operand.vmem [shape: bf16[2048,16], index: 0, kind: input, shape index: {}]
  %s1 = inlined_call_operand.vmem [shape: bf16[16,3], index: 1, kind: input, shape index: {}]
  %s2 = inlined_call_operand.vmem [shape: f32[1,3], index: 2, kind: input, shape index: {}]
  %s3 = inlined_call_operand.vmem [shape: bf16[2048,3], index: 3, kind: output, shape index: {}]
  %s4 = sld [smem:[#allocation0]]
  $region45: #{rgb_branch_forward.3} parent=0
    _
  %s6 = ssub.s32 1, %s4
  %s7 = scalar_select 0, %s6, %s4
  loop: start=0, step=1, limit=4
  $region2: #{rgb_branch_forward.3} parent=0 // loop_pre_header
    _
  $region3: #{rgb_branch_forward.3} parent=0 // loop_header
    %s9 = sphi 0, %s13
    %p10 = scmp.ge.s32.totalorder %s9, 4
    %s19 = sphi 0, %s21
    %s22 = sphi 0, %s19
    %s23 = sphi 0, %s22
    %s39 = sphi 0, %s23
    %s43 = sphi 0, %s43
    %s45 = sphi 0, %s43
    %s46 = sphi 0, %s45
    %s60 = sphi 0, %s46
    %s64 = sphi 0, %s64
    %s66 = sphi 0, %s64
    %s67 = sphi 0, %s66
    %s81 = sphi 0, %s67
    %s87 = sphi 0, %s89
    %s90 = sphi 0, %s87
    %s91 = sphi 0, %s90
    %s107 = sphi 0, %s91
  $region4: #{rgb_branch_forward.3} parent=0 // loop_header_branch
    %12 = sbr.rel (%p10) target = $region8
  $region5: #{rgb_branch_forward.3} parent=0 // loop_body
    %s14 = ssub.s32 %s9, 1
    %s15 = ssub.s32 %s9, 2
    %s16 = sadd.s32 %s9, 1
    %s17 = ssub.s32 %s9, %s16
    %p18 = scmp.eq.s32.totalorder %s17, 0
    %s20 = sadd.s32 %s19, 1
    %s21 = scalar_select %p18, %s19, %s20
    %p24 = pneg %p18
    %p25 = scmp.eq.s32.totalorder %s9, 1
    %p26 = por %p24, %p25
    %p27 = scmp.ne.s32.totalorder %s19, %s22
    %p28 = scmp.eq.s32.totalorder %s9, 0
    %p29 = por %p27, %p28
    %p30 = scmp.ne.s32.totalorder %s19, %s22
    %p31 = scmp.eq.s32.totalorder %s14, 1
    %p32 = por %p30, %p31
    %p33 = scmp.ne.s32.totalorder %s22, %s23
    %p34 = scmp.eq.s32.totalorder %s14, 0
    %p35 = por %p33, %p34
    %p36 = scmp.ne.s32.totalorder %s22, %s23
    %p37 = scmp.eq.s32.totalorder %s15, 1
    %p38 = por %p36, %p37
    %p40 = scmp.ne.s32.totalorder %s23, %s39
    %p41 = scmp.eq.s32.totalorder %s15, 0
    %p42 = por %p40, %p41
    %s44 = sadd.s32 %s43, 1
    %p47 = scmp.eq.s32.totalorder %s9, 1
    %p48 = scmp.ne.s32.totalorder %s43, %s45
    %p49 = scmp.eq.s32.totalorder %s9, 0
    %p50 = por %p48, %p49
    %p51 = scmp.ne.s32.totalorder %s43, %s45
    %p52 = scmp.eq.s32.totalorder %s14, 1
    %p53 = por %p51, %p52
    %p54 = scmp.ne.s32.totalorder %s45, %s46
    %p55 = scmp.eq.s32.totalorder %s14, 0
    %p56 = por %p54, %p55
    %p57 = scmp.ne.s32.totalorder %s45, %s46
    %p58 = scmp.eq.s32.totalorder %s15, 1
    %p59 = por %p57, %p58
    %p61 = scmp.ne.s32.totalorder %s46, %s60
    %p62 = scmp.eq.s32.totalorder %s15, 0
    %p63 = por %p61, %p62
    %s65 = sadd.s32 %s64, 1
    %p68 = scmp.eq.s32.totalorder %s9, 1
    %p69 = scmp.ne.s32.totalorder %s64, %s66
    %p70 = scmp.eq.s32.totalorder %s9, 0
    %p71 = por %p69, %p70
    %p72 = scmp.ne.s32.totalorder %s64, %s66
    %p73 = scmp.eq.s32.totalorder %s14, 1
    %p74 = por %p72, %p73
    %p75 = scmp.ne.s32.totalorder %s66, %s67
    %p76 = scmp.eq.s32.totalorder %s14, 0
    %p77 = por %p75, %p76
    %p78 = scmp.ne.s32.totalorder %s66, %s67
    %p79 = scmp.eq.s32.totalorder %s15, 1
    %p80 = por %p78, %p79
    %p82 = scmp.ne.s32.totalorder %s67, %s81
    %p83 = scmp.eq.s32.totalorder %s15, 0
    %p84 = por %p82, %p83
    %s85 = ssub.s32 %s9, %s16
    %p86 = scmp.eq.s32.totalorder %s85, 0
    %s88 = sadd.s32 %s87, 1
    %s89 = scalar_select %p86, %s87, %s88
    %p92 = pneg %p86
    %p93 = scmp.eq.s32.totalorder %s9, 1
    %p94 = por %p92, %p93
    %p95 = scmp.ne.s32.totalorder %s87, %s90
    %p96 = scmp.eq.s32.totalorder %s9, 0
    %p97 = por %p95, %p96
    %p98 = scmp.ne.s32.totalorder %s87, %s90
    %p99 = scmp.eq.s32.totalorder %s14, 1
    %p100 = por %p98, %p99
    %p101 = scmp.ne.s32.totalorder %s90, %s91
    %p102 = scmp.eq.s32.totalorder %s14, 0
    %p103 = por %p101, %p102
    %p104 = scmp.ne.s32.totalorder %s90, %s91
    %p105 = scmp.eq.s32.totalorder %s15, 1
    %p106 = por %p104, %p105
    %p108 = scmp.ne.s32.totalorder %s91, %s107
    %p109 = scmp.eq.s32.totalorder %s15, 0
    %p110 = por %p108, %p109
    %p111 = scmp.le.s32.totalorder 1, %s9
    %p112 = scmp.lt.s32.totalorder %s9, 3
    %p113 = pnand %p111, %p112
    %p114 = pneg %p113
    // Predicated region
    $region9: #{rgb_branch_forward.3} parent=5 // pred_check
      _
    $region10: #{rgb_branch_forward.3} parent=5 // pred_check_branch
      %116 = sbr.rel (%p113) target = $region12
    $region11: #{rgb_branch_forward.3} parent=5 // pred_region
      %s117 = ssub.s32 %s9, 1
      // Predicated region
      $region13: #{rgb_branch_forward.3} parent=11 // pred_check
        %p118 = pneg %p56
      $region14: #{rgb_branch_forward.3} parent=11 // pred_check_branch
        %120 = sbr.rel (%p118) target = $region16
      $region15: #{rgb_branch_forward.3} parent=11 // pred_region
        _
      $region16: #{rgb_branch_forward.3} parent=11 // pred_fallthru
        _
      // Predicated region
      $region17: #{rgb_branch_forward.3} parent=11 // pred_check
        %p121 = pneg %p77
      $region18: #{rgb_branch_forward.3} parent=11 // pred_check_branch
        %123 = sbr.rel (%p121) target = $region20
      $region19: #{rgb_branch_forward.3} parent=11 // pred_region
        _
      $region20: #{rgb_branch_forward.3} parent=11 // pred_fallthru
        _
    $region12: #{rgb_branch_forward.3} parent=5 // pred_fallthru
      _
    %p124 = scmp.lt.s32.totalorder %s9, 2
    // Predicated region
    $region21: #{rgb_branch_forward.3} parent=5 // pred_check
      %p125 = pneg %p124
    $region22: #{rgb_branch_forward.3} parent=5 // pred_check_branch
      %127 = sbr.rel (%p125) target = $region24
    $region23: #{rgb_branch_forward.3} parent=5 // pred_region
      // Predicated region
      $region25: #{rgb_branch_forward.3} parent=23 // pred_check
        %p128 = pneg %p29
      $region26: #{rgb_branch_forward.3} parent=23 // pred_check_branch
        %130 = sbr.rel (%p128) target = $region28
      $region27: #{rgb_branch_forward.3} parent=23 // pred_region
        %s131 = smul.u32 128, %s9
        %p132 = scmp.lt.s32.totalorder %s131, 255
        %s133 = scalar_select %p132, %s131, 255
        %s134 = smul.addr %s133, 4
        %s135 = scalar_lea.vmem %s0, %s134
        %s136 = smul.u32 128, %s9
      $region28: #{rgb_branch_forward.3} parent=23 // pred_fallthru
        _
    $region24: #{rgb_branch_forward.3} parent=5 // pred_fallthru
      _
    %p137 = scmp.le.s32.totalorder 1, %s9
    %p138 = scmp.lt.s32.totalorder %s9, 3
    %p139 = pnand %p137, %p138
    %p140 = pneg %p139
    // Predicated region
    $region29: #{rgb_branch_forward.3} parent=5 // pred_check
      _
    $region30: #{rgb_branch_forward.3} parent=5 // pred_check_branch
      %142 = sbr.rel (%p139) target = $region32
    $region31: #{rgb_branch_forward.3} parent=5 // pred_region
      %s143 = ssub.s32 %s9, 1
      %s144 = smul.u32 128, %s14
      %p145 = scmp.lt.s32.totalorder %s144, 255
      %s146 = scalar_select %p145, %s144, 255
      %s147 = smul.addr %s146, 4
      %s148 = scalar_lea.vmem %s0, %s147
      %p149 = pneg %p35
      %p150 = pneg %p32
      %p151 = pneg %p56
      %p152 = pneg %p53
      %p153 = pneg %p77
      %p154 = pneg %p74
      %p155 = pneg %p103
      %p156 = pneg %p100
      %s157 = smul.u32 128, %s14
      %p158 = scmp.lt.s32.totalorder %s157, 255
      %s159 = scalar_select %p158, %s157, 255
      %s160 = smul.addr %s159, 4
      %s161 = scalar_lea.vmem %s3, %s160
      %s162 = smul.u32 128, %s14
      %p163 = scmp.lt.s32.totalorder %s162, 255
      %s164 = scalar_select %p163, %s162, 255
      %s165 = smul.addr %s164, 4
      %s166 = scalar_lea.vmem %s0, %s165
      %s167 = smul.u32 128, %s14
      %s168 = smul.u32 128, %s14
      %p169 = scmp.lt.s32.totalorder %s168, 255
      %s170 = scalar_select %p169, %s168, 255
      %s171 = smul.addr %s170, 4
      %s172 = scalar_lea.vmem %s3, %s171
      %s173 = smul.u32 128, %s14
      %v175 = vld [vmem:[%s166] sm:$0xf]
      %v176 = vld [vmem:[%s166 + $0x4] sm:$0xf]
      %v177 = vld [vmem:[%s166 + $0x8] sm:$0xf]
      %v178 = vld [vmem:[%s166 + $0xc] sm:$0xf]
      %v179 = vld [vmem:[%s166 + $0x10] sm:$0xf]
      %v180 = vld [vmem:[%s166 + $0x14] sm:$0xf]
      %v181 = vld [vmem:[%s166 + $0x18] sm:$0xf]
      %v182 = vld [vmem:[%s166 + $0x1c] sm:$0xf]
      %v183 = vld [vmem:[%s166 + $0x20] sm:$0xf]
      %v184 = vld [vmem:[%s166 + $0x24] sm:$0xf]
      %v185 = vld [vmem:[%s166 + $0x28] sm:$0xf]
      %v186 = vld [vmem:[%s166 + $0x2c] sm:$0xf]
      %v187 = vld [vmem:[%s166 + $0x30] sm:$0xf]
      %v188 = vld [vmem:[%s166 + $0x34] sm:$0xf]
      %v189 = vld [vmem:[%s166 + $0x38] sm:$0xf]
      %v190 = vld [vmem:[%s166 + $0x3c] sm:$0xf]
      %v191 = vld [vmem:[%s166 + $0x40] sm:$0xf]
      %v192 = vld [vmem:[%s166 + $0x44] sm:$0xf]
      %v193 = vld [vmem:[%s166 + $0x48] sm:$0xf]
      %v194 = vld [vmem:[%s166 + $0x4c] sm:$0xf]
      %v195 = vld [vmem:[%s166 + $0x50] sm:$0xf]
      %v196 = vld [vmem:[%s166 + $0x54] sm:$0xf]
      %v197 = vld [vmem:[%s166 + $0x58] sm:$0xf]
      %v198 = vld [vmem:[%s166 + $0x5c] sm:$0xf]
      %v199 = vld [vmem:[%s166 + $0x60] sm:$0xf]
      %v200 = vld [vmem:[%s166 + $0x64] sm:$0xf]
      %v201 = vld [vmem:[%s166 + $0x68] sm:$0xf]
      %v202 = vld [vmem:[%s166 + $0x6c] sm:$0xf]
      %v203 = vld [vmem:[%s166 + $0x70] sm:$0xf]
      %v204 = vld [vmem:[%s166 + $0x74] sm:$0xf]
      %v205 = vld [vmem:[%s166 + $0x78] sm:$0xf]
      %v206 = vld [vmem:[%s166 + $0x7c] sm:$0xf]
      %v207 = vld [vmem:[%s166 + $0x80] sm:$0xf]
      %v208 = vld [vmem:[%s166 + $0x84] sm:$0xf]
      %v209 = vld [vmem:[%s166 + $0x88] sm:$0xf]
      %v210 = vld [vmem:[%s166 + $0x8c] sm:$0xf]
      %v211 = vld [vmem:[%s166 + $0x90] sm:$0xf]
      %v212 = vld [vmem:[%s166 + $0x94] sm:$0xf]
      %v213 = vld [vmem:[%s166 + $0x98] sm:$0xf]
      %v214 = vld [vmem:[%s166 + $0x9c] sm:$0xf]
      %v215 = vld [vmem:[%s166 + $0xa0] sm:$0xf]
      %v216 = vld [vmem:[%s166 + $0xa4] sm:$0xf]
      %v217 = vld [vmem:[%s166 + $0xa8] sm:$0xf]
      %v218 = vld [vmem:[%s166 + $0xac] sm:$0xf]
      %v219 = vld [vmem:[%s166 + $0xb0] sm:$0xf]
      %v220 = vld [vmem:[%s166 + $0xb4] sm:$0xf]
      %v221 = vld [vmem:[%s166 + $0xb8] sm:$0xf]
      %v222 = vld [vmem:[%s166 + $0xbc] sm:$0xf]
      %v223 = vld [vmem:[%s166 + $0xc0] sm:$0xf]
      %v224 = vld [vmem:[%s166 + $0xc4] sm:$0xf]
      %v225 = vld [vmem:[%s166 + $0xc8] sm:$0xf]
      %v226 = vld [vmem:[%s166 + $0xcc] sm:$0xf]
      %v227 = vld [vmem:[%s166 + $0xd0] sm:$0xf]
      %v228 = vld [vmem:[%s166 + $0xd4] sm:$0xf]
      %v229 = vld [vmem:[%s166 + $0xd8] sm:$0xf]
      %v230 = vld [vmem:[%s166 + $0xdc] sm:$0xf]
      %v231 = vld [vmem:[%s166 + $0xe0] sm:$0xf]
      %v232 = vld [vmem:[%s166 + $0xe4] sm:$0xf]
      %v233 = vld [vmem:[%s166 + $0xe8] sm:$0xf]
      %v234 = vld [vmem:[%s166 + $0xec] sm:$0xf]
      %v235 = vld [vmem:[%s166 + $0xf0] sm:$0xf]
      %v236 = vld [vmem:[%s166 + $0xf4] sm:$0xf]
      %v237 = vld [vmem:[%s166 + $0xf8] sm:$0xf]
      %v238 = vld [vmem:[%s166 + $0xfc] sm:$0xf]
      %v239 = vld [vmem:[%s166 + $0x100] sm:$0xf]
      %v240 = vld [vmem:[%s166 + $0x104] sm:$0xf]
      %v241 = vld [vmem:[%s166 + $0x108] sm:$0xf]
      %v242 = vld [vmem:[%s166 + $0x10c] sm:$0xf]
      %v243 = vld [vmem:[%s166 + $0x110] sm:$0xf]
      %v244 = vld [vmem:[%s166 + $0x114] sm:$0xf]
      %v245 = vld [vmem:[%s166 + $0x118] sm:$0xf]
      %v246 = vld [vmem:[%s166 + $0x11c] sm:$0xf]
      %v247 = vld [vmem:[%s166 + $0x120] sm:$0xf]
      %v248 = vld [vmem:[%s166 + $0x124] sm:$0xf]
      %v249 = vld [vmem:[%s166 + $0x128] sm:$0xf]
      %v250 = vld [vmem:[%s166 + $0x12c] sm:$0xf]
      %v251 = vld [vmem:[%s166 + $0x130] sm:$0xf]
      %v252 = vld [vmem:[%s166 + $0x134] sm:$0xf]
      %v253 = vld [vmem:[%s166 + $0x138] sm:$0xf]
      %v254 = vld [vmem:[%s166 + $0x13c] sm:$0xf]
      %v255 = vld [vmem:[%s166 + $0x140] sm:$0xf]
      %v256 = vld [vmem:[%s166 + $0x144] sm:$0xf]
      %v257 = vld [vmem:[%s166 + $0x148] sm:$0xf]
      %v258 = vld [vmem:[%s166 + $0x14c] sm:$0xf]
      %v259 = vld [vmem:[%s166 + $0x150] sm:$0xf]
      %v260 = vld [vmem:[%s166 + $0x154] sm:$0xf]
      %v261 = vld [vmem:[%s166 + $0x158] sm:$0xf]
      %v262 = vld [vmem:[%s166 + $0x15c] sm:$0xf]
      %v263 = vld [vmem:[%s166 + $0x160] sm:$0xf]
      %v264 = vld [vmem:[%s166 + $0x164] sm:$0xf]
      %v265 = vld [vmem:[%s166 + $0x168] sm:$0xf]
      %v266 = vld [vmem:[%s166 + $0x16c] sm:$0xf]
      %v267 = vld [vmem:[%s166 + $0x170] sm:$0xf]
      %v268 = vld [vmem:[%s166 + $0x174] sm:$0xf]
      %v269 = vld [vmem:[%s166 + $0x178] sm:$0xf]
      %v270 = vld [vmem:[%s166 + $0x17c] sm:$0xf]
      %v271 = vld [vmem:[%s166 + $0x180] sm:$0xf]
      %v272 = vld [vmem:[%s166 + $0x184] sm:$0xf]
      %v273 = vld [vmem:[%s166 + $0x188] sm:$0xf]
      %v274 = vld [vmem:[%s166 + $0x18c] sm:$0xf]
      %v275 = vld [vmem:[%s166 + $0x190] sm:$0xf]
      %v276 = vld [vmem:[%s166 + $0x194] sm:$0xf]
      %v277 = vld [vmem:[%s166 + $0x198] sm:$0xf]
      %v278 = vld [vmem:[%s166 + $0x19c] sm:$0xf]
      %v279 = vld [vmem:[%s166 + $0x1a0] sm:$0xf]
      %v280 = vld [vmem:[%s166 + $0x1a4] sm:$0xf]
      %v281 = vld [vmem:[%s166 + $0x1a8] sm:$0xf]
      %v282 = vld [vmem:[%s166 + $0x1ac] sm:$0xf]
      %v283 = vld [vmem:[%s166 + $0x1b0] sm:$0xf]
      %v284 = vld [vmem:[%s166 + $0x1b4] sm:$0xf]
      %v285 = vld [vmem:[%s166 + $0x1b8] sm:$0xf]
      %v286 = vld [vmem:[%s166 + $0x1bc] sm:$0xf]
      %v287 = vld [vmem:[%s166 + $0x1c0] sm:$0xf]
      %v288 = vld [vmem:[%s166 + $0x1c4] sm:$0xf]
      %v289 = vld [vmem:[%s166 + $0x1c8] sm:$0xf]
      %v290 = vld [vmem:[%s166 + $0x1cc] sm:$0xf]
      %v291 = vld [vmem:[%s166 + $0x1d0] sm:$0xf]
      %v292 = vld [vmem:[%s166 + $0x1d4] sm:$0xf]
      %v293 = vld [vmem:[%s166 + $0x1d8] sm:$0xf]
      %v294 = vld [vmem:[%s166 + $0x1dc] sm:$0xf]
      %v295 = vld [vmem:[%s166 + $0x1e0] sm:$0xf]
      %v296 = vld [vmem:[%s166 + $0x1e4] sm:$0xf]
      %v297 = vld [vmem:[%s166 + $0x1e8] sm:$0xf]
      %v298 = vld [vmem:[%s166 + $0x1ec] sm:$0xf]
      %v299 = vld [vmem:[%s166 + $0x1f0] sm:$0xf]
      %v300 = vld [vmem:[%s166 + $0x1f4] sm:$0xf]
      %v301 = vld [vmem:[%s166 + $0x1f8] sm:$0xf]
      %v302 = vld [vmem:[%s166 + $0x1fc] sm:$0xf]
      %v303 = vld [vmem:[%s1] sm:$0xf]
      %v304 = vld [vmem:[%s1 + $0x4] sm:$0xf]
      %v305 = vld [vmem:[%s2] sm:$0x1]
      %v307 = vlaneseq
      %v308 = vshrl.u32 %v307, 7
      %v309 = vsub.s32 0, %v308
      %v310 = vrot.slane %v305, %v309
      %v440 = vunpack.c.l.b16 %v175
      %v441 = vunpack.c.l.b16 %v176
      %v442 = vunpack.c.l.b16 %v177
      %v443 = vunpack.c.l.b16 %v178
      %v444 = vunpack.c.l.b16 %v179
      %v445 = vunpack.c.l.b16 %v180
      %v446 = vunpack.c.l.b16 %v181
      %v447 = vunpack.c.l.b16 %v182
      %v448 = vunpack.c.l.b16 %v183
      %v449 = vunpack.c.l.b16 %v184
      %v450 = vunpack.c.l.b16 %v185
      %v451 = vunpack.c.l.b16 %v186
      %v452 = vunpack.c.l.b16 %v187
      %v453 = vunpack.c.l.b16 %v188
      %v454 = vunpack.c.l.b16 %v189
      %v455 = vunpack.c.l.b16 %v190
      %v456 = vunpack.c.l.b16 %v191
      %v457 = vunpack.c.l.b16 %v192
      %v458 = vunpack.c.l.b16 %v193
      %v459 = vunpack.c.l.b16 %v194
      %v460 = vunpack.c.l.b16 %v195
      %v461 = vunpack.c.l.b16 %v196
      %v462 = vunpack.c.l.b16 %v197
      %v463 = vunpack.c.l.b16 %v198
      %v464 = vunpack.c.l.b16 %v199
      %v465 = vunpack.c.l.b16 %v200
      %v466 = vunpack.c.l.b16 %v201
      %v467 = vunpack.c.l.b16 %v202
      %v468 = vunpack.c.l.b16 %v203
      %v469 = vunpack.c.l.b16 %v204
      %v470 = vunpack.c.l.b16 %v205
      %v471 = vunpack.c.l.b16 %v206
      %v472 = vunpack.c.l.b16 %v207
      %v473 = vunpack.c.l.b16 %v208
      %v474 = vunpack.c.l.b16 %v209
      %v475 = vunpack.c.l.b16 %v210
      %v476 = vunpack.c.l.b16 %v211
      %v477 = vunpack.c.l.b16 %v212
      %v478 = vunpack.c.l.b16 %v213
      %v479 = vunpack.c.l.b16 %v214
      %v480 = vunpack.c.l.b16 %v215
      %v481 = vunpack.c.l.b16 %v216
      %v482 = vunpack.c.l.b16 %v217
      %v483 = vunpack.c.l.b16 %v218
      %v484 = vunpack.c.l.b16 %v219
      %v485 = vunpack.c.l.b16 %v220
      %v486 = vunpack.c.l.b16 %v221
      %v487 = vunpack.c.l.b16 %v222
      %v488 = vunpack.c.l.b16 %v223
      %v489 = vunpack.c.l.b16 %v224
      %v490 = vunpack.c.l.b16 %v225
      %v491 = vunpack.c.l.b16 %v226
      %v492 = vunpack.c.l.b16 %v227
      %v493 = vunpack.c.l.b16 %v228
      %v494 = vunpack.c.l.b16 %v229
      %v495 = vunpack.c.l.b16 %v230
      %v496 = vunpack.c.l.b16 %v231
      %v497 = vunpack.c.l.b16 %v232
      %v498 = vunpack.c.l.b16 %v233
      %v499 = vunpack.c.l.b16 %v234
      %v500 = vunpack.c.l.b16 %v235
      %v501 = vunpack.c.l.b16 %v236
      %v502 = vunpack.c.l.b16 %v237
      %v503 = vunpack.c.l.b16 %v238
      %v504 = vunpack.c.l.b16 %v239
      %v505 = vunpack.c.l.b16 %v240
      %v506 = vunpack.c.l.b16 %v241
      %v507 = vunpack.c.l.b16 %v242
      %v508 = vunpack.c.l.b16 %v243
      %v509 = vunpack.c.l.b16 %v244
      %v510 = vunpack.c.l.b16 %v245
      %v511 = vunpack.c.l.b16 %v246
      %v512 = vunpack.c.l.b16 %v247
      %v513 = vunpack.c.l.b16 %v248
      %v514 = vunpack.c.l.b16 %v249
      %v515 = vunpack.c.l.b16 %v250
      %v516 = vunpack.c.l.b16 %v251
      %v517 = vunpack.c.l.b16 %v252
      %v518 = vunpack.c.l.b16 %v253
      %v519 = vunpack.c.l.b16 %v254
      %v520 = vunpack.c.l.b16 %v255
      %v521 = vunpack.c.l.b16 %v256
      %v522 = vunpack.c.l.b16 %v257
      %v523 = vunpack.c.l.b16 %v258
      %v524 = vunpack.c.l.b16 %v259
      %v525 = vunpack.c.l.b16 %v260
      %v526 = vunpack.c.l.b16 %v261
      %v527 = vunpack.c.l.b16 %v262
      %v528 = vunpack.c.l.b16 %v263
      %v529 = vunpack.c.l.b16 %v264
      %v530 = vunpack.c.l.b16 %v265
      %v531 = vunpack.c.l.b16 %v266
      %v532 = vunpack.c.l.b16 %v267
      %v533 = vunpack.c.l.b16 %v268
      %v534 = vunpack.c.l.b16 %v269
      %v535 = vunpack.c.l.b16 %v270
      %v536 = vunpack.c.l.b16 %v271
      %v537 = vunpack.c.l.b16 %v272
      %v538 = vunpack.c.l.b16 %v273
      %v539 = vunpack.c.l.b16 %v274
      %v540 = vunpack.c.l.b16 %v275
      %v541 = vunpack.c.l.b16 %v276
      %v542 = vunpack.c.l.b16 %v277
      %v543 = vunpack.c.l.b16 %v278
      %v544 = vunpack.c.l.b16 %v279
      %v545 = vunpack.c.l.b16 %v280
      %v546 = vunpack.c.l.b16 %v281
      %v547 = vunpack.c.l.b16 %v282
      %v548 = vunpack.c.l.b16 %v283
      %v549 = vunpack.c.l.b16 %v284
      %v550 = vunpack.c.l.b16 %v285
      %v551 = vunpack.c.l.b16 %v286
      %v552 = vunpack.c.l.b16 %v287
      %v553 = vunpack.c.l.b16 %v288
      %v554 = vunpack.c.l.b16 %v289
      %v555 = vunpack.c.l.b16 %v290
      %v556 = vunpack.c.l.b16 %v291
      %v557 = vunpack.c.l.b16 %v292
      %v558 = vunpack.c.l.b16 %v293
      %v559 = vunpack.c.l.b16 %v294
      %v560 = vunpack.c.l.b16 %v295
      %v561 = vunpack.c.l.b16 %v296
      %v562 = vunpack.c.l.b16 %v297
      %v563 = vunpack.c.l.b16 %v298
      %v564 = vunpack.c.l.b16 %v299
      %v565 = vunpack.c.l.b16 %v300
      %v566 = vunpack.c.l.b16 %v301
      %v567 = vunpack.c.l.b16 %v302
      %v568 = vpack.c.b16 %v441, %v440
      %v569 = vpack.c.b16 %v443, %v442
      %v570 = vpack.c.b16 %v445, %v444
      %v571 = vpack.c.b16 %v447, %v446
      %v572 = vpack.c.b16 %v449, %v448
      %v573 = vpack.c.b16 %v451, %v450
      %v574 = vpack.c.b16 %v453, %v452
      %v575 = vpack.c.b16 %v455, %v454
      %v576 = vpack.c.b16 %v457, %v456
      %v577 = vpack.c.b16 %v459, %v458
      %v578 = vpack.c.b16 %v461, %v460
      %v579 = vpack.c.b16 %v463, %v462
      %v580 = vpack.c.b16 %v465, %v464
      %v581 = vpack.c.b16 %v467, %v466
      %v582 = vpack.c.b16 %v469, %v468
      %v583 = vpack.c.b16 %v471, %v470
      %v584 = vpack.c.b16 %v473, %v472
      %v585 = vpack.c.b16 %v475, %v474
      %v586 = vpack.c.b16 %v477, %v476
      %v587 = vpack.c.b16 %v479, %v478
      %v588 = vpack.c.b16 %v481, %v480
      %v589 = vpack.c.b16 %v483, %v482
      %v590 = vpack.c.b16 %v485, %v484
      %v591 = vpack.c.b16 %v487, %v486
      %v592 = vpack.c.b16 %v489, %v488
      %v593 = vpack.c.b16 %v491, %v490
      %v594 = vpack.c.b16 %v493, %v492
      %v595 = vpack.c.b16 %v495, %v494
      %v596 = vpack.c.b16 %v497, %v496
      %v597 = vpack.c.b16 %v499, %v498
      %v598 = vpack.c.b16 %v501, %v500
      %v599 = vpack.c.b16 %v503, %v502
      %v600 = vpack.c.b16 %v505, %v504
      %v601 = vpack.c.b16 %v507, %v506
      %v602 = vpack.c.b16 %v509, %v508
      %v603 = vpack.c.b16 %v511, %v510
      %v604 = vpack.c.b16 %v513, %v512
      %v605 = vpack.c.b16 %v515, %v514
      %v606 = vpack.c.b16 %v517, %v516
      %v607 = vpack.c.b16 %v519, %v518
      %v608 = vpack.c.b16 %v521, %v520
      %v609 = vpack.c.b16 %v523, %v522
      %v610 = vpack.c.b16 %v525, %v524
      %v611 = vpack.c.b16 %v527, %v526
      %v612 = vpack.c.b16 %v529, %v528
      %v613 = vpack.c.b16 %v531, %v530
      %v614 = vpack.c.b16 %v533, %v532
      %v615 = vpack.c.b16 %v535, %v534
      %v616 = vpack.c.b16 %v537, %v536
      %v617 = vpack.c.b16 %v539, %v538
      %v618 = vpack.c.b16 %v541, %v540
      %v619 = vpack.c.b16 %v543, %v542
      %v620 = vpack.c.b16 %v545, %v544
      %v621 = vpack.c.b16 %v547, %v546
      %v622 = vpack.c.b16 %v549, %v548
      %v623 = vpack.c.b16 %v551, %v550
      %v624 = vpack.c.b16 %v553, %v552
      %v625 = vpack.c.b16 %v555, %v554
      %v626 = vpack.c.b16 %v557, %v556
      %v627 = vpack.c.b16 %v559, %v558
      %v628 = vpack.c.b16 %v561, %v560
      %v629 = vpack.c.b16 %v563, %v562
      %v630 = vpack.c.b16 %v565, %v564
      %v631 = vpack.c.b16 %v567, %v566
      %v634 = vunpack.c.l.b16 %v303
      %v635 = vunpack.c.l.b16 %v304
      %v636 = vpack.c.b16 %v635, %v634
      %vm638 = vcmask 130048
      %v640 = vsel %vm638, %v568, 0
      %v643 = vsel %vm638, %v569, 0
      %v646 = vsel %vm638, %v570, 0
      %v649 = vsel %vm638, %v571, 0
      %v652 = vsel %vm638, %v572, 0
      %v655 = vsel %vm638, %v573, 0
      %v658 = vsel %vm638, %v574, 0
      %v661 = vsel %vm638, %v575, 0
      %v664 = vsel %vm638, %v576, 0
      %v667 = vsel %vm638, %v577, 0
      %v670 = vsel %vm638, %v578, 0
      %v673 = vsel %vm638, %v579, 0
      %v676 = vsel %vm638, %v580, 0
      %v679 = vsel %vm638, %v581, 0
      %v682 = vsel %vm638, %v582, 0
      %v685 = vsel %vm638, %v583, 0
      %v688 = vsel %vm638, %v584, 0
      %v691 = vsel %vm638, %v585, 0
      %v694 = vsel %vm638, %v586, 0
      %v697 = vsel %vm638, %v587, 0
      %v700 = vsel %vm638, %v588, 0
      %v703 = vsel %vm638, %v589, 0
      %v706 = vsel %vm638, %v590, 0
      %v709 = vsel %vm638, %v591, 0
      %v712 = vsel %vm638, %v592, 0
      %v715 = vsel %vm638, %v593, 0
      %v718 = vsel %vm638, %v594, 0
      %v721 = vsel %vm638, %v595, 0
      %v724 = vsel %vm638, %v596, 0
      %v727 = vsel %vm638, %v597, 0
      %v730 = vsel %vm638, %v598, 0
      %v733 = vsel %vm638, %v599, 0
      %v736 = vsel %vm638, %v600, 0
      %v739 = vsel %vm638, %v601, 0
      %v742 = vsel %vm638, %v602, 0
      %v745 = vsel %vm638, %v603, 0
      %v748 = vsel %vm638, %v604, 0
      %v751 = vsel %vm638, %v605, 0
      %v754 = vsel %vm638, %v606, 0
      %v757 = vsel %vm638, %v607, 0
      %v760 = vsel %vm638, %v608, 0
      %v763 = vsel %vm638, %v609, 0
      %v766 = vsel %vm638, %v610, 0
      %v769 = vsel %vm638, %v611, 0
      %v772 = vsel %vm638, %v612, 0
      %v775 = vsel %vm638, %v613, 0
      %v778 = vsel %vm638, %v614, 0
      %v781 = vsel %vm638, %v615, 0
      %v784 = vsel %vm638, %v616, 0
      %v787 = vsel %vm638, %v617, 0
      %v790 = vsel %vm638, %v618, 0
      %v793 = vsel %vm638, %v619, 0
      %v796 = vsel %vm638, %v620, 0
      %v799 = vsel %vm638, %v621, 0
      %v802 = vsel %vm638, %v622, 0
      %v805 = vsel %vm638, %v623, 0
      %v808 = vsel %vm638, %v624, 0
      %v811 = vsel %vm638, %v625, 0
      %v814 = vsel %vm638, %v626, 0
      %v817 = vsel %vm638, %v627, 0
      %v820 = vsel %vm638, %v628, 0
      %v823 = vsel %vm638, %v629, 0
      %v826 = vsel %vm638, %v630, 0
      %v829 = vsel %vm638, %v631, 0
      %831 = vmatprep.subr.bf16.mxu0 0
      %832 = vmatpush1.bf16.msra.mxu0 %v636
      %833 = vmatprep.subr.bf16.mxu0 0
      %834 = vmatpush1.bf16.msra.mxu0 0
      %835 = vmatprep.subr.bf16.mxu0 0
      %836 = vmatpush1.bf16.msra.mxu0 0
      %837 = vmatprep.subr.bf16.mxu0 0
      %838 = vmatpush1.bf16.msra.mxu0 0
      %839 = vmatprep.subr.bf16.mxu0 0
      %840 = vmatpush1.bf16.msra.mxu0 0
      %841 = vmatprep.subr.bf16.mxu0 0
      %842 = vmatpush1.bf16.msra.mxu0 0
      %843 = vmatprep.subr.bf16.mxu0 0
      %844 = vmatpush1.bf16.msra.mxu0 0
      %845 = vmatprep.subr.bf16.mxu0 0
      %846 = vmatpush1.bf16.msra.mxu0 0
      %847 = vmatprep.subr.bf16.mxu0 0
      %848 = vmatpush1.bf16.msra.mxu0 0
      %849 = vmatprep.subr.bf16.mxu0 0
      %850 = vmatpush1.bf16.msra.mxu0 0
      %851 = vmatprep.subr.bf16.mxu0 0
      %852 = vmatpush1.bf16.msra.mxu0 0
      %853 = vmatprep.subr.bf16.mxu0 0
      %854 = vmatpush1.bf16.msra.mxu0 0
      %855 = vmatprep.subr.bf16.mxu0 0
      %856 = vmatpush1.bf16.msra.mxu0 0
      %857 = vmatprep.subr.bf16.mxu0 0
      %858 = vmatpush1.bf16.msra.mxu0 0
      %859 = vmatprep.subr.bf16.mxu0 0
      %860 = vmatpush1.bf16.msra.mxu0 0
      %861 = vmatprep.subr.bf16.mxu0 0
      %862 = vmatpush1.bf16.msra.mxu0 0
      %863 = vmatprep.mubr.bf16.mxu0 0
      %864 = vmatmul.mubr.bf16.gmra.mrb[0].mxu0 %v640
      %v865 = vpop.f32.mrb[0].mxu0
      %v866 = vadd.f32 %v310, %v865
      %v867 = vpop.f32.mrb[0].mxu0
      %v868 = vpop.f32.mrb[0].mxu0
      %v869 = vadd.f32 %v310, %v868
      %v870 = vpop.f32.mrb[0].mxu0
      %871 = vmatprep.mubr.bf16.mxu0 0
      %872 = vmatmul.mubr.bf16.gmra.mrb[0].mxu0 %v643
      %v873 = vpop.f32.mrb[0].mxu0
      %v874 = vadd.f32 %v310, %v873
      %v875 = vpop.f32.mrb[0].mxu0
      %v876 = vpop.f32.mrb[0].mxu0
      %v877 = vadd.f32 %v310, %v876
      %v878 = vpop.f32.mrb[0].mxu0
      %879 = vmatprep.mubr.bf16.mxu0 0
      %880 = vmatmul.mubr.bf16.gmra.mrb[0].mxu0 %v646
      %v881 = vpop.f32.mrb[0].mxu0
      %v882 = vadd.f32 %v310, %v881
      %v883 = vpop.f32.mrb[0].mxu0
      %v884 = vpop.f32.mrb[0].mxu0
      %v885 = vadd.f32 %v310, %v884
      %v886 = vpop.f32.mrb[0].mxu0
      %887 = vmatprep.mubr.bf16.mxu0 0
      %888 = vmatmul.mubr.bf16.gmra.mrb[0].mxu0 %v649
      %v889 = vpop.f32.mrb[0].mxu0
      %v890 = vadd.f32 %v310, %v889
      %v891 = vpop.f32.mrb[0].mxu0
      %v892 = vpop.f32.mrb[0].mxu0
      %v893 = vadd.f32 %v310, %v892
      %v894 = vpop.f32.mrb[0].mxu0
      %895 = vmatprep.mubr.bf16.mxu0 0
      %896 = vmatmul.mubr.bf16.gmra.mrb[0].mxu0 %v652
      %v897 = vpop.f32.mrb[0].mxu0
      %v898 = vadd.f32 %v310, %v897
      %v899 = vpop.f32.mrb[0].mxu0
      %v900 = vpop.f32.mrb[0].mxu0
      %v901 = vadd.f32 %v310, %v900
      %v902 = vpop.f32.mrb[0].mxu0
      %903 = vmatprep.mubr.bf16.mxu0 0
      %904 = vmatmul.mubr.bf16.gmra.mrb[0].mxu0 %v655
      %v905 = vpop.f32.mrb[0].mxu0
      %v906 = vadd.f32 %v310, %v905
      %v907 = vpop.f32.mrb[0].mxu0
      %v908 = vpop.f32.mrb[0].mxu0
      %v909 = vadd.f32 %v310, %v908
      %v910 = vpop.f32.mrb[0].mxu0
      %911 = vmatprep.mubr.bf16.mxu0 0
      %912 = vmatmul.mubr.bf16.gmra.mrb[0].mxu0 %v658
      %v913 = vpop.f32.mrb[0].mxu0
      %v914 = vadd.f32 %v310, %v913
      %v915 = vpop.f32.mrb[0].mxu0
      %v916 = vpop.f32.mrb[0].mxu0
      %v917 = vadd.f32 %v310, %v916
      %v918 = vpop.f32.mrb[0].mxu0
      %919 = vmatprep.mubr.bf16.mxu0 0
      %920 = vmatmul.mubr.bf16.gmra.mrb[0].mxu0 %v661
      %v921 = vpop.f32.mrb[0].mxu0
      %v922 = vadd.f32 %v310, %v921
      %v923 = vpop.f32.mrb[0].mxu0
      %v924 = vpop.f32.mrb[0].mxu0
      %v925 = vadd.f32 %v310, %v924
      %v926 = vpop.f32.mrb[0].mxu0
      %927 = vmatprep.mubr.bf16.mxu0 0
      %928 = vmatmul.mubr.bf16.gmra.mrb[0].mxu0 %v664
      %v929 = vpop.f32.mrb[0].mxu0
      %v930 = vadd.f32 %v310, %v929
      %v931 = vpop.f32.mrb[0].mxu0
      %v932 = vpop.f32.mrb[0].mxu0
      %v933 = vadd.f32 %v310, %v932
      %v934 = vpop.f32.mrb[0].mxu0
      %935 = vmatprep.mubr.bf16.mxu0 0
      %936 = vmatmul.mubr.bf16.gmra.mrb[0].mxu0 %v667
      %v937 = vpop.f32.mrb[0].mxu0
      %v938 = vadd.f32 %v310, %v937
      %v939 = vpop.f32.mrb[0].mxu0
      %v940 = vpop.f32.mrb[0].mxu0
      %v941 = vadd.f32 %v310, %v940
      %v942 = vpop.f32.mrb[0].mxu0
      %943 = vmatprep.mubr.bf16.mxu0 0
      %944 = vmatmul.mubr.bf16.gmra.mrb[0].mxu0 %v670
      %v945 = vpop.f32.mrb[0].mxu0
      %v946 = vadd.f32 %v310, %v945
      %v947 = vpop.f32.mrb[0].mxu0
      %v948 = vpop.f32.mrb[0].mxu0
      %v949 = vadd.f32 %v310, %v948
      %v950 = vpop.f32.mrb[0].mxu0
      %951 = vmatprep.mubr.bf16.mxu0 0
      %952 = vmatmul.mubr.bf16.gmra.mrb[0].mxu0 %v673
      %v953 = vpop.f32.mrb[0].mxu0
      %v954 = vadd.f32 %v310, %v953
      %v955 = vpop.f32.mrb[0].mxu0
      %v956 = vpop.f32.mrb[0].mxu0
      %v957 = vadd.f32 %v310, %v956
      %v958 = vpop.f32.mrb[0].mxu0
      %959 = vmatprep.mubr.bf16.mxu0 0
      %960 = vmatmul.mubr.bf16.gmra.mrb[0].mxu0 %v676
      %v961 = vpop.f32.mrb[0].mxu0
      %v962 = vadd.f32 %v310, %v961
      %v963 = vpop.f32.mrb[0].mxu0
      %v964 = vpop.f32.mrb[0].mxu0
      %v965 = vadd.f32 %v310, %v964
      %v966 = vpop.f32.mrb[0].mxu0
      %967 = vmatprep.mubr.bf16.mxu0 0
      %968 = vmatmul.mubr.bf16.gmra.mrb[0].mxu0 %v679
      %v969 = vpop.f32.mrb[0].mxu0
      %v970 = vadd.f32 %v310, %v969
      %v971 = vpop.f32.mrb[0].mxu0
      %v972 = vpop.f32.mrb[0].mxu0
      %v973 = vadd.f32 %v310, %v972
      %v974 = vpop.f32.mrb[0].mxu0
      %975 = vmatprep.mubr.bf16.mxu0 0
      %976 = vmatmul.mubr.bf16.gmra.mrb[0].mxu0 %v682
      %v977 = vpop.f32.mrb[0].mxu0
      %v978 = vadd.f32 %v310, %v977
      %v979 = vpop.f32.mrb[0].mxu0
      %v980 = vpop.f32.mrb[0].mxu0
      %v981 = vadd.f32 %v310, %v980
      %v982 = vpop.f32.mrb[0].mxu0
      %983 = vmatprep.mubr.bf16.mxu0 0
      %984 = vmatmul.mubr.bf16.gmra.mrb[0].mxu0 %v685
      %v985 = vpop.f32.mrb[0].mxu0
      %v986 = vadd.f32 %v310, %v985
      %v987 = vpop.f32.mrb[0].mxu0
      %v988 = vpop.f32.mrb[0].mxu0
      %v989 = vadd.f32 %v310, %v988
      %v990 = vpop.f32.mrb[0].mxu0
      %991 = vmatprep.mubr.bf16.mxu0 0
      %992 = vmatmul.mubr.bf16.gmra.mrb[0].mxu0 %v688
      %v993 = vpop.f32.mrb[0].mxu0
      %v994 = vadd.f32 %v310, %v993
      %v995 = vpop.f32.mrb[0].mxu0
      %v996 = vpop.f32.mrb[0].mxu0
      %v997 = vadd.f32 %v310, %v996
      %v998 = vpop.f32.mrb[0].mxu0
      %999 = vmatprep.mubr.bf16.mxu0 0
      %1000 = vmatmul.mubr.bf16.gmra.mrb[0].mxu0 %v691
      %v1001 = vpop.f32.mrb[0].mxu0
      %v1002 = vadd.f32 %v310, %v1001
      %v1003 = vpop.f32.mrb[0].mxu0
      %v1004 = vpop.f32.mrb[0].mxu0
      %v1005 = vadd.f32 %v310, %v1004
      %v1006 = vpop.f32.mrb[0].mxu0
      %1007 = vmatprep.mubr.bf16.mxu0 0
      %1008 = vmatmul.mubr.bf16.gmra.mrb[0].mxu0 %v694
      %v1009 = vpop.f32.mrb[0].mxu0
      %v1010 = vadd.f32 %v310, %v1009
      %v1011 = vpop.f32.mrb[0].mxu0
      %v1012 = vpop.f32.mrb[0].mxu0
      %v1013 = vadd.f32 %v310, %v1012
      %v1014 = vpop.f32.mrb[0].mxu0
      %1015 = vmatprep.mubr.bf16.mxu0 0
      %1016 = vmatmul.mubr.bf16.gmra.mrb[0].mxu0 %v697
      %v1017 = vpop.f32.mrb[0].mxu0
      %v1018 = vadd.f32 %v310, %v1017
      %v1019 = vpop.f32.mrb[0].mxu0
      %v1020 = vpop.f32.mrb[0].mxu0
      %v1021 = vadd.f32 %v310, %v1020
      %v1022 = vpop.f32.mrb[0].mxu0
      %1023 = vmatprep.mubr.bf16.mxu0 0
      %1024 = vmatmul.mubr.bf16.gmra.mrb[0].mxu0 %v700
      %v1025 = vpop.f32.mrb[0].mxu0
      %v1026 = vadd.f32 %v310, %v1025
      %v1027 = vpop.f32.mrb[0].mxu0
      %v1028 = vpop.f32.mrb[0].mxu0
      %v1029 = vadd.f32 %v310, %v1028
      %v1030 = vpop.f32.mrb[0].mxu0
      %1031 = vmatprep.mubr.bf16.mxu0 0
      %1032 = vmatmul.mubr.bf16.gmra.mrb[0].mxu0 %v703
      %v1033 = vpop.f32.mrb[0].mxu0
      %v1034 = vadd.f32 %v310, %v1033
      %v1035 = vpop.f32.mrb[0].mxu0
      %v1036 = vpop.f32.mrb[0].mxu0
      %v1037 = vadd.f32 %v310, %v1036
      %v1038 = vpop.f32.mrb[0].mxu0
      %1039 = vmatprep.mubr.bf16.mxu0 0
      %1040 = vmatmul.mubr.bf16.gmra.mrb[0].mxu0 %v706
      %v1041 = vpop.f32.mrb[0].mxu0
      %v1042 = vadd.f32 %v310, %v1041
      %v1043 = vpop.f32.mrb[0].mxu0
      %v1044 = vpop.f32.mrb[0].mxu0
      %v1045 = vadd.f32 %v310, %v1044
      %v1046 = vpop.f32.mrb[0].mxu0
      %1047 = vmatprep.mubr.bf16.mxu0 0
      %1048 = vmatmul.mubr.bf16.gmra.mrb[0].mxu0 %v709
      %v1049 = vpop.f32.mrb[0].mxu0
      %v1050 = vadd.f32 %v310, %v1049
      %v1051 = vpop.f32.mrb[0].mxu0
      %v1052 = vpop.f32.mrb[0].mxu0
      %v1053 = vadd.f32 %v310, %v1052
      %v1054 = vpop.f32.mrb[0].mxu0
      %1055 = vmatprep.mubr.bf16.mxu0 0
      %1056 = vmatmul.mubr.bf16.gmra.mrb[0].mxu0 %v712
      %v1057 = vpop.f32.mrb[0].mxu0
      %v1058 = vadd.f32 %v310, %v1057
      %v1059 = vpop.f32.mrb[0].mxu0
      %v1060 = vpop.f32.mrb[0].mxu0
      %v1061 = vadd.f32 %v310, %v1060
      %v1062 = vpop.f32.mrb[0].mxu0
      %1063 = vmatprep.mubr.bf16.mxu0 0
      %1064 = vmatmul.mubr.bf16.gmra.mrb[0].mxu0 %v715
      %v1065 = vpop.f32.mrb[0].mxu0
      %v1066 = vadd.f32 %v310, %v1065
      %v1067 = vpop.f32.mrb[0].mxu0
      %v1068 = vpop.f32.mrb[0].mxu0
      %v1069 = vadd.f32 %v310, %v1068
      %v1070 = vpop.f32.mrb[0].mxu0
      %1071 = vmatprep.mubr.bf16.mxu0 0
      %1072 = vmatmul.mubr.bf16.gmra.mrb[0].mxu0 %v718
      %v1073 = vpop.f32.mrb[0].mxu0
      %v1074 = vadd.f32 %v310, %v1073
      %v1075 = vpop.f32.mrb[0].mxu0
      %v1076 = vpop.f32.mrb[0].mxu0
      %v1077 = vadd.f32 %v310, %v1076
      %v1078 = vpop.f32.mrb[0].mxu0
      %1079 = vmatprep.mubr.bf16.mxu0 0
      %1080 = vmatmul.mubr.bf16.gmra.mrb[0].mxu0 %v721
      %v1081 = vpop.f32.mrb[0].mxu0
      %v1082 = vadd.f32 %v310, %v1081
      %v1083 = vpop.f32.mrb[0].mxu0
      %v1084 = vpop.f32.mrb[0].mxu0
      %v1085 = vadd.f32 %v310, %v1084
      %v1086 = vpop.f32.mrb[0].mxu0
      %1087 = vmatprep.mubr.bf16.mxu0 0
      %1088 = vmatmul.mubr.bf16.gmra.mrb[0].mxu0 %v724
      %v1089 = vpop.f32.mrb[0].mxu0
      %v1090 = vadd.f32 %v310, %v1089
      %v1091 = vpop.f32.mrb[0].mxu0
      %v1092 = vpop.f32.mrb[0].mxu0
      %v1093 = vadd.f32 %v310, %v1092
      %v1094 = vpop.f32.mrb[0].mxu0
      %1095 = vmatprep.mubr.bf16.mxu0 0
      %1096 = vmatmul.mubr.bf16.gmra.mrb[0].mxu0 %v727
      %v1097 = vpop.f32.mrb[0].mxu0
      %v1098 = vadd.f32 %v310, %v1097
      %v1099 = vpop.f32.mrb[0].mxu0
      %v1100 = vpop.f32.mrb[0].mxu0
      %v1101 = vadd.f32 %v310, %v1100
      %v1102 = vpop.f32.mrb[0].mxu0
      %1103 = vmatprep.mubr.bf16.mxu0 0
      %1104 = vmatmul.mubr.bf16.gmra.mrb[0].mxu0 %v730
      %v1105 = vpop.f32.mrb[0].mxu0
      %v1106 = vadd.f32 %v310, %v1105
      %v1107 = vpop.f32.mrb[0].mxu0
      %v1108 = vpop.f32.mrb[0].mxu0
      %v1109 = vadd.f32 %v310, %v1108
      %v1110 = vpop.f32.mrb[0].mxu0
      %1111 = vmatprep.mubr.bf16.mxu0 0
      %1112 = vmatmul.mubr.bf16.gmra.mrb[0].mxu0 %v733
      %v1113 = vpop.f32.mrb[0].mxu0
      %v1114 = vadd.f32 %v310, %v1113
      %v1115 = vpop.f32.mrb[0].mxu0
      %v1116 = vpop.f32.mrb[0].mxu0
      %v1117 = vadd.f32 %v310, %v1116
      %v1118 = vpop.f32.mrb[0].mxu0
      %1119 = vmatprep.mubr.bf16.mxu0 0
      %1120 = vmatmul.mubr.bf16.gmra.mrb[0].mxu0 %v736
      %v1121 = vpop.f32.mrb[0].mxu0
      %v1122 = vadd.f32 %v310, %v1121
      %v1123 = vpop.f32.mrb[0].mxu0
      %v1124 = vpop.f32.mrb[0].mxu0
      %v1125 = vadd.f32 %v310, %v1124
      %v1126 = vpop.f32.mrb[0].mxu0
      %1127 = vmatprep.mubr.bf16.mxu0 0
      %1128 = vmatmul.mubr.bf16.gmra.mrb[0].mxu0 %v739
      %v1129 = vpop.f32.mrb[0].mxu0
      %v1130 = vadd.f32 %v310, %v1129
      %v1131 = vpop.f32.mrb[0].mxu0
      %v1132 = vpop.f32.mrb[0].mxu0
      %v1133 = vadd.f32 %v310, %v1132
      %v1134 = vpop.f32.mrb[0].mxu0
      %1135 = vmatprep.mubr.bf16.mxu0 0
      %1136 = vmatmul.mubr.bf16.gmra.mrb[0].mxu0 %v742
      %v1137 = vpop.f32.mrb[0].mxu0
      %v1138 = vadd.f32 %v310, %v1137
      %v1139 = vpop.f32.mrb[0].mxu0
      %v1140 = vpop.f32.mrb[0].mxu0
      %v1141 = vadd.f32 %v310, %v1140
      %v1142 = vpop.f32.mrb[0].mxu0
      %1143 = vmatprep.mubr.bf16.mxu0 0
      %1144 = vmatmul.mubr.bf16.gmra.mrb[0].mxu0 %v745
      %v1145 = vpop.f32.mrb[0].mxu0
      %v1146 = vadd.f32 %v310, %v1145
      %v1147 = vpop.f32.mrb[0].mxu0
      %v1148 = vpop.f32.mrb[0].mxu0
      %v1149 = vadd.f32 %v310, %v1148
      %v1150 = vpop.f32.mrb[0].mxu0
      %1151 = vmatprep.mubr.bf16.mxu0 0
      %1152 = vmatmul.mubr.bf16.gmra.mrb[0].mxu0 %v748
      %v1153 = vpop.f32.mrb[0].mxu0
      %v1154 = vadd.f32 %v310, %v1153
      %v1155 = vpop.f32.mrb[0].mxu0
      %v1156 = vpop.f32.mrb[0].mxu0
      %v1157 = vadd.f32 %v310, %v1156
      %v1158 = vpop.f32.mrb[0].mxu0
      %1159 = vmatprep.mubr.bf16.mxu0 0
      %1160 = vmatmul.mubr.bf16.gmra.mrb[0].mxu0 %v751
      %v1161 = vpop.f32.mrb[0].mxu0
      %v1162 = vadd.f32 %v310, %v1161
      %v1163 = vpop.f32.mrb[0].mxu0
      %v1164 = vpop.f32.mrb[0].mxu0
      %v1165 = vadd.f32 %v310, %v1164
      %v1166 = vpop.f32.mrb[0].mxu0
      %1167 = vmatprep.mubr.bf16.mxu0 0
      %1168 = vmatmul.mubr.bf16.gmra.mrb[0].mxu0 %v754
      %v1169 = vpop.f32.mrb[0].mxu0
      %v1170 = vadd.f32 %v310, %v1169
      %v1171 = vpop.f32.mrb[0].mxu0
      %v1172 = vpop.f32.mrb[0].mxu0
      %v1173 = vadd.f32 %v310, %v1172
      %v1174 = vpop.f32.mrb[0].mxu0
      %1175 = vmatprep.mubr.bf16.mxu0 0
      %1176 = vmatmul.mubr.bf16.gmra.mrb[0].mxu0 %v757
      %v1177 = vpop.f32.mrb[0].mxu0
      %v1178 = vadd.f32 %v310, %v1177
      %v1179 = vpop.f32.mrb[0].mxu0
      %v1180 = vpop.f32.mrb[0].mxu0
      %v1181 = vadd.f32 %v310, %v1180
      %v1182 = vpop.f32.mrb[0].mxu0
      %1183 = vmatprep.mubr.bf16.mxu0 0
      %1184 = vmatmul.mubr.bf16.gmra.mrb[0].mxu0 %v760
      %v1185 = vpop.f32.mrb[0].mxu0
      %v1186 = vadd.f32 %v310, %v1185
      %v1187 = vpop.f32.mrb[0].mxu0
      %v1188 = vpop.f32.mrb[0].mxu0
      %v1189 = vadd.f32 %v310, %v1188
      %v1190 = vpop.f32.mrb[0].mxu0
      %1191 = vmatprep.mubr.bf16.mxu0 0
      %1192 = vmatmul.mubr.bf16.gmra.mrb[0].mxu0 %v763
      %v1193 = vpop.f32.mrb[0].mxu0
      %v1194 = vadd.f32 %v310, %v1193
      %v1195 = vpop.f32.mrb[0].mxu0
      %v1196 = vpop.f32.mrb[0].mxu0
      %v1197 = vadd.f32 %v310, %v1196
      %v1198 = vpop.f32.mrb[0].mxu0
      %1199 = vmatprep.mubr.bf16.mxu0 0
      %1200 = vmatmul.mubr.bf16.gmra.mrb[0].mxu0 %v766
      %v1201 = vpop.f32.mrb[0].mxu0
      %v1202 = vadd.f32 %v310, %v1201
      %v1203 = vpop.f32.mrb[0].mxu0
      %v1204 = vpop.f32.mrb[0].mxu0
      %v1205 = vadd.f32 %v310, %v1204
      %v1206 = vpop.f32.mrb[0].mxu0
      %1207 = vmatprep.mubr.bf16.mxu0 0
      %1208 = vmatmul.mubr.bf16.gmra.mrb[0].mxu0 %v769
      %v1209 = vpop.f32.mrb[0].mxu0
      %v1210 = vadd.f32 %v310, %v1209
      %v1211 = vpop.f32.mrb[0].mxu0
      %v1212 = vpop.f32.mrb[0].mxu0
      %v1213 = vadd.f32 %v310, %v1212
      %v1214 = vpop.f32.mrb[0].mxu0
      %1215 = vmatprep.mubr.bf16.mxu0 0
      %1216 = vmatmul.mubr.bf16.gmra.mrb[0].mxu0 %v772
      %v1217 = vpop.f32.mrb[0].mxu0
      %v1218 = vadd.f32 %v310, %v1217
      %v1219 = vpop.f32.mrb[0].mxu0
      %v1220 = vpop.f32.mrb[0].mxu0
      %v1221 = vadd.f32 %v310, %v1220
      %v1222 = vpop.f32.mrb[0].mxu0
      %1223 = vmatprep.mubr.bf16.mxu0 0
      %1224 = vmatmul.mubr.bf16.gmra.mrb[0].mxu0 %v775
      %v1225 = vpop.f32.mrb[0].mxu0
      %v1226 = vadd.f32 %v310, %v1225
      %v1227 = vpop.f32.mrb[0].mxu0
      %v1228 = vpop.f32.mrb[0].mxu0
      %v1229 = vadd.f32 %v310, %v1228
      %v1230 = vpop.f32.mrb[0].mxu0
      %1231 = vmatprep.mubr.bf16.mxu0 0
      %1232 = vmatmul.mubr.bf16.gmra.mrb[0].mxu0 %v778
      %v1233 = vpop.f32.mrb[0].mxu0
      %v1234 = vadd.f32 %v310, %v1233
      %v1235 = vpop.f32.mrb[0].mxu0
      %v1236 = vpop.f32.mrb[0].mxu0
      %v1237 = vadd.f32 %v310, %v1236
      %v1238 = vpop.f32.mrb[0].mxu0
      %1239 = vmatprep.mubr.bf16.mxu0 0
      %1240 = vmatmul.mubr.bf16.gmra.mrb[0].mxu0 %v781
      %v1241 = vpop.f32.mrb[0].mxu0
      %v1242 = vadd.f32 %v310, %v1241
      %v1243 = vpop.f32.mrb[0].mxu0
      %v1244 = vpop.f32.mrb[0].mxu0
      %v1245 = vadd.f32 %v310, %v1244
      %v1246 = vpop.f32.mrb[0].mxu0
      %1247 = vmatprep.mubr.bf16.mxu0 0
      %1248 = vmatmul.mubr.bf16.gmra.mrb[0].mxu0 %v784
      %v1249 = vpop.f32.mrb[0].mxu0
      %v1250 = vadd.f32 %v310, %v1249
      %v1251 = vpop.f32.mrb[0].mxu0
      %v1252 = vpop.f32.mrb[0].mxu0
      %v1253 = vadd.f32 %v310, %v1252
      %v1254 = vpop.f32.mrb[0].mxu0
      %1255 = vmatprep.mubr.bf16.mxu0 0
      %1256 = vmatmul.mubr.bf16.gmra.mrb[0].mxu0 %v787
      %v1257 = vpop.f32.mrb[0].mxu0
      %v1258 = vadd.f32 %v310, %v1257
      %v1259 = vpop.f32.mrb[0].mxu0
      %v1260 = vpop.f32.mrb[0].mxu0
      %v1261 = vadd.f32 %v310, %v1260
      %v1262 = vpop.f32.mrb[0].mxu0
      %1263 = vmatprep.mubr.bf16.mxu0 0
      %1264 = vmatmul.mubr.bf16.gmra.mrb[0].mxu0 %v790
      %v1265 = vpop.f32.mrb[0].mxu0
      %v1266 = vadd.f32 %v310, %v1265
      %v1267 = vpop.f32.mrb[0].mxu0
      %v1268 = vpop.f32.mrb[0].mxu0
      %v1269 = vadd.f32 %v310, %v1268
      %v1270 = vpop.f32.mrb[0].mxu0
      %1271 = vmatprep.mubr.bf16.mxu0 0
      %1272 = vmatmul.mubr.bf16.gmra.mrb[0].mxu0 %v793
      %v1273 = vpop.f32.mrb[0].mxu0
      %v1274 = vadd.f32 %v310, %v1273
      %v1275 = vpop.f32.mrb[0].mxu0
      %v1276 = vpop.f32.mrb[0].mxu0
      %v1277 = vadd.f32 %v310, %v1276
      %v1278 = vpop.f32.mrb[0].mxu0
      %1279 = vmatprep.mubr.bf16.mxu0 0
      %1280 = vmatmul.mubr.bf16.gmra.mrb[0].mxu0 %v796
      %v1281 = vpop.f32.mrb[0].mxu0
      %v1282 = vadd.f32 %v310, %v1281
      %v1283 = vpop.f32.mrb[0].mxu0
      %v1284 = vpop.f32.mrb[0].mxu0
      %v1285 = vadd.f32 %v310, %v1284
      %v1286 = vpop.f32.mrb[0].mxu0
      %1287 = vmatprep.mubr.bf16.mxu0 0
      %1288 = vmatmul.mubr.bf16.gmra.mrb[0].mxu0 %v799
      %v1289 = vpop.f32.mrb[0].mxu0
      %v1290 = vadd.f32 %v310, %v1289
      %v1291 = vpop.f32.mrb[0].mxu0
      %v1292 = vpop.f32.mrb[0].mxu0
      %v1293 = vadd.f32 %v310, %v1292
      %v1294 = vpop.f32.mrb[0].mxu0
      %1295 = vmatprep.mubr.bf16.mxu0 0
      %1296 = vmatmul.mubr.bf16.gmra.mrb[0].mxu0 %v802
      %v1297 = vpop.f32.mrb[0].mxu0
      %v1298 = vadd.f32 %v310, %v1297
      %v1299 = vpop.f32.mrb[0].mxu0
      %v1300 = vpop.f32.mrb[0].mxu0
      %v1301 = vadd.f32 %v310, %v1300
      %v1302 = vpop.f32.mrb[0].mxu0
      %1303 = vmatprep.mubr.bf16.mxu0 0
      %1304 = vmatmul.mubr.bf16.gmra.mrb[0].mxu0 %v805
      %v1305 = vpop.f32.mrb[0].mxu0
      %v1306 = vadd.f32 %v310, %v1305
      %v1307 = vpop.f32.mrb[0].mxu0
      %v1308 = vpop.f32.mrb[0].mxu0
      %v1309 = vadd.f32 %v310, %v1308
      %v1310 = vpop.f32.mrb[0].mxu0
      %1311 = vmatprep.mubr.bf16.mxu0 0
      %1312 = vmatmul.mubr.bf16.gmra.mrb[0].mxu0 %v808
      %v1313 = vpop.f32.mrb[0].mxu0
      %v1314 = vadd.f32 %v310, %v1313
      %v1315 = vpop.f32.mrb[0].mxu0
      %v1316 = vpop.f32.mrb[0].mxu0
      %v1317 = vadd.f32 %v310, %v1316
      %v1318 = vpop.f32.mrb[0].mxu0
      %1319 = vmatprep.mubr.bf16.mxu0 0
      %1320 = vmatmul.mubr.bf16.gmra.mrb[0].mxu0 %v811
      %v1321 = vpop.f32.mrb[0].mxu0
      %v1322 = vadd.f32 %v310, %v1321
      %v1323 = vpop.f32.mrb[0].mxu0
      %v1324 = vpop.f32.mrb[0].mxu0
      %v1325 = vadd.f32 %v310, %v1324
      %v1326 = vpop.f32.mrb[0].mxu0
      %1327 = vmatprep.mubr.bf16.mxu0 0
      %1328 = vmatmul.mubr.bf16.gmra.mrb[0].mxu0 %v814
      %v1329 = vpop.f32.mrb[0].mxu0
      %v1330 = vadd.f32 %v310, %v1329
      %v1331 = vpop.f32.mrb[0].mxu0
      %v1332 = vpop.f32.mrb[0].mxu0
      %v1333 = vadd.f32 %v310, %v1332
      %v1334 = vpop.f32.mrb[0].mxu0
      %1335 = vmatprep.mubr.bf16.mxu0 0
      %1336 = vmatmul.mubr.bf16.gmra.mrb[0].mxu0 %v817
      %v1337 = vpop.f32.mrb[0].mxu0
      %v1338 = vadd.f32 %v310, %v1337
      %v1339 = vpop.f32.mrb[0].mxu0
      %v1340 = vpop.f32.mrb[0].mxu0
      %v1341 = vadd.f32 %v310, %v1340
      %v1342 = vpop.f32.mrb[0].mxu0
      %1343 = vmatprep.mubr.bf16.mxu0 0
      %1344 = vmatmul.mubr.bf16.gmra.mrb[0].mxu0 %v820
      %v1345 = vpop.f32.mrb[0].mxu0
      %v1346 = vadd.f32 %v310, %v1345
      %v1347 = vpop.f32.mrb[0].mxu0
      %v1348 = vpop.f32.mrb[0].mxu0
      %v1349 = vadd.f32 %v310, %v1348
      %v1350 = vpop.f32.mrb[0].mxu0
      %1351 = vmatprep.mubr.bf16.mxu0 0
      %1352 = vmatmul.mubr.bf16.gmra.mrb[0].mxu0 %v823
      %v1353 = vpop.f32.mrb[0].mxu0
      %v1354 = vadd.f32 %v310, %v1353
      %v1355 = vpop.f32.mrb[0].mxu0
      %v1356 = vpop.f32.mrb[0].mxu0
      %v1357 = vadd.f32 %v310, %v1356
      %v1358 = vpop.f32.mrb[0].mxu0
      %1359 = vmatprep.mubr.bf16.mxu0 0
      %1360 = vmatmul.mubr.bf16.gmra.mrb[0].mxu0 %v826
      %v1361 = vpop.f32.mrb[0].mxu0
      %v1362 = vadd.f32 %v310, %v1361
      %v1363 = vpop.f32.mrb[0].mxu0
      %v1364 = vpop.f32.mrb[0].mxu0
      %v1365 = vadd.f32 %v310, %v1364
      %v1366 = vpop.f32.mrb[0].mxu0
      %1367 = vmatprep.mubr.bf16.mxu0 0
      %1368 = vmatmul.mubr.bf16.gmra.mrb[0].mxu0 %v829
      %v1369 = vpop.f32.mrb[0].mxu0
      %v1370 = vadd.f32 %v310, %v1369
      %v1371 = vpop.f32.mrb[0].mxu0
      %v1372 = vpop.f32.mrb[0].mxu0
      %v1373 = vadd.f32 %v310, %v1372
      %v1374 = vpop.f32.mrb[0].mxu0
      %1375 = vdwg.mxu0
      %v1376 = vpack.c.bf16 %v869, %v866
      %v1377 = vpack.c.bf16 %v877, %v874
      %v1378 = vpack.c.bf16 %v885, %v882
      %v1379 = vpack.c.bf16 %v893, %v890
      %v1380 = vpack.c.bf16 %v901, %v898
      %v1381 = vpack.c.bf16 %v909, %v906
      %v1382 = vpack.c.bf16 %v917, %v914
      %v1383 = vpack.c.bf16 %v925, %v922
      %v1384 = vpack.c.bf16 %v933, %v930
      %v1385 = vpack.c.bf16 %v941, %v938
      %v1386 = vpack.c.bf16 %v949, %v946
      %v1387 = vpack.c.bf16 %v957, %v954
      %v1388 = vpack.c.bf16 %v965, %v962
      %v1389 = vpack.c.bf16 %v973, %v970
      %v1390 = vpack.c.bf16 %v981, %v978
      %v1391 = vpack.c.bf16 %v989, %v986
      %v1392 = vpack.c.bf16 %v997, %v994
      %v1393 = vpack.c.bf16 %v1005, %v1002
      %v1394 = vpack.c.bf16 %v1013, %v1010
      %v1395 = vpack.c.bf16 %v1021, %v1018
      %v1396 = vpack.c.bf16 %v1029, %v1026
      %v1397 = vpack.c.bf16 %v1037, %v1034
      %v1398 = vpack.c.bf16 %v1045, %v1042
      %v1399 = vpack.c.bf16 %v1053, %v1050
      %v1400 = vpack.c.bf16 %v1061, %v1058
      %v1401 = vpack.c.bf16 %v1069, %v1066
      %v1402 = vpack.c.bf16 %v1077, %v1074
      %v1403 = vpack.c.bf16 %v1085, %v1082
      %v1404 = vpack.c.bf16 %v1093, %v1090
      %v1405 = vpack.c.bf16 %v1101, %v1098
      %v1406 = vpack.c.bf16 %v1109, %v1106
      %v1407 = vpack.c.bf16 %v1117, %v1114
      %v1408 = vpack.c.bf16 %v1125, %v1122
      %v1409 = vpack.c.bf16 %v1133, %v1130
      %v1410 = vpack.c.bf16 %v1141, %v1138
      %v1411 = vpack.c.bf16 %v1149, %v1146
      %v1412 = vpack.c.bf16 %v1157, %v1154
      %v1413 = vpack.c.bf16 %v1165, %v1162
      %v1414 = vpack.c.bf16 %v1173, %v1170
      %v1415 = vpack.c.bf16 %v1181, %v1178
      %v1416 = vpack.c.bf16 %v1189, %v1186
      %v1417 = vpack.c.bf16 %v1197, %v1194
      %v1418 = vpack.c.bf16 %v1205, %v1202
      %v1419 = vpack.c.bf16 %v1213, %v1210
      %v1420 = vpack.c.bf16 %v1221, %v1218
      %v1421 = vpack.c.bf16 %v1229, %v1226
      %v1422 = vpack.c.bf16 %v1237, %v1234
      %v1423 = vpack.c.bf16 %v1245, %v1242
      %v1424 = vpack.c.bf16 %v1253, %v1250
      %v1425 = vpack.c.bf16 %v1261, %v1258
      %v1426 = vpack.c.bf16 %v1269, %v1266
      %v1427 = vpack.c.bf16 %v1277, %v1274
      %v1428 = vpack.c.bf16 %v1285, %v1282
      %v1429 = vpack.c.bf16 %v1293, %v1290
      %v1430 = vpack.c.bf16 %v1301, %v1298
      %v1431 = vpack.c.bf16 %v1309, %v1306
      %v1432 = vpack.c.bf16 %v1317, %v1314
      %v1433 = vpack.c.bf16 %v1325, %v1322
      %v1434 = vpack.c.bf16 %v1333, %v1330
      %v1435 = vpack.c.bf16 %v1341, %v1338
      %v1436 = vpack.c.bf16 %v1349, %v1346
      %v1437 = vpack.c.bf16 %v1357, %v1354
      %v1438 = vpack.c.bf16 %v1365, %v1362
      %v1439 = vpack.c.bf16 %v1373, %v1370
      %v1504 = vunpack.c.l.b16 %v1376
      %v1505 = vunpack.c.h.b16 %v1376
      %v1506 = vunpack.c.l.b16 %v1377
      %v1507 = vunpack.c.h.b16 %v1377
      %v1508 = vunpack.c.l.b16 %v1378
      %v1509 = vunpack.c.h.b16 %v1378
      %v1510 = vunpack.c.l.b16 %v1379
      %v1511 = vunpack.c.h.b16 %v1379
      %v1512 = vunpack.c.l.b16 %v1380
      %v1513 = vunpack.c.h.b16 %v1380
      %v1514 = vunpack.c.l.b16 %v1381
      %v1515 = vunpack.c.h.b16 %v1381
      %v1516 = vunpack.c.l.b16 %v1382
      %v1517 = vunpack.c.h.b16 %v1382
      %v1518 = vunpack.c.l.b16 %v1383
      %v1519 = vunpack.c.h.b16 %v1383
      %v1520 = vunpack.c.l.b16 %v1384
      %v1521 = vunpack.c.h.b16 %v1384
      %v1522 = vunpack.c.l.b16 %v1385
      %v1523 = vunpack.c.h.b16 %v1385
      %v1524 = vunpack.c.l.b16 %v1386
      %v1525 = vunpack.c.h.b16 %v1386
      %v1526 = vunpack.c.l.b16 %v1387
      %v1527 = vunpack.c.h.b16 %v1387
      %v1528 = vunpack.c.l.b16 %v1388
      %v1529 = vunpack.c.h.b16 %v1388
      %v1530 = vunpack.c.l.b16 %v1389
      %v1531 = vunpack.c.h.b16 %v1389
      %v1532 = vunpack.c.l.b16 %v1390
      %v1533 = vunpack.c.h.b16 %v1390
      %v1534 = vunpack.c.l.b16 %v1391
      %v1535 = vunpack.c.h.b16 %v1391
      %v1536 = vunpack.c.l.b16 %v1392
      %v1537 = vunpack.c.h.b16 %v1392
      %v1538 = vunpack.c.l.b16 %v1393
      %v1539 = vunpack.c.h.b16 %v1393
      %v1540 = vunpack.c.l.b16 %v1394
      %v1541 = vunpack.c.h.b16 %v1394
      %v1542 = vunpack.c.l.b16 %v1395
      %v1543 = vunpack.c.h.b16 %v1395
      %v1544 = vunpack.c.l.b16 %v1396
      %v1545 = vunpack.c.h.b16 %v1396
      %v1546 = vunpack.c.l.b16 %v1397
      %v1547 = vunpack.c.h.b16 %v1397
      %v1548 = vunpack.c.l.b16 %v1398
      %v1549 = vunpack.c.h.b16 %v1398
      %v1550 = vunpack.c.l.b16 %v1399
      %v1551 = vunpack.c.h.b16 %v1399
      %v1552 = vunpack.c.l.b16 %v1400
      %v1553 = vunpack.c.h.b16 %v1400
      %v1554 = vunpack.c.l.b16 %v1401
      %v1555 = vunpack.c.h.b16 %v1401
      %v1556 = vunpack.c.l.b16 %v1402
      %v1557 = vunpack.c.h.b16 %v1402
      %v1558 = vunpack.c.l.b16 %v1403
      %v1559 = vunpack.c.h.b16 %v1403
      %v1560 = vunpack.c.l.b16 %v1404
      %v1561 = vunpack.c.h.b16 %v1404
      %v1562 = vunpack.c.l.b16 %v1405
      %v1563 = vunpack.c.h.b16 %v1405
      %v1564 = vunpack.c.l.b16 %v1406
      %v1565 = vunpack.c.h.b16 %v1406
      %v1566 = vunpack.c.l.b16 %v1407
      %v1567 = vunpack.c.h.b16 %v1407
      %v1568 = vunpack.c.l.b16 %v1408
      %v1569 = vunpack.c.h.b16 %v1408
      %v1570 = vunpack.c.l.b16 %v1409
      %v1571 = vunpack.c.h.b16 %v1409
      %v1572 = vunpack.c.l.b16 %v1410
      %v1573 = vunpack.c.h.b16 %v1410
      %v1574 = vunpack.c.l.b16 %v1411
      %v1575 = vunpack.c.h.b16 %v1411
      %v1576 = vunpack.c.l.b16 %v1412
      %v1577 = vunpack.c.h.b16 %v1412
      %v1578 = vunpack.c.l.b16 %v1413
      %v1579 = vunpack.c.h.b16 %v1413
      %v1580 = vunpack.c.l.b16 %v1414
      %v1581 = vunpack.c.h.b16 %v1414
      %v1582 = vunpack.c.l.b16 %v1415
      %v1583 = vunpack.c.h.b16 %v1415
      %v1584 = vunpack.c.l.b16 %v1416
      %v1585 = vunpack.c.h.b16 %v1416
      %v1586 = vunpack.c.l.b16 %v1417
      %v1587 = vunpack.c.h.b16 %v1417
      %v1588 = vunpack.c.l.b16 %v1418
      %v1589 = vunpack.c.h.b16 %v1418
      %v1590 = vunpack.c.l.b16 %v1419
      %v1591 = vunpack.c.h.b16 %v1419
      %v1592 = vunpack.c.l.b16 %v1420
      %v1593 = vunpack.c.h.b16 %v1420
      %v1594 = vunpack.c.l.b16 %v1421
      %v1595 = vunpack.c.h.b16 %v1421
      %v1596 = vunpack.c.l.b16 %v1422
      %v1597 = vunpack.c.h.b16 %v1422
      %v1598 = vunpack.c.l.b16 %v1423
      %v1599 = vunpack.c.h.b16 %v1423
      %v1600 = vunpack.c.l.b16 %v1424
      %v1601 = vunpack.c.h.b16 %v1424
      %v1602 = vunpack.c.l.b16 %v1425
      %v1603 = vunpack.c.h.b16 %v1425
      %v1604 = vunpack.c.l.b16 %v1426
      %v1605 = vunpack.c.h.b16 %v1426
      %v1606 = vunpack.c.l.b16 %v1427
      %v1607 = vunpack.c.h.b16 %v1427
      %v1608 = vunpack.c.l.b16 %v1428
      %v1609 = vunpack.c.h.b16 %v1428
      %v1610 = vunpack.c.l.b16 %v1429
      %v1611 = vunpack.c.h.b16 %v1429
      %v1612 = vunpack.c.l.b16 %v1430
      %v1613 = vunpack.c.h.b16 %v1430
      %v1614 = vunpack.c.l.b16 %v1431
      %v1615 = vunpack.c.h.b16 %v1431
      %v1616 = vunpack.c.l.b16 %v1432
      %v1617 = vunpack.c.h.b16 %v1432
      %v1618 = vunpack.c.l.b16 %v1433
      %v1619 = vunpack.c.h.b16 %v1433
      %v1620 = vunpack.c.l.b16 %v1434
      %v1621 = vunpack.c.h.b16 %v1434
      %v1622 = vunpack.c.l.b16 %v1435
      %v1623 = vunpack.c.h.b16 %v1435
      %v1624 = vunpack.c.l.b16 %v1436
      %v1625 = vunpack.c.h.b16 %v1436
      %v1626 = vunpack.c.l.b16 %v1437
      %v1627 = vunpack.c.h.b16 %v1437
      %v1628 = vunpack.c.l.b16 %v1438
      %v1629 = vunpack.c.h.b16 %v1438
      %v1630 = vunpack.c.l.b16 %v1439
      %v1631 = vunpack.c.h.b16 %v1439
      %v1632 = vpack.c.b16 %v1504, %v1504
      %v1633 = vpack.c.b16 %v1505, %v1505
      %v1634 = vpack.c.b16 %v1506, %v1506
      %v1635 = vpack.c.b16 %v1507, %v1507
      %v1636 = vpack.c.b16 %v1508, %v1508
      %v1637 = vpack.c.b16 %v1509, %v1509
      %v1638 = vpack.c.b16 %v1510, %v1510
      %v1639 = vpack.c.b16 %v1511, %v1511
      %v1640 = vpack.c.b16 %v1512, %v1512
      %v1641 = vpack.c.b16 %v1513, %v1513
      %v1642 = vpack.c.b16 %v1514, %v1514
      %v1643 = vpack.c.b16 %v1515, %v1515
      %v1644 = vpack.c.b16 %v1516, %v1516
      %v1645 = vpack.c.b16 %v1517, %v1517
      %v1646 = vpack.c.b16 %v1518, %v1518
      %v1647 = vpack.c.b16 %v1519, %v1519
      %v1648 = vpack.c.b16 %v1520, %v1520
      %v1649 = vpack.c.b16 %v1521, %v1521
      %v1650 = vpack.c.b16 %v1522, %v1522
      %v1651 = vpack.c.b16 %v1523, %v1523
      %v1652 = vpack.c.b16 %v1524, %v1524
      %v1653 = vpack.c.b16 %v1525, %v1525
      %v1654 = vpack.c.b16 %v1526, %v1526
      %v1655 = vpack.c.b16 %v1527, %v1527
      %v1656 = vpack.c.b16 %v1528, %v1528
      %v1657 = vpack.c.b16 %v1529, %v1529
      %v1658 = vpack.c.b16 %v1530, %v1530
      %v1659 = vpack.c.b16 %v1531, %v1531
      %v1660 = vpack.c.b16 %v1532, %v1532
      %v1661 = vpack.c.b16 %v1533, %v1533
      %v1662 = vpack.c.b16 %v1534, %v1534
      %v1663 = vpack.c.b16 %v1535, %v1535
      %v1664 = vpack.c.b16 %v1536, %v1536
      %v1665 = vpack.c.b16 %v1537, %v1537
      %v1666 = vpack.c.b16 %v1538, %v1538
      %v1667 = vpack.c.b16 %v1539, %v1539
      %v1668 = vpack.c.b16 %v1540, %v1540
      %v1669 = vpack.c.b16 %v1541, %v1541
      %v1670 = vpack.c.b16 %v1542, %v1542
      %v1671 = vpack.c.b16 %v1543, %v1543
      %v1672 = vpack.c.b16 %v1544, %v1544
      %v1673 = vpack.c.b16 %v1545, %v1545
      %v1674 = vpack.c.b16 %v1546, %v1546
      %v1675 = vpack.c.b16 %v1547, %v1547
      %v1676 = vpack.c.b16 %v1548, %v1548
      %v1677 = vpack.c.b16 %v1549, %v1549
      %v1678 = vpack.c.b16 %v1550, %v1550
      %v1679 = vpack.c.b16 %v1551, %v1551
      %v1680 = vpack.c.b16 %v1552, %v1552
      %v1681 = vpack.c.b16 %v1553, %v1553
      %v1682 = vpack.c.b16 %v1554, %v1554
      %v1683 = vpack.c.b16 %v1555, %v1555
      %v1684 = vpack.c.b16 %v1556, %v1556
      %v1685 = vpack.c.b16 %v1557, %v1557
      %v1686 = vpack.c.b16 %v1558, %v1558
      %v1687 = vpack.c.b16 %v1559, %v1559
      %v1688 = vpack.c.b16 %v1560, %v1560
      %v1689 = vpack.c.b16 %v1561, %v1561
      %v1690 = vpack.c.b16 %v1562, %v1562
      %v1691 = vpack.c.b16 %v1563, %v1563
      %v1692 = vpack.c.b16 %v1564, %v1564
      %v1693 = vpack.c.b16 %v1565, %v1565
      %v1694 = vpack.c.b16 %v1566, %v1566
      %v1695 = vpack.c.b16 %v1567, %v1567
      %v1696 = vpack.c.b16 %v1568, %v1568
      %v1697 = vpack.c.b16 %v1569, %v1569
      %v1698 = vpack.c.b16 %v1570, %v1570
      %v1699 = vpack.c.b16 %v1571, %v1571
      %v1700 = vpack.c.b16 %v1572, %v1572
      %v1701 = vpack.c.b16 %v1573, %v1573
      %v1702 = vpack.c.b16 %v1574, %v1574
      %v1703 = vpack.c.b16 %v1575, %v1575
      %v1704 = vpack.c.b16 %v1576, %v1576
      %v1705 = vpack.c.b16 %v1577, %v1577
      %v1706 = vpack.c.b16 %v1578, %v1578
      %v1707 = vpack.c.b16 %v1579, %v1579
      %v1708 = vpack.c.b16 %v1580, %v1580
      %v1709 = vpack.c.b16 %v1581, %v1581
      %v1710 = vpack.c.b16 %v1582, %v1582
      %v1711 = vpack.c.b16 %v1583, %v1583
      %v1712 = vpack.c.b16 %v1584, %v1584
      %v1713 = vpack.c.b16 %v1585, %v1585
      %v1714 = vpack.c.b16 %v1586, %v1586
      %v1715 = vpack.c.b16 %v1587, %v1587
      %v1716 = vpack.c.b16 %v1588, %v1588
      %v1717 = vpack.c.b16 %v1589, %v1589
      %v1718 = vpack.c.b16 %v1590, %v1590
      %v1719 = vpack.c.b16 %v1591, %v1591
      %v1720 = vpack.c.b16 %v1592, %v1592
      %v1721 = vpack.c.b16 %v1593, %v1593
      %v1722 = vpack.c.b16 %v1594, %v1594
      %v1723 = vpack.c.b16 %v1595, %v1595
      %v1724 = vpack.c.b16 %v1596, %v1596
      %v1725 = vpack.c.b16 %v1597, %v1597
      %v1726 = vpack.c.b16 %v1598, %v1598
      %v1727 = vpack.c.b16 %v1599, %v1599
      %v1728 = vpack.c.b16 %v1600, %v1600
      %v1729 = vpack.c.b16 %v1601, %v1601
      %v1730 = vpack.c.b16 %v1602, %v1602
      %v1731 = vpack.c.b16 %v1603, %v1603
      %v1732 = vpack.c.b16 %v1604, %v1604
      %v1733 = vpack.c.b16 %v1605, %v1605
      %v1734 = vpack.c.b16 %v1606, %v1606
      %v1735 = vpack.c.b16 %v1607, %v1607
      %v1736 = vpack.c.b16 %v1608, %v1608
      %v1737 = vpack.c.b16 %v1609, %v1609
      %v1738 = vpack.c.b16 %v1610, %v1610
      %v1739 = vpack.c.b16 %v1611, %v1611
      %v1740 = vpack.c.b16 %v1612, %v1612
      %v1741 = vpack.c.b16 %v1613, %v1613
      %v1742 = vpack.c.b16 %v1614, %v1614
      %v1743 = vpack.c.b16 %v1615, %v1615
      %v1744 = vpack.c.b16 %v1616, %v1616
      %v1745 = vpack.c.b16 %v1617, %v1617
      %v1746 = vpack.c.b16 %v1618, %v1618
      %v1747 = vpack.c.b16 %v1619, %v1619
      %v1748 = vpack.c.b16 %v1620, %v1620
      %v1749 = vpack.c.b16 %v1621, %v1621
      %v1750 = vpack.c.b16 %v1622, %v1622
      %v1751 = vpack.c.b16 %v1623, %v1623
      %v1752 = vpack.c.b16 %v1624, %v1624
      %v1753 = vpack.c.b16 %v1625, %v1625
      %v1754 = vpack.c.b16 %v1626, %v1626
      %v1755 = vpack.c.b16 %v1627, %v1627
      %v1756 = vpack.c.b16 %v1628, %v1628
      %v1757 = vpack.c.b16 %v1629, %v1629
      %v1758 = vpack.c.b16 %v1630, %v1630
      %v1759 = vpack.c.b16 %v1631, %v1631
      %vm1888 = vcmask 19456
      %1889 = vst.msk [vmem:[%s172] sm:$0xf] %vm1888, %v1632
      %1890 = vst.msk [vmem:[%s172 + $0x4] sm:$0xf] %vm1888, %v1633
      %1891 = vst.msk [vmem:[%s172 + $0x8] sm:$0xf] %vm1888, %v1634
      %1892 = vst.msk [vmem:[%s172 + $0xc] sm:$0xf] %vm1888, %v1635
      %1893 = vst.msk [vmem:[%s172 + $0x10] sm:$0xf] %vm1888, %v1636
      %1894 = vst.msk [vmem:[%s172 + $0x14] sm:$0xf] %vm1888, %v1637
      %1895 = vst.msk [vmem:[%s172 + $0x18] sm:$0xf] %vm1888, %v1638
      %1896 = vst.msk [vmem:[%s172 + $0x1c] sm:$0xf] %vm1888, %v1639
      %1897 = vst.msk [vmem:[%s172 + $0x20] sm:$0xf] %vm1888, %v1640
      %1898 = vst.msk [vmem:[%s172 + $0x24] sm:$0xf] %vm1888, %v1641
      %1899 = vst.msk [vmem:[%s172 + $0x28] sm:$0xf] %vm1888, %v1642
      %1900 = vst.msk [vmem:[%s172 + $0x2c] sm:$0xf] %vm1888, %v1643
      %1901 = vst.msk [vmem:[%s172 + $0x30] sm:$0xf] %vm1888, %v1644
      %1902 = vst.msk [vmem:[%s172 + $0x34] sm:$0xf] %vm1888, %v1645
      %1903 = vst.msk [vmem:[%s172 + $0x38] sm:$0xf] %vm1888, %v1646
      %1904 = vst.msk [vmem:[%s172 + $0x3c] sm:$0xf] %vm1888, %v1647
      %1905 = vst.msk [vmem:[%s172 + $0x40] sm:$0xf] %vm1888, %v1648
      %1906 = vst.msk [vmem:[%s172 + $0x44] sm:$0xf] %vm1888, %v1649
      %1907 = vst.msk [vmem:[%s172 + $0x48] sm:$0xf] %vm1888, %v1650
      %1908 = vst.msk [vmem:[%s172 + $0x4c] sm:$0xf] %vm1888, %v1651
      %1909 = vst.msk [vmem:[%s172 + $0x50] sm:$0xf] %vm1888, %v1652
      %1910 = vst.msk [vmem:[%s172 + $0x54] sm:$0xf] %vm1888, %v1653
      %1911 = vst.msk [vmem:[%s172 + $0x58] sm:$0xf] %vm1888, %v1654
      %1912 = vst.msk [vmem:[%s172 + $0x5c] sm:$0xf] %vm1888, %v1655
      %1913 = vst.msk [vmem:[%s172 + $0x60] sm:$0xf] %vm1888, %v1656
      %1914 = vst.msk [vmem:[%s172 + $0x64] sm:$0xf] %vm1888, %v1657
      %1915 = vst.msk [vmem:[%s172 + $0x68] sm:$0xf] %vm1888, %v1658
      %1916 = vst.msk [vmem:[%s172 + $0x6c] sm:$0xf] %vm1888, %v1659
      %1917 = vst.msk [vmem:[%s172 + $0x70] sm:$0xf] %vm1888, %v1660
      %1918 = vst.msk [vmem:[%s172 + $0x74] sm:$0xf] %vm1888, %v1661
      %1919 = vst.msk [vmem:[%s172 + $0x78] sm:$0xf] %vm1888, %v1662
      %1920 = vst.msk [vmem:[%s172 + $0x7c] sm:$0xf] %vm1888, %v1663
      %1921 = vst.msk [vmem:[%s172 + $0x80] sm:$0xf] %vm1888, %v1664
      %1922 = vst.msk [vmem:[%s172 + $0x84] sm:$0xf] %vm1888, %v1665
      %1923 = vst.msk [vmem:[%s172 + $0x88] sm:$0xf] %vm1888, %v1666
      %1924 = vst.msk [vmem:[%s172 + $0x8c] sm:$0xf] %vm1888, %v1667
      %1925 = vst.msk [vmem:[%s172 + $0x90] sm:$0xf] %vm1888, %v1668
      %1926 = vst.msk [vmem:[%s172 + $0x94] sm:$0xf] %vm1888, %v1669
      %1927 = vst.msk [vmem:[%s172 + $0x98] sm:$0xf] %vm1888, %v1670
      %1928 = vst.msk [vmem:[%s172 + $0x9c] sm:$0xf] %vm1888, %v1671
      %1929 = vst.msk [vmem:[%s172 + $0xa0] sm:$0xf] %vm1888, %v1672
      %1930 = vst.msk [vmem:[%s172 + $0xa4] sm:$0xf] %vm1888, %v1673
      %1931 = vst.msk [vmem:[%s172 + $0xa8] sm:$0xf] %vm1888, %v1674
      %1932 = vst.msk [vmem:[%s172 + $0xac] sm:$0xf] %vm1888, %v1675
      %1933 = vst.msk [vmem:[%s172 + $0xb0] sm:$0xf] %vm1888, %v1676
      %1934 = vst.msk [vmem:[%s172 + $0xb4] sm:$0xf] %vm1888, %v1677
      %1935 = vst.msk [vmem:[%s172 + $0xb8] sm:$0xf] %vm1888, %v1678
      %1936 = vst.msk [vmem:[%s172 + $0xbc] sm:$0xf] %vm1888, %v1679
      %1937 = vst.msk [vmem:[%s172 + $0xc0] sm:$0xf] %vm1888, %v1680
      %1938 = vst.msk [vmem:[%s172 + $0xc4] sm:$0xf] %vm1888, %v1681
      %1939 = vst.msk [vmem:[%s172 + $0xc8] sm:$0xf] %vm1888, %v1682
      %1940 = vst.msk [vmem:[%s172 + $0xcc] sm:$0xf] %vm1888, %v1683
      %1941 = vst.msk [vmem:[%s172 + $0xd0] sm:$0xf] %vm1888, %v1684
      %1942 = vst.msk [vmem:[%s172 + $0xd4] sm:$0xf] %vm1888, %v1685
      %1943 = vst.msk [vmem:[%s172 + $0xd8] sm:$0xf] %vm1888, %v1686
      %1944 = vst.msk [vmem:[%s172 + $0xdc] sm:$0xf] %vm1888, %v1687
      %1945 = vst.msk [vmem:[%s172 + $0xe0] sm:$0xf] %vm1888, %v1688
      %1946 = vst.msk [vmem:[%s172 + $0xe4] sm:$0xf] %vm1888, %v1689
      %1947 = vst.msk [vmem:[%s172 + $0xe8] sm:$0xf] %vm1888, %v1690
      %1948 = vst.msk [vmem:[%s172 + $0xec] sm:$0xf] %vm1888, %v1691
      %1949 = vst.msk [vmem:[%s172 + $0xf0] sm:$0xf] %vm1888, %v1692
      %1950 = vst.msk [vmem:[%s172 + $0xf4] sm:$0xf] %vm1888, %v1693
      %1951 = vst.msk [vmem:[%s172 + $0xf8] sm:$0xf] %vm1888, %v1694
      %1952 = vst.msk [vmem:[%s172 + $0xfc] sm:$0xf] %vm1888, %v1695
      %1953 = vst.msk [vmem:[%s172 + $0x100] sm:$0xf] %vm1888, %v1696
      %1954 = vst.msk [vmem:[%s172 + $0x104] sm:$0xf] %vm1888, %v1697
      %1955 = vst.msk [vmem:[%s172 + $0x108] sm:$0xf] %vm1888, %v1698
      %1956 = vst.msk [vmem:[%s172 + $0x10c] sm:$0xf] %vm1888, %v1699
      %1957 = vst.msk [vmem:[%s172 + $0x110] sm:$0xf] %vm1888, %v1700
      %1958 = vst.msk [vmem:[%s172 + $0x114] sm:$0xf] %vm1888, %v1701
      %1959 = vst.msk [vmem:[%s172 + $0x118] sm:$0xf] %vm1888, %v1702
      %1960 = vst.msk [vmem:[%s172 + $0x11c] sm:$0xf] %vm1888, %v1703
      %1961 = vst.msk [vmem:[%s172 + $0x120] sm:$0xf] %vm1888, %v1704
      %1962 = vst.msk [vmem:[%s172 + $0x124] sm:$0xf] %vm1888, %v1705
      %1963 = vst.msk [vmem:[%s172 + $0x128] sm:$0xf] %vm1888, %v1706
      %1964 = vst.msk [vmem:[%s172 + $0x12c] sm:$0xf] %vm1888, %v1707
      %1965 = vst.msk [vmem:[%s172 + $0x130] sm:$0xf] %vm1888, %v1708
      %1966 = vst.msk [vmem:[%s172 + $0x134] sm:$0xf] %vm1888, %v1709
      %1967 = vst.msk [vmem:[%s172 + $0x138] sm:$0xf] %vm1888, %v1710
      %1968 = vst.msk [vmem:[%s172 + $0x13c] sm:$0xf] %vm1888, %v1711
      %1969 = vst.msk [vmem:[%s172 + $0x140] sm:$0xf] %vm1888, %v1712
      %1970 = vst.msk [vmem:[%s172 + $0x144] sm:$0xf] %vm1888, %v1713
      %1971 = vst.msk [vmem:[%s172 + $0x148] sm:$0xf] %vm1888, %v1714
      %1972 = vst.msk [vmem:[%s172 + $0x14c] sm:$0xf] %vm1888, %v1715
      %1973 = vst.msk [vmem:[%s172 + $0x150] sm:$0xf] %vm1888, %v1716
      %1974 = vst.msk [vmem:[%s172 + $0x154] sm:$0xf] %vm1888, %v1717
      %1975 = vst.msk [vmem:[%s172 + $0x158] sm:$0xf] %vm1888, %v1718
      %1976 = vst.msk [vmem:[%s172 + $0x15c] sm:$0xf] %vm1888, %v1719
      %1977 = vst.msk [vmem:[%s172 + $0x160] sm:$0xf] %vm1888, %v1720
      %1978 = vst.msk [vmem:[%s172 + $0x164] sm:$0xf] %vm1888, %v1721
      %1979 = vst.msk [vmem:[%s172 + $0x168] sm:$0xf] %vm1888, %v1722
      %1980 = vst.msk [vmem:[%s172 + $0x16c] sm:$0xf] %vm1888, %v1723
      %1981 = vst.msk [vmem:[%s172 + $0x170] sm:$0xf] %vm1888, %v1724
      %1982 = vst.msk [vmem:[%s172 + $0x174] sm:$0xf] %vm1888, %v1725
      %1983 = vst.msk [vmem:[%s172 + $0x178] sm:$0xf] %vm1888, %v1726
      %1984 = vst.msk [vmem:[%s172 + $0x17c] sm:$0xf] %vm1888, %v1727
      %1985 = vst.msk [vmem:[%s172 + $0x180] sm:$0xf] %vm1888, %v1728
      %1986 = vst.msk [vmem:[%s172 + $0x184] sm:$0xf] %vm1888, %v1729
      %1987 = vst.msk [vmem:[%s172 + $0x188] sm:$0xf] %vm1888, %v1730
      %1988 = vst.msk [vmem:[%s172 + $0x18c] sm:$0xf] %vm1888, %v1731
      %1989 = vst.msk [vmem:[%s172 + $0x190] sm:$0xf] %vm1888, %v1732
      %1990 = vst.msk [vmem:[%s172 + $0x194] sm:$0xf] %vm1888, %v1733
      %1991 = vst.msk [vmem:[%s172 + $0x198] sm:$0xf] %vm1888, %v1734
      %1992 = vst.msk [vmem:[%s172 + $0x19c] sm:$0xf] %vm1888, %v1735
      %1993 = vst.msk [vmem:[%s172 + $0x1a0] sm:$0xf] %vm1888, %v1736
      %1994 = vst.msk [vmem:[%s172 + $0x1a4] sm:$0xf] %vm1888, %v1737
      %1995 = vst.msk [vmem:[%s172 + $0x1a8] sm:$0xf] %vm1888, %v1738
      %1996 = vst.msk [vmem:[%s172 + $0x1ac] sm:$0xf] %vm1888, %v1739
      %1997 = vst.msk [vmem:[%s172 + $0x1b0] sm:$0xf] %vm1888, %v1740
      %1998 = vst.msk [vmem:[%s172 + $0x1b4] sm:$0xf] %vm1888, %v1741
      %1999 = vst.msk [vmem:[%s172 + $0x1b8] sm:$0xf] %vm1888, %v1742
      %2000 = vst.msk [vmem:[%s172 + $0x1bc] sm:$0xf] %vm1888, %v1743
      %2001 = vst.msk [vmem:[%s172 + $0x1c0] sm:$0xf] %vm1888, %v1744
      %2002 = vst.msk [vmem:[%s172 + $0x1c4] sm:$0xf] %vm1888, %v1745
      %2003 = vst.msk [vmem:[%s172 + $0x1c8] sm:$0xf] %vm1888, %v1746
      %2004 = vst.msk [vmem:[%s172 + $0x1cc] sm:$0xf] %vm1888, %v1747
      %2005 = vst.msk [vmem:[%s172 + $0x1d0] sm:$0xf] %vm1888, %v1748
      %2006 = vst.msk [vmem:[%s172 + $0x1d4] sm:$0xf] %vm1888, %v1749
      %2007 = vst.msk [vmem:[%s172 + $0x1d8] sm:$0xf] %vm1888, %v1750
      %2008 = vst.msk [vmem:[%s172 + $0x1dc] sm:$0xf] %vm1888, %v1751
      %2009 = vst.msk [vmem:[%s172 + $0x1e0] sm:$0xf] %vm1888, %v1752
      %2010 = vst.msk [vmem:[%s172 + $0x1e4] sm:$0xf] %vm1888, %v1753
      %2011 = vst.msk [vmem:[%s172 + $0x1e8] sm:$0xf] %vm1888, %v1754
      %2012 = vst.msk [vmem:[%s172 + $0x1ec] sm:$0xf] %vm1888, %v1755
      %2013 = vst.msk [vmem:[%s172 + $0x1f0] sm:$0xf] %vm1888, %v1756
      %2014 = vst.msk [vmem:[%s172 + $0x1f4] sm:$0xf] %vm1888, %v1757
      %2015 = vst.msk [vmem:[%s172 + $0x1f8] sm:$0xf] %vm1888, %v1758
      %2016 = vst.msk [vmem:[%s172 + $0x1fc] sm:$0xf] %vm1888, %v1759
      %s2017 = smul.u32 128, %s14
      %p2018 = scmp.lt.s32.totalorder %s2017, 255
      %s2019 = scalar_select %p2018, %s2017, 255
      %s2020 = smul.addr %s2019, 4
      %s2021 = scalar_lea.vmem %s3, %s2020
      // Predicated region
      $region33: #{rgb_branch_forward.3} parent=31 // pred_check
        %p2022 = pneg %p100
      $region34: #{rgb_branch_forward.3} parent=31 // pred_check_branch
        %2024 = sbr.rel (%p2022) target = $region36
      $region35: #{rgb_branch_forward.3} parent=31 // pred_region
        %s2025 = smul.u32 128, %s14
      $region36: #{rgb_branch_forward.3} parent=31 // pred_fallthru
        _
    $region32: #{rgb_branch_forward.3} parent=5 // pred_fallthru
      _
    %p2026 = scmp.le.s32.totalorder 2, %s9
    // Predicated region
    $region37: #{rgb_branch_forward.3} parent=5 // pred_check
      %p2027 = pneg %p2026
    $region38: #{rgb_branch_forward.3} parent=5 // pred_check_branch
      %2029 = sbr.rel (%p2027) target = $region40
    $region39: #{rgb_branch_forward.3} parent=5 // pred_region
      %s2030 = ssub.s32 %s9, 2
      // Predicated region
      $region41: #{rgb_branch_forward.3} parent=39 // pred_check
        %p2031 = pneg %p106
      $region42: #{rgb_branch_forward.3} parent=39 // pred_check_branch
        %2033 = sbr.rel (%p2031) target = $region44
      $region43: #{rgb_branch_forward.3} parent=39 // pred_region
        %s2034 = smul.u32 128, %s15
        %p2035 = scmp.lt.s32.totalorder %s2034, 255
        %s2036 = scalar_select %p2035, %s2034, 255
        %s2037 = smul.addr %s2036, 4
        %s2038 = scalar_lea.vmem %s3, %s2037
      $region44: #{rgb_branch_forward.3} parent=39 // pred_fallthru
        _
    $region40: #{rgb_branch_forward.3} parent=5 // pred_fallthru
      _
  $region6: #{rgb_branch_forward.3} parent=0 // loop_footer
    %s13 = sadd.s32 1, %s9
  $region7: #{rgb_branch_forward.3} parent=0 // loop_footer_branch
    %8 = sbr.rel target = $region3
  $region8: #{rgb_branch_forward.3} parent=0 // loop_exit
    _

// kernel: rgb_branch_forward.4
$region0: #{rgb_branch_forward.4}
  #allocation0 [shape = 'u32[]', space=smem, size = 0x4, offset = 0x4, fixed_abs, tag = 'smem constant byte address 0x4 - core index']
  #allocation1 [shape = 'u32[144,128]{1,0:T(1,128)}', space=vmem, size = 0x12000, scoped, tag = 'internal scratch']
  %s0 = inlined_call_operand.vmem [shape: bf16[128,27], index: 0, kind: input, shape index: {}]
  %s1 = inlined_call_operand.vmem [shape: bf16[27,64], index: 1, kind: input, shape index: {}]
  %s2 = inlined_call_operand.vmem [shape: f32[1,64], index: 2, kind: input, shape index: {}]
  %s3 = inlined_call_operand.vmem [shape: f32[128,64], index: 3, kind: output, shape index: {}]
  %s4 = sld [smem:[#allocation0]]
  $region45: #{rgb_branch_forward.4} parent=0
    _
  %s6 = ssub.s32 1, %s4
  %s7 = scalar_select 0, %s6, %s4
  loop: start=0, step=1, limit=4
  $region2: #{rgb_branch_forward.4} parent=0 // loop_pre_header
    _
  $region3: #{rgb_branch_forward.4} parent=0 // loop_header
    %s9 = sphi 0, %s13
    %p10 = scmp.ge.s32.totalorder %s9, 4
    %s19 = sphi 0, %s21
    %s22 = sphi 0, %s19
    %s23 = sphi 0, %s22
    %s39 = sphi 0, %s23
    %s43 = sphi 0, %s43
    %s45 = sphi 0, %s43
    %s46 = sphi 0, %s45
    %s60 = sphi 0, %s46
    %s64 = sphi 0, %s64
    %s66 = sphi 0, %s64
    %s67 = sphi 0, %s66
    %s81 = sphi 0, %s67
    %s87 = sphi 0, %s89
    %s90 = sphi 0, %s87
    %s91 = sphi 0, %s90
    %s107 = sphi 0, %s91
  $region4: #{rgb_branch_forward.4} parent=0 // loop_header_branch
    %12 = sbr.rel (%p10) target = $region8
  $region5: #{rgb_branch_forward.4} parent=0 // loop_body
    %s14 = ssub.s32 %s9, 1
    %s15 = ssub.s32 %s9, 2
    %s16 = sadd.s32 %s9, 1
    %s17 = ssub.s32 %s9, %s16
    %p18 = scmp.eq.s32.totalorder %s17, 0
    %s20 = sadd.s32 %s19, 1
    %s21 = scalar_select %p18, %s19, %s20
    %p24 = pneg %p18
    %p25 = scmp.eq.s32.totalorder %s9, 1
    %p26 = por %p24, %p25
    %p27 = scmp.ne.s32.totalorder %s19, %s22
    %p28 = scmp.eq.s32.totalorder %s9, 0
    %p29 = por %p27, %p28
    %p30 = scmp.ne.s32.totalorder %s19, %s22
    %p31 = scmp.eq.s32.totalorder %s14, 1
    %p32 = por %p30, %p31
    %p33 = scmp.ne.s32.totalorder %s22, %s23
    %p34 = scmp.eq.s32.totalorder %s14, 0
    %p35 = por %p33, %p34
    %p36 = scmp.ne.s32.totalorder %s22, %s23
    %p37 = scmp.eq.s32.totalorder %s15, 1
    %p38 = por %p36, %p37
    %p40 = scmp.ne.s32.totalorder %s23, %s39
    %p41 = scmp.eq.s32.totalorder %s15, 0
    %p42 = por %p40, %p41
    %s44 = sadd.s32 %s43, 1
    %p47 = scmp.eq.s32.totalorder %s9, 1
    %p48 = scmp.ne.s32.totalorder %s43, %s45
    %p49 = scmp.eq.s32.totalorder %s9, 0
    %p50 = por %p48, %p49
    %p51 = scmp.ne.s32.totalorder %s43, %s45
    %p52 = scmp.eq.s32.totalorder %s14, 1
    %p53 = por %p51, %p52
    %p54 = scmp.ne.s32.totalorder %s45, %s46
    %p55 = scmp.eq.s32.totalorder %s14, 0
    %p56 = por %p54, %p55
    %p57 = scmp.ne.s32.totalorder %s45, %s46
    %p58 = scmp.eq.s32.totalorder %s15, 1
    %p59 = por %p57, %p58
    %p61 = scmp.ne.s32.totalorder %s46, %s60
    %p62 = scmp.eq.s32.totalorder %s15, 0
    %p63 = por %p61, %p62
    %s65 = sadd.s32 %s64, 1
    %p68 = scmp.eq.s32.totalorder %s9, 1
    %p69 = scmp.ne.s32.totalorder %s64, %s66
    %p70 = scmp.eq.s32.totalorder %s9, 0
    %p71 = por %p69, %p70
    %p72 = scmp.ne.s32.totalorder %s64, %s66
    %p73 = scmp.eq.s32.totalorder %s14, 1
    %p74 = por %p72, %p73
    %p75 = scmp.ne.s32.totalorder %s66, %s67
    %p76 = scmp.eq.s32.totalorder %s14, 0
    %p77 = por %p75, %p76
    %p78 = scmp.ne.s32.totalorder %s66, %s67
    %p79 = scmp.eq.s32.totalorder %s15, 1
    %p80 = por %p78, %p79
    %p82 = scmp.ne.s32.totalorder %s67, %s81
    %p83 = scmp.eq.s32.totalorder %s15, 0
    %p84 = por %p82, %p83
    %s85 = ssub.s32 %s9, %s16
    %p86 = scmp.eq.s32.totalorder %s85, 0
    %s88 = sadd.s32 %s87, 1
    %s89 = scalar_select %p86, %s87, %s88
    %p92 = pneg %p86
    %p93 = scmp.eq.s32.totalorder %s9, 1
    %p94 = por %p92, %p93
    %p95 = scmp.ne.s32.totalorder %s87, %s90
    %p96 = scmp.eq.s32.totalorder %s9, 0
    %p97 = por %p95, %p96
    %p98 = scmp.ne.s32.totalorder %s87, %s90
    %p99 = scmp.eq.s32.totalorder %s14, 1
    %p100 = por %p98, %p99
    %p101 = scmp.ne.s32.totalorder %s90, %s91
    %p102 = scmp.eq.s32.totalorder %s14, 0
    %p103 = por %p101, %p102
    %p104 = scmp.ne.s32.totalorder %s90, %s91
    %p105 = scmp.eq.s32.totalorder %s15, 1
    %p106 = por %p104, %p105
    %p108 = scmp.ne.s32.totalorder %s91, %s107
    %p109 = scmp.eq.s32.totalorder %s15, 0
    %p110 = por %p108, %p109
    %p111 = scmp.le.s32.totalorder 1, %s9
    %p112 = scmp.lt.s32.totalorder %s9, 3
    %p113 = pnand %p111, %p112
    %p114 = pneg %p113
    // Predicated region
    $region9: #{rgb_branch_forward.4} parent=5 // pred_check
      _
    $region10: #{rgb_branch_forward.4} parent=5 // pred_check_branch
      %116 = sbr.rel (%p113) target = $region12
    $region11: #{rgb_branch_forward.4} parent=5 // pred_region
      %s117 = ssub.s32 %s9, 1
      // Predicated region
      $region13: #{rgb_branch_forward.4} parent=11 // pred_check
        %p118 = pneg %p56
      $region14: #{rgb_branch_forward.4} parent=11 // pred_check_branch
        %120 = sbr.rel (%p118) target = $region16
      $region15: #{rgb_branch_forward.4} parent=11 // pred_region
        _
      $region16: #{rgb_branch_forward.4} parent=11 // pred_fallthru
        _
      // Predicated region
      $region17: #{rgb_branch_forward.4} parent=11 // pred_check
        %p121 = pneg %p77
      $region18: #{rgb_branch_forward.4} parent=11 // pred_check_branch
        %123 = sbr.rel (%p121) target = $region20
      $region19: #{rgb_branch_forward.4} parent=11 // pred_region
        _
      $region20: #{rgb_branch_forward.4} parent=11 // pred_fallthru
        _
    $region12: #{rgb_branch_forward.4} parent=5 // pred_fallthru
      _
    %p124 = scmp.lt.s32.totalorder %s9, 2
    // Predicated region
    $region21: #{rgb_branch_forward.4} parent=5 // pred_check
      %p125 = pneg %p124
    $region22: #{rgb_branch_forward.4} parent=5 // pred_check_branch
      %127 = sbr.rel (%p125) target = $region24
    $region23: #{rgb_branch_forward.4} parent=5 // pred_region
      // Predicated region
      $region25: #{rgb_branch_forward.4} parent=23 // pred_check
        %p128 = pneg %p29
      $region26: #{rgb_branch_forward.4} parent=23 // pred_check_branch
        %130 = sbr.rel (%p128) target = $region28
      $region27: #{rgb_branch_forward.4} parent=23 // pred_region
        %s131 = smul.u32 8, %s9
        %p132 = scmp.lt.s32.totalorder %s131, 15
        %s133 = scalar_select %p132, %s131, 15
        %s134 = smul.addr %s133, 4
        %s135 = scalar_lea.vmem %s0, %s134
        %s136 = smul.u32 8, %s9
      $region28: #{rgb_branch_forward.4} parent=23 // pred_fallthru
        _
    $region24: #{rgb_branch_forward.4} parent=5 // pred_fallthru
      _
    %p137 = scmp.le.s32.totalorder 1, %s9
    %p138 = scmp.lt.s32.totalorder %s9, 3
    %p139 = pnand %p137, %p138
    %p140 = pneg %p139
    // Predicated region
    $region29: #{rgb_branch_forward.4} parent=5 // pred_check
      _
    $region30: #{rgb_branch_forward.4} parent=5 // pred_check_branch
      %142 = sbr.rel (%p139) target = $region32
    $region31: #{rgb_branch_forward.4} parent=5 // pred_region
      %s143 = ssub.s32 %s9, 1
      %s144 = smul.u32 8, %s14
      %p145 = scmp.lt.s32.totalorder %s144, 15
      %s146 = scalar_select %p145, %s144, 15
      %s147 = smul.addr %s146, 4
      %s148 = scalar_lea.vmem %s0, %s147
      %p149 = pneg %p35
      %p150 = pneg %p32
      %p151 = pneg %p56
      %p152 = pneg %p53
      %p153 = pneg %p77
      %p154 = pneg %p74
      %p155 = pneg %p103
      %p156 = pneg %p100
      %s157 = smul.u32 8, %s14
      %p158 = scmp.lt.s32.totalorder %s157, 15
      %s159 = scalar_select %p158, %s157, 15
      %s160 = smul.addr %s159, 8
      %s161 = scalar_lea.vmem %s3, %s160
      %s162 = smul.u32 8, %s14
      %p163 = scmp.lt.s32.totalorder %s162, 15
      %s164 = scalar_select %p163, %s162, 15
      %s165 = smul.addr %s164, 4
      %s166 = scalar_lea.vmem %s0, %s165
      %s167 = smul.u32 8, %s14
      %s168 = smul.u32 8, %s14
      %p169 = scmp.lt.s32.totalorder %s168, 15
      %s170 = scalar_select %p169, %s168, 15
      %s171 = smul.addr %s170, 8
      %s172 = scalar_lea.vmem %s3, %s171
      %s173 = smul.u32 8, %s14
      %v175 = vld [vmem:[%s166] sm:$0xf]
      %v176 = vld [vmem:[%s166 + $0x4] sm:$0xf]
      %v177 = vld [vmem:[%s166 + $0x8] sm:$0xf]
      %v178 = vld [vmem:[%s166 + $0xc] sm:$0xf]
      %v179 = vld [vmem:[%s166 + $0x10] sm:$0xf]
      %v180 = vld [vmem:[%s166 + $0x14] sm:$0xf]
      %v181 = vld [vmem:[%s166 + $0x18] sm:$0xf]
      %v182 = vld [vmem:[%s166 + $0x1c] sm:$0xf]
      %v183 = vld [vmem:[%s1] sm:$0xf]
      %v184 = vld [vmem:[%s1 + $0x4] sm:$0xf]
      %v185 = vld [vmem:[%s1 + $0x8] sm:$0xf]
      %v186 = vld [vmem:[%s1 + $0xc] sm:$0x3]
      %v187 = vld [vmem:[%s2] sm:$0x1]
      %v189 = vlaneseq
      %v190 = vshrl.u32 %v189, 7
      %v191 = vsub.s32 0, %v190
      %v192 = vrot.slane %v187, %v191
      %v202 = vunpack.c.l.b16 %v175
      %v203 = vunpack.c.l.b16 %v176
      %v204 = vunpack.c.l.b16 %v177
      %v205 = vunpack.c.l.b16 %v178
      %v206 = vunpack.c.l.b16 %v179
      %v207 = vunpack.c.l.b16 %v180
      %v208 = vunpack.c.l.b16 %v181
      %v209 = vunpack.c.l.b16 %v182
      %v210 = vpack.c.b16 %v203, %v202
      %v211 = vpack.c.b16 %v205, %v204
      %v212 = vpack.c.b16 %v207, %v206
      %v213 = vpack.c.b16 %v209, %v208
      %v218 = vunpack.c.l.b16 %v183
      %v219 = vunpack.c.l.b16 %v184
      %v220 = vunpack.c.l.b16 %v185
      %v221 = vunpack.c.l.b16 %v186
      %v222 = vpack.c.b16 %v219, %v218
      %v223 = vpack.c.b16 %v221, %v220
      %vm225 = vcmask 220160
      %v227 = vsel %vm225, %v210, 0
      %v230 = vsel %vm225, %v211, 0
      %v233 = vsel %vm225, %v212, 0
      %v236 = vsel %vm225, %v213, 0
      %vm238 = vcmask 1044480
      %vm239 = vcmask 1045504
      %v240 = vsel %vm238, 4294967295, 65535
      %v241 = vsel %vm239, %v240, 0
      %v243 = vand.u32 %v223, %v241
      %245 = vmatprep.subr.bf16.mxu0 0
      %246 = vmatpush1.bf16.msra.mxu0 %v222
      %247 = vmatprep.subr.bf16.mxu0 0
      %248 = vmatpush1.bf16.msra.mxu0 %v243
      %249 = vmatprep.subr.bf16.mxu0 0
      %250 = vmatpush1.bf16.msra.mxu0 0
      %251 = vmatprep.subr.bf16.mxu0 0
      %252 = vmatpush1.bf16.msra.mxu0 0
      %253 = vmatprep.subr.bf16.mxu0 0
      %254 = vmatpush1.bf16.msra.mxu0 0
      %255 = vmatprep.subr.bf16.mxu0 0
      %256 = vmatpush1.bf16.msra.mxu0 0
      %257 = vmatprep.subr.bf16.mxu0 0
      %258 = vmatpush1.bf16.msra.mxu0 0
      %259 = vmatprep.subr.bf16.mxu0 0
      %260 = vmatpush1.bf16.msra.mxu0 0
      %261 = vmatprep.subr.bf16.mxu0 0
      %262 = vmatpush1.bf16.msra.mxu0 0
      %263 = vmatprep.subr.bf16.mxu0 0
      %264 = vmatpush1.bf16.msra.mxu0 0
      %265 = vmatprep.subr.bf16.mxu0 0
      %266 = vmatpush1.bf16.msra.mxu0 0
      %267 = vmatprep.subr.bf16.mxu0 0
      %268 = vmatpush1.bf16.msra.mxu0 0
      %269 = vmatprep.subr.bf16.mxu0 0
      %270 = vmatpush1.bf16.msra.mxu0 0
      %271 = vmatprep.subr.bf16.mxu0 0
      %272 = vmatpush1.bf16.msra.mxu0 0
      %273 = vmatprep.subr.bf16.mxu0 0
      %274 = vmatpush1.bf16.msra.mxu0 0
      %275 = vmatprep.subr.bf16.mxu0 0
      %276 = vmatpush1.bf16.msra.mxu0 0
      %277 = vmatprep.mubr.bf16.mxu0 0
      %278 = vmatmul.mubr.bf16.gmra.mrb[0].mxu0 %v227
      %v279 = vpop.f32.mrb[0].mxu0
      %v280 = vadd.f32 %v192, %v279
      %v281 = vpop.f32.mrb[0].mxu0
      %v282 = vpop.f32.mrb[0].mxu0
      %v283 = vadd.f32 %v192, %v282
      %v284 = vpop.f32.mrb[0].mxu0
      %285 = vmatprep.mubr.bf16.mxu0 0
      %286 = vmatmul.mubr.bf16.gmra.mrb[0].mxu0 %v230
      %v287 = vpop.f32.mrb[0].mxu0
      %v288 = vadd.f32 %v192, %v287
      %v289 = vpop.f32.mrb[0].mxu0
      %v290 = vpop.f32.mrb[0].mxu0
      %v291 = vadd.f32 %v192, %v290
      %v292 = vpop.f32.mrb[0].mxu0
      %293 = vmatprep.mubr.bf16.mxu0 0
      %294 = vmatmul.mubr.bf16.gmra.mrb[0].mxu0 %v233
      %v295 = vpop.f32.mrb[0].mxu0
      %v296 = vadd.f32 %v192, %v295
      %v297 = vpop.f32.mrb[0].mxu0
      %v298 = vpop.f32.mrb[0].mxu0
      %v299 = vadd.f32 %v192, %v298
      %v300 = vpop.f32.mrb[0].mxu0
      %301 = vmatprep.mubr.bf16.mxu0 0
      %302 = vmatmul.mubr.bf16.gmra.mrb[0].mxu0 %v236
      %v303 = vpop.f32.mrb[0].mxu0
      %v304 = vadd.f32 %v192, %v303
      %v305 = vpop.f32.mrb[0].mxu0
      %v306 = vpop.f32.mrb[0].mxu0
      %v307 = vadd.f32 %v192, %v306
      %v308 = vpop.f32.mrb[0].mxu0
      %309 = vdwg.mxu0
      %v310 = vmax.f32 %v280, 0.0
      %v311 = vmax.f32 %v283, 0.0
      %v312 = vmax.f32 %v288, 0.0
      %v313 = vmax.f32 %v291, 0.0
      %v314 = vmax.f32 %v296, 0.0
      %v315 = vmax.f32 %v299, 0.0
      %v316 = vmax.f32 %v304, 0.0
      %v317 = vmax.f32 %v307, 0.0
      %vm318 = vcmask 523264
      %319 = vst.msk [vmem:[%s172] sm:$0xff] %vm318, %v310
      %320 = vst.msk [vmem:[%s172 + $0x8] sm:$0xff] %vm318, %v311
      %321 = vst.msk [vmem:[%s172 + $0x10] sm:$0xff] %vm318, %v312
      %322 = vst.msk [vmem:[%s172 + $0x18] sm:$0xff] %vm318, %v313
      %323 = vst.msk [vmem:[%s172 + $0x20] sm:$0xff] %vm318, %v314
      %324 = vst.msk [vmem:[%s172 + $0x28] sm:$0xff] %vm318, %v315
      %325 = vst.msk [vmem:[%s172 + $0x30] sm:$0xff] %vm318, %v316
      %326 = vst.msk [vmem:[%s172 + $0x38] sm:$0xff] %vm318, %v317
      %s327 = smul.u32 8, %s14
      %p328 = scmp.lt.s32.totalorder %s327, 15
      %s329 = scalar_select %p328, %s327, 15
      %s330 = smul.addr %s329, 8
      %s331 = scalar_lea.vmem %s3, %s330
      // Predicated region
      $region33: #{rgb_branch_forward.4} parent=31 // pred_check
        %p332 = pneg %p100
      $region34: #{rgb_branch_forward.4} parent=31 // pred_check_branch
        %334 = sbr.rel (%p332) target = $region36
      $region35: #{rgb_branch_forward.4} parent=31 // pred_region
        %s335 = smul.u32 8, %s14
      $region36: #{rgb_branch_forward.4} parent=31 // pred_fallthru
        _
    $region32: #{rgb_branch_forward.4} parent=5 // pred_fallthru
      _
    %p336 = scmp.le.s32.totalorder 2, %s9
    // Predicated region
    $region37: #{rgb_branch_forward.4} parent=5 // pred_check
      %p337 = pneg %p336
    $region38: #{rgb_branch_forward.4} parent=5 // pred_check_branch
      %339 = sbr.rel (%p337) target = $region40
    $region39: #{rgb_branch_forward.4} parent=5 // pred_region
      %s340 = ssub.s32 %s9, 2
      // Predicated region
      $region41: #{rgb_branch_forward.4} parent=39 // pred_check
        %p341 = pneg %p106
      $region42: #{rgb_branch_forward.4} parent=39 // pred_check_branch
        %343 = sbr.rel (%p341) target = $region44
      $region43: #{rgb_branch_forward.4} parent=39 // pred_region
        %s344 = smul.u32 8, %s15
        %p345 = scmp.lt.s32.totalorder %s344, 15
        %s346 = scalar_select %p345, %s344, 15
        %s347 = smul.addr %s346, 8
        %s348 = scalar_lea.vmem %s3, %s347
      $region44: #{rgb_branch_forward.4} parent=39 // pred_fallthru
        _
    $region40: #{rgb_branch_forward.4} parent=5 // pred_fallthru
      _
  $region6: #{rgb_branch_forward.4} parent=0 // loop_footer
    %s13 = sadd.s32 1, %s9
  $region7: #{rgb_branch_forward.4} parent=0 // loop_footer_branch
    %8 = sbr.rel target = $region3
  $region8: #{rgb_branch_forward.4} parent=0 // loop_exit
    _

// kernel: rgb_branch_forward.5
$region0: #{rgb_branch_forward.5}
  #allocation0 [shape = 'u32[]', space=smem, size = 0x4, offset = 0x4, fixed_abs, tag = 'smem constant byte address 0x4 - core index']
  #allocation1 [shape = 'u32[144,128]{1,0:T(1,128)}', space=vmem, size = 0x12000, scoped, tag = 'internal scratch']
  %s0 = inlined_call_operand.vmem [shape: bf16[128,576], index: 0, kind: input, shape index: {}]
  %s1 = inlined_call_operand.vmem [shape: bf16[576,1280], index: 1, kind: input, shape index: {}]
  %s2 = inlined_call_operand.vmem [shape: f32[1,1280], index: 2, kind: input, shape index: {}]
  %s3 = inlined_call_operand.vmem [shape: bf16[1280,128], index: 3, kind: input, shape index: {}]
  %s4 = inlined_call_operand.vmem [shape: f32[1,128], index: 4, kind: input, shape index: {}]
  %s5 = inlined_call_operand.vmem [shape: f32[128,128], index: 5, kind: output, shape index: {}]
  %s6 = sld [smem:[#allocation0]]
  $region53: #{rgb_branch_forward.5} parent=0
    _
  %s8 = ssub.s32 1, %s6
  %s9 = scalar_select 0, %s8, %s6
  loop: start=0, step=1, limit=4
  $region2: #{rgb_branch_forward.5} parent=0 // loop_pre_header
    _
  $region3: #{rgb_branch_forward.5} parent=0 // loop_header
    %s11 = sphi 0, %s15
    %p12 = scmp.ge.s32.totalorder %s11, 4
    %s21 = sphi 0, %s23
    %s24 = sphi 0, %s21
    %s25 = sphi 0, %s24
    %s41 = sphi 0, %s25
    %s45 = sphi 0, %s45
    %s47 = sphi 0, %s45
    %s48 = sphi 0, %s47
    %s62 = sphi 0, %s48
    %s66 = sphi 0, %s66
    %s68 = sphi 0, %s66
    %s69 = sphi 0, %s68
    %s83 = sphi 0, %s69
    %s87 = sphi 0, %s87
    %s89 = sphi 0, %s87
    %s90 = sphi 0, %s89
    %s104 = sphi 0, %s90
    %s108 = sphi 0, %s108
    %s110 = sphi 0, %s108
    %s111 = sphi 0, %s110
    %s125 = sphi 0, %s111
    %s131 = sphi 0, %s133
    %s134 = sphi 0, %s131
    %s135 = sphi 0, %s134
    %s151 = sphi 0, %s135
  $region4: #{rgb_branch_forward.5} parent=0 // loop_header_branch
    %14 = sbr.rel (%p12) target = $region8
  $region5: #{rgb_branch_forward.5} parent=0 // loop_body
    %s16 = ssub.s32 %s11, 1
    %s17 = ssub.s32 %s11, 2
    %s18 = sadd.s32 %s11, 1
    %s19 = ssub.s32 %s11, %s18
    %p20 = scmp.eq.s32.totalorder %s19, 0
    %s22 = sadd.s32 %s21, 1
    %s23 = scalar_select %p20, %s21, %s22
    %p26 = pneg %p20
    %p27 = scmp.eq.s32.totalorder %s11, 1
    %p28 = por %p26, %p27
    %p29 = scmp.ne.s32.totalorder %s21, %s24
    %p30 = scmp.eq.s32.totalorder %s11, 0
    %p31 = por %p29, %p30
    %p32 = scmp.ne.s32.totalorder %s21, %s24
    %p33 = scmp.eq.s32.totalorder %s16, 1
    %p34 = por %p32, %p33
    %p35 = scmp.ne.s32.totalorder %s24, %s25
    %p36 = scmp.eq.s32.totalorder %s16, 0
    %p37 = por %p35, %p36
    %p38 = scmp.ne.s32.totalorder %s24, %s25
    %p39 = scmp.eq.s32.totalorder %s17, 1
    %p40 = por %p38, %p39
    %p42 = scmp.ne.s32.totalorder %s25, %s41
    %p43 = scmp.eq.s32.totalorder %s17, 0
    %p44 = por %p42, %p43
    %s46 = sadd.s32 %s45, 1
    %p49 = scmp.eq.s32.totalorder %s11, 1
    %p50 = scmp.ne.s32.totalorder %s45, %s47
    %p51 = scmp.eq.s32.totalorder %s11, 0
    %p52 = por %p50, %p51
    %p53 = scmp.ne.s32.totalorder %s45, %s47
    %p54 = scmp.eq.s32.totalorder %s16, 1
    %p55 = por %p53, %p54
    %p56 = scmp.ne.s32.totalorder %s47, %s48
    %p57 = scmp.eq.s32.totalorder %s16, 0
    %p58 = por %p56, %p57
    %p59 = scmp.ne.s32.totalorder %s47, %s48
    %p60 = scmp.eq.s32.totalorder %s17, 1
    %p61 = por %p59, %p60
    %p63 = scmp.ne.s32.totalorder %s48, %s62
    %p64 = scmp.eq.s32.totalorder %s17, 0
    %p65 = por %p63, %p64
    %s67 = sadd.s32 %s66, 1
    %p70 = scmp.eq.s32.totalorder %s11, 1
    %p71 = scmp.ne.s32.totalorder %s66, %s68
    %p72 = scmp.eq.s32.totalorder %s11, 0
    %p73 = por %p71, %p72
    %p74 = scmp.ne.s32.totalorder %s66, %s68
    %p75 = scmp.eq.s32.totalorder %s16, 1
    %p76 = por %p74, %p75
    %p77 = scmp.ne.s32.totalorder %s68, %s69
    %p78 = scmp.eq.s32.totalorder %s16, 0
    %p79 = por %p77, %p78
    %p80 = scmp.ne.s32.totalorder %s68, %s69
    %p81 = scmp.eq.s32.totalorder %s17, 1
    %p82 = por %p80, %p81
    %p84 = scmp.ne.s32.totalorder %s69, %s83
    %p85 = scmp.eq.s32.totalorder %s17, 0
    %p86 = por %p84, %p85
    %s88 = sadd.s32 %s87, 1
    %p91 = scmp.eq.s32.totalorder %s11, 1
    %p92 = scmp.ne.s32.totalorder %s87, %s89
    %p93 = scmp.eq.s32.totalorder %s11, 0
    %p94 = por %p92, %p93
    %p95 = scmp.ne.s32.totalorder %s87, %s89
    %p96 = scmp.eq.s32.totalorder %s16, 1
    %p97 = por %p95, %p96
    %p98 = scmp.ne.s32.totalorder %s89, %s90
    %p99 = scmp.eq.s32.totalorder %s16, 0
    %p100 = por %p98, %p99
    %p101 = scmp.ne.s32.totalorder %s89, %s90
    %p102 = scmp.eq.s32.totalorder %s17, 1
    %p103 = por %p101, %p102
    %p105 = scmp.ne.s32.totalorder %s90, %s104
    %p106 = scmp.eq.s32.totalorder %s17, 0
    %p107 = por %p105, %p106
    %s109 = sadd.s32 %s108, 1
    %p112 = scmp.eq.s32.totalorder %s11, 1
    %p113 = scmp.ne.s32.totalorder %s108, %s110
    %p114 = scmp.eq.s32.totalorder %s11, 0
    %p115 = por %p113, %p114
    %p116 = scmp.ne.s32.totalorder %s108, %s110
    %p117 = scmp.eq.s32.totalorder %s16, 1
    %p118 = por %p116, %p117
    %p119 = scmp.ne.s32.totalorder %s110, %s111
    %p120 = scmp.eq.s32.totalorder %s16, 0
    %p121 = por %p119, %p120
    %p122 = scmp.ne.s32.totalorder %s110, %s111
    %p123 = scmp.eq.s32.totalorder %s17, 1
    %p124 = por %p122, %p123
    %p126 = scmp.ne.s32.totalorder %s111, %s125
    %p127 = scmp.eq.s32.totalorder %s17, 0
    %p128 = por %p126, %p127
    %s129 = ssub.s32 %s11, %s18
    %p130 = scmp.eq.s32.totalorder %s129, 0
    %s132 = sadd.s32 %s131, 1
    %s133 = scalar_select %p130, %s131, %s132
    %p136 = pneg %p130
    %p137 = scmp.eq.s32.totalorder %s11, 1
    %p138 = por %p136, %p137
    %p139 = scmp.ne.s32.totalorder %s131, %s134
    %p140 = scmp.eq.s32.totalorder %s11, 0
    %p141 = por %p139, %p140
    %p142 = scmp.ne.s32.totalorder %s131, %s134
    %p143 = scmp.eq.s32.totalorder %s16, 1
    %p144 = por %p142, %p143
    %p145 = scmp.ne.s32.totalorder %s134, %s135
    %p146 = scmp.eq.s32.totalorder %s16, 0
    %p147 = por %p145, %p146
    %p148 = scmp.ne.s32.totalorder %s134, %s135
    %p149 = scmp.eq.s32.totalorder %s17, 1
    %p150 = por %p148, %p149
    %p152 = scmp.ne.s32.totalorder %s135, %s151
    %p153 = scmp.eq.s32.totalorder %s17, 0
    %p154 = por %p152, %p153
    %p155 = scmp.le.s32.totalorder 1, %s11
    %p156 = scmp.lt.s32.totalorder %s11, 3
    %p157 = pnand %p155, %p156
    %p158 = pneg %p157
    // Predicated region
    $region9: #{rgb_branch_forward.5} parent=5 // pred_check
      _
    $region10: #{rgb_branch_forward.5} parent=5 // pred_check_branch
      %160 = sbr.rel (%p157) target = $region12
    $region11: #{rgb_branch_forward.5} parent=5 // pred_region
      %s161 = ssub.s32 %s11, 1
      // Predicated region
      $region13: #{rgb_branch_forward.5} parent=11 // pred_check
        %p162 = pneg %p58
      $region14: #{rgb_branch_forward.5} parent=11 // pred_check_branch
        %164 = sbr.rel (%p162) target = $region16
      $region15: #{rgb_branch_forward.5} parent=11 // pred_region
        _
      $region16: #{rgb_branch_forward.5} parent=11 // pred_fallthru
        _
      // Predicated region
      $region17: #{rgb_branch_forward.5} parent=11 // pred_check
        %p165 = pneg %p79
      $region18: #{rgb_branch_forward.5} parent=11 // pred_check_branch
        %167 = sbr.rel (%p165) target = $region20
      $region19: #{rgb_branch_forward.5} parent=11 // pred_region
        _
      $region20: #{rgb_branch_forward.5} parent=11 // pred_fallthru
        _
      // Predicated region
      $region21: #{rgb_branch_forward.5} parent=11 // pred_check
        %p168 = pneg %p100
      $region22: #{rgb_branch_forward.5} parent=11 // pred_check_branch
        %170 = sbr.rel (%p168) target = $region24
      $region23: #{rgb_branch_forward.5} parent=11 // pred_region
        _
      $region24: #{rgb_branch_forward.5} parent=11 // pred_fallthru
        _
      // Predicated region
      $region25: #{rgb_branch_forward.5} parent=11 // pred_check
        %p171 = pneg %p121
      $region26: #{rgb_branch_forward.5} parent=11 // pred_check_branch
        %173 = sbr.rel (%p171) target = $region28
      $region27: #{rgb_branch_forward.5} parent=11 // pred_region
        _
      $region28: #{rgb_branch_forward.5} parent=11 // pred_fallthru
        _
    $region12: #{rgb_branch_forward.5} parent=5 // pred_fallthru
      _
    %p174 = scmp.lt.s32.totalorder %s11, 2
    // Predicated region
    $region29: #{rgb_branch_forward.5} parent=5 // pred_check
      %p175 = pneg %p174
    $region30: #{rgb_branch_forward.5} parent=5 // pred_check_branch
      %177 = sbr.rel (%p175) target = $region32
    $region31: #{rgb_branch_forward.5} parent=5 // pred_region
      // Predicated region
      $region33: #{rgb_branch_forward.5} parent=31 // pred_check
        %p178 = pneg %p31
      $region34: #{rgb_branch_forward.5} parent=31 // pred_check_branch
        %180 = sbr.rel (%p178) target = $region36
      $region35: #{rgb_branch_forward.5} parent=31 // pred_region
        %s181 = smul.u32 8, %s11
        %p182 = scmp.lt.s32.totalorder %s181, 15
        %s183 = scalar_select %p182, %s181, 15
        %s184 = smul.addr %s183, 5
        %s185 = smul.addr %s184, 4
        %s186 = scalar_lea.vmem %s0, %s185
        %s187 = smul.u32 8, %s11
      $region36: #{rgb_branch_forward.5} parent=31 // pred_fallthru
        _
    $region32: #{rgb_branch_forward.5} parent=5 // pred_fallthru
      _
    %p188 = scmp.le.s32.totalorder 1, %s11
    %p189 = scmp.lt.s32.totalorder %s11, 3
    %p190 = pnand %p188, %p189
    %p191 = pneg %p190
    // Predicated region
    $region37: #{rgb_branch_forward.5} parent=5 // pred_check
      _
    $region38: #{rgb_branch_forward.5} parent=5 // pred_check_branch
      %193 = sbr.rel (%p190) target = $region40
    $region39: #{rgb_branch_forward.5} parent=5 // pred_region
      %s194 = ssub.s32 %s11, 1
      %s195 = smul.u32 8, %s16
      %p196 = scmp.lt.s32.totalorder %s195, 15
      %s197 = scalar_select %p196, %s195, 15
      %s198 = smul.addr %s197, 5
      %s199 = smul.addr %s198, 4
      %s200 = scalar_lea.vmem %s0, %s199
      %p201 = pneg %p37
      %p202 = pneg %p34
      %p203 = pneg %p58
      %p204 = pneg %p55
      %p205 = pneg %p79
      %p206 = pneg %p76
      %p207 = pneg %p100
      %p208 = pneg %p97
      %p209 = pneg %p121
      %p210 = pneg %p118
      %p211 = pneg %p147
      %p212 = pneg %p144
      %s213 = smul.u32 8, %s16
      %p214 = scmp.lt.s32.totalorder %s213, 15
      %s215 = scalar_select %p214, %s213, 15
      %s216 = smul.addr %s215, 8
      %s217 = scalar_lea.vmem %s5, %s216
      %s218 = smul.u32 8, %s16
      %p219 = scmp.lt.s32.totalorder %s218, 15
      %s220 = scalar_select %p219, %s218, 15
      %s221 = smul.addr %s220, 5
      %s222 = smul.addr %s221, 4
      %s223 = scalar_lea.vmem %s0, %s222
      %s224 = smul.u32 8, %s16
      %s225 = smul.u32 8, %s16
      %p226 = scmp.lt.s32.totalorder %s225, 15
      %s227 = scalar_select %p226, %s225, 15
      %s228 = smul.addr %s227, 8
      %s229 = scalar_lea.vmem %s5, %s228
      %s230 = smul.u32 8, %s16
      %v232 = vld [vmem:[%s223] sm:$0xff]
      %v233 = vld [vmem:[%s223 + $0x8] sm:$0xff]
      %v234 = vld [vmem:[%s223 + $0x10] sm:$0xf]
      %v235 = vld [vmem:[%s223 + $0x14] sm:$0xff]
      %v236 = vld [vmem:[%s223 + $0x1c] sm:$0xff]
      %v237 = vld [vmem:[%s223 + $0x24] sm:$0xf]
      %v238 = vld [vmem:[%s223 + $0x28] sm:$0xff]
      %v239 = vld [vmem:[%s223 + $0x30] sm:$0xff]
      %v240 = vld [vmem:[%s223 + $0x38] sm:$0xf]
      %v241 = vld [vmem:[%s223 + $0x3c] sm:$0xff]
      %v242 = vld [vmem:[%s223 + $0x44] sm:$0xff]
      %v243 = vld [vmem:[%s223 + $0x4c] sm:$0xf]
      %v244 = vld [vmem:[%s223 + $0x50] sm:$0xff]
      %v245 = vld [vmem:[%s223 + $0x58] sm:$0xff]
      %v246 = vld [vmem:[%s223 + $0x60] sm:$0xf]
      %v247 = vld [vmem:[%s223 + $0x64] sm:$0xff]
      %v248 = vld [vmem:[%s223 + $0x6c] sm:$0xff]
      %v249 = vld [vmem:[%s223 + $0x74] sm:$0xf]
      %v250 = vld [vmem:[%s223 + $0x78] sm:$0xff]
      %v251 = vld [vmem:[%s223 + $0x80] sm:$0xff]
      %v252 = vld [vmem:[%s223 + $0x88] sm:$0xf]
      %v253 = vld [vmem:[%s223 + $0x8c] sm:$0xff]
      %v254 = vld [vmem:[%s223 + $0x94] sm:$0xff]
      %v255 = vld [vmem:[%s223 + $0x9c] sm:$0xf]
      %v256 = vld [vmem:[%s1] sm:$0xff]
      %v257 = vld [vmem:[%s1 + $0x8] sm:$0xff]
      %v258 = vld [vmem:[%s1 + $0x10] sm:$0xff]
      %v259 = vld [vmem:[%s1 + $0x18] sm:$0xff]
      %v260 = vld [vmem:[%s1 + $0x20] sm:$0xff]
      %v261 = vld [vmem:[%s1 + $0x28] sm:$0xff]
      %v262 = vld [vmem:[%s1 + $0x30] sm:$0xff]
      %v263 = vld [vmem:[%s1 + $0x38] sm:$0xff]
      %v264 = vld [vmem:[%s1 + $0x40] sm:$0xff]
      %v265 = vld [vmem:[%s1 + $0x48] sm:$0xff]
      %v266 = vld [vmem:[%s1 + $0x50] sm:$0xff]
      %v267 = vld [vmem:[%s1 + $0x58] sm:$0xff]
      %v268 = vld [vmem:[%s1 + $0x60] sm:$0xff]
      %v269 = vld [vmem:[%s1 + $0x68] sm:$0xff]
      %v270 = vld [vmem:[%s1 + $0x70] sm:$0xff]
      %v271 = vld [vmem:[%s1 + $0x78] sm:$0xff]
      %v272 = vld [vmem:[%s1 + $0x80] sm:$0xff]
      %v273 = vld [vmem:[%s1 + $0x88] sm:$0xff]
      %v274 = vld [vmem:[%s1 + $0x90] sm:$0xff]
      %v275 = vld [vmem:[%s1 + $0x98] sm:$0xff]
      %v276 = vld [vmem:[%s1 + $0xa0] sm:$0xff]
      %v277 = vld [vmem:[%s1 + $0xa8] sm:$0xff]
      %v278 = vld [vmem:[%s1 + $0xb0] sm:$0xff]
      %v279 = vld [vmem:[%s1 + $0xb8] sm:$0xff]
      %v280 = vld [vmem:[%s1 + $0xc0] sm:$0xff]
      %v281 = vld [vmem:[%s1 + $0xc8] sm:$0xff]
      %v282 = vld [vmem:[%s1 + $0xd0] sm:$0xff]
      %v283 = vld [vmem:[%s1 + $0xd8] sm:$0xff]
      %v284 = vld [vmem:[%s1 + $0xe0] sm:$0xff]
      %v285 = vld [vmem:[%s1 + $0xe8] sm:$0xff]
      %v286 = vld [vmem:[%s1 + $0xf0] sm:$0xff]
      %v287 = vld [vmem:[%s1 + $0xf8] sm:$0xff]
      %v288 = vld [vmem:[%s1 + $0x100] sm:$0xff]
      %v289 = vld [vmem:[%s1 + $0x108] sm:$0xff]
      %v290 = vld [vmem:[%s1 + $0x110] sm:$0xff]
      %v291 = vld [vmem:[%s1 + $0x118] sm:$0xff]
      %v292 = vld [vmem:[%s1 + $0x120] sm:$0xff]
      %v293 = vld [vmem:[%s1 + $0x128] sm:$0xff]
      %v294 = vld [vmem:[%s1 + $0x130] sm:$0xff]
      %v295 = vld [vmem:[%s1 + $0x138] sm:$0xff]
      %v296 = vld [vmem:[%s1 + $0x140] sm:$0xff]
      %v297 = vld [vmem:[%s1 + $0x148] sm:$0xff]
      %v298 = vld [vmem:[%s1 + $0x150] sm:$0xff]
      %v299 = vld [vmem:[%s1 + $0x158] sm:$0xff]
      %v300 = vld [vmem:[%s1 + $0x160] sm:$0xff]
      %v301 = vld [vmem:[%s1 + $0x168] sm:$0xff]
      %v302 = vld [vmem:[%s1 + $0x170] sm:$0xff]
      %v303 = vld [vmem:[%s1 + $0x178] sm:$0xff]
      %v304 = vld [vmem:[%s1 + $0x180] sm:$0xff]
      %v305 = vld [vmem:[%s1 + $0x188] sm:$0xff]
      %v306 = vld [vmem:[%s1 + $0x190] sm:$0xff]
      %v307 = vld [vmem:[%s1 + $0x198] sm:$0xff]
      %v308 = vld [vmem:[%s1 + $0x1a0] sm:$0xff]
      %v309 = vld [vmem:[%s1 + $0x1a8] sm:$0xff]
      %v310 = vld [vmem:[%s1 + $0x1b0] sm:$0xff]
      %v311 = vld [vmem:[%s1 + $0x1b8] sm:$0xff]
      %v312 = vld [vmem:[%s1 + $0x1c0] sm:$0xff]
      %v313 = vld [vmem:[%s1 + $0x1c8] sm:$0xff]
      %v314 = vld [vmem:[%s1 + $0x1d0] sm:$0xff]
      %v315 = vld [vmem:[%s1 + $0x1d8] sm:$0xff]
      %v316 = vld [vmem:[%s1 + $0x1e0] sm:$0xff]
      %v317 = vld [vmem:[%s1 + $0x1e8] sm:$0xff]
      %v318 = vld [vmem:[%s1 + $0x1f0] sm:$0xff]
      %v319 = vld [vmem:[%s1 + $0x1f8] sm:$0xff]
      %v320 = vld [vmem:[%s1 + $0x200] sm:$0xff]
      %v321 = vld [vmem:[%s1 + $0x208] sm:$0xff]
      %v322 = vld [vmem:[%s1 + $0x210] sm:$0xff]
      %v323 = vld [vmem:[%s1 + $0x218] sm:$0xff]
      %v324 = vld [vmem:[%s1 + $0x220] sm:$0xff]
      %v325 = vld [vmem:[%s1 + $0x228] sm:$0xff]
      %v326 = vld [vmem:[%s1 + $0x230] sm:$0xff]
      %v327 = vld [vmem:[%s1 + $0x238] sm:$0xff]
      %v328 = vld [vmem:[%s1 + $0x240] sm:$0xff]
      %v329 = vld [vmem:[%s1 + $0x248] sm:$0xff]
      %v330 = vld [vmem:[%s1 + $0x250] sm:$0xff]
      %v331 = vld [vmem:[%s1 + $0x258] sm:$0xff]
      %v332 = vld [vmem:[%s1 + $0x260] sm:$0xff]
      %v333 = vld [vmem:[%s1 + $0x268] sm:$0xff]
      %v334 = vld [vmem:[%s1 + $0x270] sm:$0xff]
      %v335 = vld [vmem:[%s1 + $0x278] sm:$0xff]
      %v336 = vld [vmem:[%s1 + $0x280] sm:$0xff]
      %v337 = vld [vmem:[%s1 + $0x288] sm:$0xff]
      %v338 = vld [vmem:[%s1 + $0x290] sm:$0xff]
      %v339 = vld [vmem:[%s1 + $0x298] sm:$0xff]
      %v340 = vld [vmem:[%s1 + $0x2a0] sm:$0xff]
      %v341 = vld [vmem:[%s1 + $0x2a8] sm:$0xff]
      %v342 = vld [vmem:[%s1 + $0x2b0] sm:$0xff]
      %v343 = vld [vmem:[%s1 + $0x2b8] sm:$0xff]
      %v344 = vld [vmem:[%s1 + $0x2c0] sm:$0xff]
      %v345 = vld [vmem:[%s1 + $0x2c8] sm:$0xff]
      %v346 = vld [vmem:[%s1 + $0x2d0] sm:$0xff]
      %v347 = vld [vmem:[%s1 + $0x2d8] sm:$0xff]
      %v348 = vld [vmem:[%s1 + $0x2e0] sm:$0xff]
      %v349 = vld [vmem:[%s1 + $0x2e8] sm:$0xff]
      %v350 = vld [vmem:[%s1 + $0x2f0] sm:$0xff]
      %v351 = vld [vmem:[%s1 + $0x2f8] sm:$0xff]
      %v352 = vld [vmem:[%s1 + $0x300] sm:$0xff]
      %v353 = vld [vmem:[%s1 + $0x308] sm:$0xff]
      %v354 = vld [vmem:[%s1 + $0x310] sm:$0xff]
      %v355 = vld [vmem:[%s1 + $0x318] sm:$0xff]
      %v356 = vld [vmem:[%s1 + $0x320] sm:$0xff]
      %v357 = vld [vmem:[%s1 + $0x328] sm:$0xff]
      %v358 = vld [vmem:[%s1 + $0x330] sm:$0xff]
      %v359 = vld [vmem:[%s1 + $0x338] sm:$0xff]
      %v360 = vld [vmem:[%s1 + $0x340] sm:$0xff]
      %v361 = vld [vmem:[%s1 + $0x348] sm:$0xff]
      %v362 = vld [vmem:[%s1 + $0x350] sm:$0xff]
      %v363 = vld [vmem:[%s1 + $0x358] sm:$0xff]
      %v364 = vld [vmem:[%s1 + $0x360] sm:$0xff]
      %v365 = vld [vmem:[%s1 + $0x368] sm:$0xff]
      %v366 = vld [vmem:[%s1 + $0x370] sm:$0xff]
      %v367 = vld [vmem:[%s1 + $0x378] sm:$0xff]
      %v368 = vld [vmem:[%s1 + $0x380] sm:$0xff]
      %v369 = vld [vmem:[%s1 + $0x388] sm:$0xff]
      %v370 = vld [vmem:[%s1 + $0x390] sm:$0xff]
      %v371 = vld [vmem:[%s1 + $0x398] sm:$0xff]
      %v372 = vld [vmem:[%s1 + $0x3a0] sm:$0xff]
      %v373 = vld [vmem:[%s1 + $0x3a8] sm:$0xff]
      %v374 = vld [vmem:[%s1 + $0x3b0] sm:$0xff]
      %v375 = vld [vmem:[%s1 + $0x3b8] sm:$0xff]
      %v376 = vld [vmem:[%s1 + $0x3c0] sm:$0xff]
      %v377 = vld [vmem:[%s1 + $0x3c8] sm:$0xff]
      %v378 = vld [vmem:[%s1 + $0x3d0] sm:$0xff]
      %v379 = vld [vmem:[%s1 + $0x3d8] sm:$0xff]
      %v380 = vld [vmem:[%s1 + $0x3e0] sm:$0xff]
      %v381 = vld [vmem:[%s1 + $0x3e8] sm:$0xff]
      %v382 = vld [vmem:[%s1 + $0x3f0] sm:$0xff]
      %v383 = vld [vmem:[%s1 + $0x3f8] sm:$0xff]
      %v384 = vld [vmem:[%s1 + $0x400] sm:$0xff]
      %v385 = vld [vmem:[%s1 + $0x408] sm:$0xff]
      %v386 = vld [vmem:[%s1 + $0x410] sm:$0xff]
      %v387 = vld [vmem:[%s1 + $0x418] sm:$0xff]
      %v388 = vld [vmem:[%s1 + $0x420] sm:$0xff]
      %v389 = vld [vmem:[%s1 + $0x428] sm:$0xff]
      %v390 = vld [vmem:[%s1 + $0x430] sm:$0xff]
      %v391 = vld [vmem:[%s1 + $0x438] sm:$0xff]
      %v392 = vld [vmem:[%s1 + $0x440] sm:$0xff]
      %v393 = vld [vmem:[%s1 + $0x448] sm:$0xff]
      %v394 = vld [vmem:[%s1 + $0x450] sm:$0xff]
      %v395 = vld [vmem:[%s1 + $0x458] sm:$0xff]
      %v396 = vld [vmem:[%s1 + $0x460] sm:$0xff]
      %v397 = vld [vmem:[%s1 + $0x468] sm:$0xff]
      %v398 = vld [vmem:[%s1 + $0x470] sm:$0xff]
      %v399 = vld [vmem:[%s1 + $0x478] sm:$0xff]
      %v400 = vld [vmem:[%s1 + $0x480] sm:$0xff]
      %v401 = vld [vmem:[%s1 + $0x488] sm:$0xff]
      %v402 = vld [vmem:[%s1 + $0x490] sm:$0xff]
      %v403 = vld [vmem:[%s1 + $0x498] sm:$0xff]
      %v404 = vld [vmem:[%s1 + $0x4a0] sm:$0xff]
      %v405 = vld [vmem:[%s1 + $0x4a8] sm:$0xff]
      %v406 = vld [vmem:[%s1 + $0x4b0] sm:$0xff]
      %v407 = vld [vmem:[%s1 + $0x4b8] sm:$0xff]
      %v408 = vld [vmem:[%s1 + $0x4c0] sm:$0xff]
      %v409 = vld [vmem:[%s1 + $0x4c8] sm:$0xff]
      %v410 = vld [vmem:[%s1 + $0x4d0] sm:$0xff]
      %v411 = vld [vmem:[%s1 + $0x4d8] sm:$0xff]
      %v412 = vld [vmem:[%s1 + $0x4e0] sm:$0xff]
      %v413 = vld [vmem:[%s1 + $0x4e8] sm:$0xff]
      %v414 = vld [vmem:[%s1 + $0x4f0] sm:$0xff]
      %v415 = vld [vmem:[%s1 + $0x4f8] sm:$0xff]
      %v416 = vld [vmem:[%s1 + $0x500] sm:$0xff]
      %v417 = vld [vmem:[%s1 + $0x508] sm:$0xff]
      %v418 = vld [vmem:[%s1 + $0x510] sm:$0xff]
      %v419 = vld [vmem:[%s1 + $0x518] sm:$0xff]
      %v420 = vld [vmem:[%s1 + $0x520] sm:$0xff]
      %v421 = vld [vmem:[%s1 + $0x528] sm:$0xff]
      %v422 = vld [vmem:[%s1 + $0x530] sm:$0xff]
      %v423 = vld [vmem:[%s1 + $0x538] sm:$0xff]
      %v424 = vld [vmem:[%s1 + $0x540] sm:$0xff]
      %v425 = vld [vmem:[%s1 + $0x548] sm:$0xff]
      %v426 = vld [vmem:[%s1 + $0x550] sm:$0xff]
      %v427 = vld [vmem:[%s1 + $0x558] sm:$0xff]
      %v428 = vld [vmem:[%s1 + $0x560] sm:$0xff]
      %v429 = vld [vmem:[%s1 + $0x568] sm:$0xff]
      %v430 = vld [vmem:[%s1 + $0x570] sm:$0xff]
      %v431 = vld [vmem:[%s1 + $0x578] sm:$0xff]
      %v432 = vld [vmem:[%s1 + $0x580] sm:$0xff]
      %v433 = vld [vmem:[%s1 + $0x588] sm:$0xff]
      %v434 = vld [vmem:[%s1 + $0x590] sm:$0xff]
      %v435 = vld [vmem:[%s1 + $0x598] sm:$0xff]
      %v436 = vld [vmem:[%s1 + $0x5a0] sm:$0xff]
      %v437 = vld [vmem:[%s1 + $0x5a8] sm:$0xff]
      %v438 = vld [vmem:[%s1 + $0x5b0] sm:$0xff]
      %v439 = vld [vmem:[%s1 + $0x5b8] sm:$0xff]
      %v440 = vld [vmem:[%s1 + $0x5c0] sm:$0xff]
      %v441 = vld [vmem:[%s1 + $0x5c8] sm:$0xff]
      %v442 = vld [vmem:[%s1 + $0x5d0] sm:$0xff]
      %v443 = vld [vmem:[%s1 + $0x5d8] sm:$0xff]
      %v444 = vld [vmem:[%s1 + $0x5e0] sm:$0xff]
      %v445 = vld [vmem:[%s1 + $0x5e8] sm:$0xff]
      %v446 = vld [vmem:[%s1 + $0x5f0] sm:$0xff]
      %v447 = vld [vmem:[%s1 + $0x5f8] sm:$0xff]
      %v448 = vld [vmem:[%s1 + $0x600] sm:$0xff]
      %v449 = vld [vmem:[%s1 + $0x608] sm:$0xff]
      %v450 = vld [vmem:[%s1 + $0x610] sm:$0xff]
      %v451 = vld [vmem:[%s1 + $0x618] sm:$0xff]
      %v452 = vld [vmem:[%s1 + $0x620] sm:$0xff]
      %v453 = vld [vmem:[%s1 + $0x628] sm:$0xff]
      %v454 = vld [vmem:[%s1 + $0x630] sm:$0xff]
      %v455 = vld [vmem:[%s1 + $0x638] sm:$0xff]
      %v456 = vld [vmem:[%s1 + $0x640] sm:$0xff]
      %v457 = vld [vmem:[%s1 + $0x648] sm:$0xff]
      %v458 = vld [vmem:[%s1 + $0x650] sm:$0xff]
      %v459 = vld [vmem:[%s1 + $0x658] sm:$0xff]
      %v460 = vld [vmem:[%s1 + $0x660] sm:$0xff]
      %v461 = vld [vmem:[%s1 + $0x668] sm:$0xff]
      %v462 = vld [vmem:[%s1 + $0x670] sm:$0xff]
      %v463 = vld [vmem:[%s1 + $0x678] sm:$0xff]
      %v464 = vld [vmem:[%s1 + $0x680] sm:$0xff]
      %v465 = vld [vmem:[%s1 + $0x688] sm:$0xff]
      %v466 = vld [vmem:[%s1 + $0x690] sm:$0xff]
      %v467 = vld [vmem:[%s1 + $0x698] sm:$0xff]
      %v468 = vld [vmem:[%s1 + $0x6a0] sm:$0xff]
      %v469 = vld [vmem:[%s1 + $0x6a8] sm:$0xff]
      %v470 = vld [vmem:[%s1 + $0x6b0] sm:$0xff]
      %v471 = vld [vmem:[%s1 + $0x6b8] sm:$0xff]
      %v472 = vld [vmem:[%s1 + $0x6c0] sm:$0xff]
      %v473 = vld [vmem:[%s1 + $0x6c8] sm:$0xff]
      %v474 = vld [vmem:[%s1 + $0x6d0] sm:$0xff]
      %v475 = vld [vmem:[%s1 + $0x6d8] sm:$0xff]
      %v476 = vld [vmem:[%s1 + $0x6e0] sm:$0xff]
      %v477 = vld [vmem:[%s1 + $0x6e8] sm:$0xff]
      %v478 = vld [vmem:[%s1 + $0x6f0] sm:$0xff]
      %v479 = vld [vmem:[%s1 + $0x6f8] sm:$0xff]
      %v480 = vld [vmem:[%s1 + $0x700] sm:$0xff]
      %v481 = vld [vmem:[%s1 + $0x708] sm:$0xff]
      %v482 = vld [vmem:[%s1 + $0x710] sm:$0xff]
      %v483 = vld [vmem:[%s1 + $0x718] sm:$0xff]
      %v484 = vld [vmem:[%s1 + $0x720] sm:$0xff]
      %v485 = vld [vmem:[%s1 + $0x728] sm:$0xff]
      %v486 = vld [vmem:[%s1 + $0x730] sm:$0xff]
      %v487 = vld [vmem:[%s1 + $0x738] sm:$0xff]
      %v488 = vld [vmem:[%s1 + $0x740] sm:$0xff]
      %v489 = vld [vmem:[%s1 + $0x748] sm:$0xff]
      %v490 = vld [vmem:[%s1 + $0x750] sm:$0xff]
      %v491 = vld [vmem:[%s1 + $0x758] sm:$0xff]
      %v492 = vld [vmem:[%s1 + $0x760] sm:$0xff]
      %v493 = vld [vmem:[%s1 + $0x768] sm:$0xff]
      %v494 = vld [vmem:[%s1 + $0x770] sm:$0xff]
      %v495 = vld [vmem:[%s1 + $0x778] sm:$0xff]
      %v496 = vld [vmem:[%s1 + $0x780] sm:$0xff]
      %v497 = vld [vmem:[%s1 + $0x788] sm:$0xff]
      %v498 = vld [vmem:[%s1 + $0x790] sm:$0xff]
      %v499 = vld [vmem:[%s1 + $0x798] sm:$0xff]
      %v500 = vld [vmem:[%s1 + $0x7a0] sm:$0xff]
      %v501 = vld [vmem:[%s1 + $0x7a8] sm:$0xff]
      %v502 = vld [vmem:[%s1 + $0x7b0] sm:$0xff]
      %v503 = vld [vmem:[%s1 + $0x7b8] sm:$0xff]
      %v504 = vld [vmem:[%s1 + $0x7c0] sm:$0xff]
      %v505 = vld [vmem:[%s1 + $0x7c8] sm:$0xff]
      %v506 = vld [vmem:[%s1 + $0x7d0] sm:$0xff]
      %v507 = vld [vmem:[%s1 + $0x7d8] sm:$0xff]
      %v508 = vld [vmem:[%s1 + $0x7e0] sm:$0xff]
      %v509 = vld [vmem:[%s1 + $0x7e8] sm:$0xff]
      %v510 = vld [vmem:[%s1 + $0x7f0] sm:$0xff]
      %v511 = vld [vmem:[%s1 + $0x7f8] sm:$0xff]
      %v512 = vld [vmem:[%s1 + $0x800] sm:$0xff]
      %v513 = vld [vmem:[%s1 + $0x808] sm:$0xff]
      %v514 = vld [vmem:[%s1 + $0x810] sm:$0xff]
      %v515 = vld [vmem:[%s1 + $0x818] sm:$0xff]
      %v516 = vld [vmem:[%s1 + $0x820] sm:$0xff]
      %v517 = vld [vmem:[%s1 + $0x828] sm:$0xff]
      %v518 = vld [vmem:[%s1 + $0x830] sm:$0xff]
      %v519 = vld [vmem:[%s1 + $0x838] sm:$0xff]
      %v520 = vld [vmem:[%s1 + $0x840] sm:$0xff]
      %v521 = vld [vmem:[%s1 + $0x848] sm:$0xff]
      %v522 = vld [vmem:[%s1 + $0x850] sm:$0xff]
      %v523 = vld [vmem:[%s1 + $0x858] sm:$0xff]
      %v524 = vld [vmem:[%s1 + $0x860] sm:$0xff]
      %v525 = vld [vmem:[%s1 + $0x868] sm:$0xff]
      %v526 = vld [vmem:[%s1 + $0x870] sm:$0xff]
      %v527 = vld [vmem:[%s1 + $0x878] sm:$0xff]
      %v528 = vld [vmem:[%s1 + $0x880] sm:$0xff]
      %v529 = vld [vmem:[%s1 + $0x888] sm:$0xff]
      %v530 = vld [vmem:[%s1 + $0x890] sm:$0xff]
      %v531 = vld [vmem:[%s1 + $0x898] sm:$0xff]
      %v532 = vld [vmem:[%s1 + $0x8a0] sm:$0xff]
      %v533 = vld [vmem:[%s1 + $0x8a8] sm:$0xff]
      %v534 = vld [vmem:[%s1 + $0x8b0] sm:$0xff]
      %v535 = vld [vmem:[%s1 + $0x8b8] sm:$0xff]
      %v536 = vld [vmem:[%s1 + $0x8c0] sm:$0xff]
      %v537 = vld [vmem:[%s1 + $0x8c8] sm:$0xff]
      %v538 = vld [vmem:[%s1 + $0x8d0] sm:$0xff]
      %v539 = vld [vmem:[%s1 + $0x8d8] sm:$0xff]
      %v540 = vld [vmem:[%s1 + $0x8e0] sm:$0xff]
      %v541 = vld [vmem:[%s1 + $0x8e8] sm:$0xff]
      %v542 = vld [vmem:[%s1 + $0x8f0] sm:$0xff]
      %v543 = vld [vmem:[%s1 + $0x8f8] sm:$0xff]
      %v544 = vld [vmem:[%s1 + $0x900] sm:$0xff]
      %v545 = vld [vmem:[%s1 + $0x908] sm:$0xff]
      %v546 = vld [vmem:[%s1 + $0x910] sm:$0xff]
      %v547 = vld [vmem:[%s1 + $0x918] sm:$0xff]
      %v548 = vld [vmem:[%s1 + $0x920] sm:$0xff]
      %v549 = vld [vmem:[%s1 + $0x928] sm:$0xff]
      %v550 = vld [vmem:[%s1 + $0x930] sm:$0xff]
      %v551 = vld [vmem:[%s1 + $0x938] sm:$0xff]
      %v552 = vld [vmem:[%s1 + $0x940] sm:$0xff]
      %v553 = vld [vmem:[%s1 + $0x948] sm:$0xff]
      %v554 = vld [vmem:[%s1 + $0x950] sm:$0xff]
      %v555 = vld [vmem:[%s1 + $0x958] sm:$0xff]
      %v556 = vld [vmem:[%s1 + $0x960] sm:$0xff]
      %v557 = vld [vmem:[%s1 + $0x968] sm:$0xff]
      %v558 = vld [vmem:[%s1 + $0x970] sm:$0xff]
      %v559 = vld [vmem:[%s1 + $0x978] sm:$0xff]
      %v560 = vld [vmem:[%s1 + $0x980] sm:$0xff]
      %v561 = vld [vmem:[%s1 + $0x988] sm:$0xff]
      %v562 = vld [vmem:[%s1 + $0x990] sm:$0xff]
      %v563 = vld [vmem:[%s1 + $0x998] sm:$0xff]
      %v564 = vld [vmem:[%s1 + $0x9a0] sm:$0xff]
      %v565 = vld [vmem:[%s1 + $0x9a8] sm:$0xff]
      %v566 = vld [vmem:[%s1 + $0x9b0] sm:$0xff]
      %v567 = vld [vmem:[%s1 + $0x9b8] sm:$0xff]
      %v568 = vld [vmem:[%s1 + $0x9c0] sm:$0xff]
      %v569 = vld [vmem:[%s1 + $0x9c8] sm:$0xff]
      %v570 = vld [vmem:[%s1 + $0x9d0] sm:$0xff]
      %v571 = vld [vmem:[%s1 + $0x9d8] sm:$0xff]
      %v572 = vld [vmem:[%s1 + $0x9e0] sm:$0xff]
      %v573 = vld [vmem:[%s1 + $0x9e8] sm:$0xff]
      %v574 = vld [vmem:[%s1 + $0x9f0] sm:$0xff]
      %v575 = vld [vmem:[%s1 + $0x9f8] sm:$0xff]
      %v576 = vld [vmem:[%s1 + $0xa00] sm:$0xff]
      %v577 = vld [vmem:[%s1 + $0xa08] sm:$0xff]
      %v578 = vld [vmem:[%s1 + $0xa10] sm:$0xff]
      %v579 = vld [vmem:[%s1 + $0xa18] sm:$0xff]
      %v580 = vld [vmem:[%s1 + $0xa20] sm:$0xff]
      %v581 = vld [vmem:[%s1 + $0xa28] sm:$0xff]
      %v582 = vld [vmem:[%s1 + $0xa30] sm:$0xff]
      %v583 = vld [vmem:[%s1 + $0xa38] sm:$0xff]
      %v584 = vld [vmem:[%s1 + $0xa40] sm:$0xff]
      %v585 = vld [vmem:[%s1 + $0xa48] sm:$0xff]
      %v586 = vld [vmem:[%s1 + $0xa50] sm:$0xff]
      %v587 = vld [vmem:[%s1 + $0xa58] sm:$0xff]
      %v588 = vld [vmem:[%s1 + $0xa60] sm:$0xff]
      %v589 = vld [vmem:[%s1 + $0xa68] sm:$0xff]
      %v590 = vld [vmem:[%s1 + $0xa70] sm:$0xff]
      %v591 = vld [vmem:[%s1 + $0xa78] sm:$0xff]
      %v592 = vld [vmem:[%s1 + $0xa80] sm:$0xff]
      %v593 = vld [vmem:[%s1 + $0xa88] sm:$0xff]
      %v594 = vld [vmem:[%s1 + $0xa90] sm:$0xff]
      %v595 = vld [vmem:[%s1 + $0xa98] sm:$0xff]
      %v596 = vld [vmem:[%s1 + $0xaa0] sm:$0xff]
      %v597 = vld [vmem:[%s1 + $0xaa8] sm:$0xff]
      %v598 = vld [vmem:[%s1 + $0xab0] sm:$0xff]
      %v599 = vld [vmem:[%s1 + $0xab8] sm:$0xff]
      %v600 = vld [vmem:[%s1 + $0xac0] sm:$0xff]
      %v601 = vld [vmem:[%s1 + $0xac8] sm:$0xff]
      %v602 = vld [vmem:[%s1 + $0xad0] sm:$0xff]
      %v603 = vld [vmem:[%s1 + $0xad8] sm:$0xff]
      %v604 = vld [vmem:[%s1 + $0xae0] sm:$0xff]
      %v605 = vld [vmem:[%s1 + $0xae8] sm:$0xff]
      %v606 = vld [vmem:[%s1 + $0xaf0] sm:$0xff]
      %v607 = vld [vmem:[%s1 + $0xaf8] sm:$0xff]
      %v608 = vld [vmem:[%s1 + $0xb00] sm:$0xff]
      %v609 = vld [vmem:[%s1 + $0xb08] sm:$0xff]
      %v610 = vld [vmem:[%s1 + $0xb10] sm:$0xff]
      %v611 = vld [vmem:[%s1 + $0xb18] sm:$0xff]
      %v612 = vld [vmem:[%s1 + $0xb20] sm:$0xff]
      %v613 = vld [vmem:[%s1 + $0xb28] sm:$0xff]
      %v614 = vld [vmem:[%s1 + $0xb30] sm:$0xff]
      %v615 = vld [vmem:[%s1 + $0xb38] sm:$0xff]
      %v616 = vld [vmem:[%s2] sm:$0xff]
      %v617 = vld [vmem:[%s2 + $0x8] sm:$0x3]
      %v620 = vlaneseq
      %v621 = vshrl.u32 %v620, 7
      %v622 = vsub.s32 0, %v621
      %v623 = vrot.slane %v616, %v622
      %v624 = vlaneseq
      %v625 = vshrl.u32 %v624, 7
      %v626 = vsub.s32 1, %v625
      %v627 = vrot.slane %v616, %v626
      %v628 = vlaneseq
      %v629 = vshrl.u32 %v628, 7
      %v630 = vsub.s32 2, %v629
      %v631 = vrot.slane %v616, %v630
      %v632 = vlaneseq
      %v633 = vshrl.u32 %v632, 7
      %v634 = vsub.s32 3, %v633
      %v635 = vrot.slane %v616, %v634
      %v636 = vlaneseq
      %v637 = vshrl.u32 %v636, 7
      %v638 = vsub.s32 4, %v637
      %v639 = vrot.slane %v616, %v638
      %v640 = vlaneseq
      %v641 = vshrl.u32 %v640, 7
      %v642 = vsub.s32 5, %v641
      %v643 = vrot.slane %v616, %v642
      %v644 = vlaneseq
      %v645 = vshrl.u32 %v644, 7
      %v646 = vsub.s32 6, %v645
      %v647 = vrot.slane %v616, %v646
      %v648 = vlaneseq
      %v649 = vshrl.u32 %v648, 7
      %v650 = vsub.s32 7, %v649
      %v651 = vrot.slane %v616, %v650
      %v652 = vlaneseq
      %v653 = vshrl.u32 %v652, 7
      %v654 = vsub.s32 0, %v653
      %v655 = vrot.slane %v617, %v654
      %v656 = vlaneseq
      %v657 = vshrl.u32 %v656, 7
      %v658 = vsub.s32 1, %v657
      %v659 = vrot.slane %v617, %v658
      %v694 = vunpack.c.l.b16 %v232
      %v695 = vunpack.c.h.b16 %v232
      %v696 = vunpack.c.l.b16 %v233
      %v697 = vunpack.c.h.b16 %v233
      %v698 = vunpack.c.l.b16 %v234
      %v699 = vunpack.c.l.b16 %v235
      %v700 = vunpack.c.h.b16 %v235
      %v701 = vunpack.c.l.b16 %v236
      %v702 = vunpack.c.h.b16 %v236
      %v703 = vunpack.c.l.b16 %v237
      %v704 = vunpack.c.l.b16 %v238
      %v705 = vunpack.c.h.b16 %v238
      %v706 = vunpack.c.l.b16 %v239
      %v707 = vunpack.c.h.b16 %v239
      %v708 = vunpack.c.l.b16 %v240
      %v709 = vunpack.c.l.b16 %v241
      %v710 = vunpack.c.h.b16 %v241
      %v711 = vunpack.c.l.b16 %v242
      %v712 = vunpack.c.h.b16 %v242
      %v713 = vunpack.c.l.b16 %v243
      %v714 = vunpack.c.l.b16 %v244
      %v715 = vunpack.c.h.b16 %v244
      %v716 = vunpack.c.l.b16 %v245
      %v717 = vunpack.c.h.b16 %v245
      %v718 = vunpack.c.l.b16 %v246
      %v719 = vunpack.c.l.b16 %v247
      %v720 = vunpack.c.h.b16 %v247
      %v721 = vunpack.c.l.b16 %v248
      %v722 = vunpack.c.h.b16 %v248
      %v723 = vunpack.c.l.b16 %v249
      %v724 = vunpack.c.l.b16 %v250
      %v725 = vunpack.c.h.b16 %v250
      %v726 = vunpack.c.l.b16 %v251
      %v727 = vunpack.c.h.b16 %v251
      %v728 = vunpack.c.l.b16 %v252
      %v729 = vunpack.c.l.b16 %v253
      %v730 = vunpack.c.h.b16 %v253
      %v731 = vunpack.c.l.b16 %v254
      %v732 = vunpack.c.h.b16 %v254
      %v733 = vunpack.c.l.b16 %v255
      %v734 = vpack.c.b16 %v699, %v694
      %v735 = vpack.c.b16 %v700, %v695
      %v736 = vpack.c.b16 %v701, %v696
      %v737 = vpack.c.b16 %v702, %v697
      %v738 = vpack.c.b16 %v703, %v698
      %v739 = vpack.c.b16 %v709, %v704
      %v740 = vpack.c.b16 %v710, %v705
      %v741 = vpack.c.b16 %v711, %v706
      %v742 = vpack.c.b16 %v712, %v707
      %v743 = vpack.c.b16 %v713, %v708
      %v744 = vpack.c.b16 %v719, %v714
      %v745 = vpack.c.b16 %v720, %v715
      %v746 = vpack.c.b16 %v721, %v716
      %v747 = vpack.c.b16 %v722, %v717
      %v748 = vpack.c.b16 %v723, %v718
      %v749 = vpack.c.b16 %v729, %v724
      %v750 = vpack.c.b16 %v730, %v725
      %v751 = vpack.c.b16 %v731, %v726
      %v752 = vpack.c.b16 %v732, %v727
      %v753 = vpack.c.b16 %v733, %v728
      %v1130 = vunpack.c.l.b16 %v256
      %v1131 = vunpack.c.h.b16 %v256
      %v1132 = vunpack.c.l.b16 %v257
      %v1133 = vunpack.c.h.b16 %v257
      %v1134 = vunpack.c.l.b16 %v258
      %v1135 = vunpack.c.h.b16 %v258
      %v1136 = vunpack.c.l.b16 %v259
      %v1137 = vunpack.c.h.b16 %v259
      %v1138 = vunpack.c.l.b16 %v260
      %v1139 = vunpack.c.h.b16 %v260
      %v1140 = vunpack.c.l.b16 %v261
      %v1141 = vunpack.c.h.b16 %v261
      %v1142 = vunpack.c.l.b16 %v262
      %v1143 = vunpack.c.h.b16 %v262
      %v1144 = vunpack.c.l.b16 %v263
      %v1145 = vunpack.c.h.b16 %v263
      %v1146 = vunpack.c.l.b16 %v264
      %v1147 = vunpack.c.h.b16 %v264
      %v1148 = vunpack.c.l.b16 %v265
      %v1149 = vunpack.c.h.b16 %v265
      %v1150 = vunpack.c.l.b16 %v266
      %v1151 = vunpack.c.h.b16 %v266
      %v1152 = vunpack.c.l.b16 %v267
      %v1153 = vunpack.c.h.b16 %v267
      %v1154 = vunpack.c.l.b16 %v268
      %v1155 = vunpack.c.h.b16 %v268
      %v1156 = vunpack.c.l.b16 %v269
      %v1157 = vunpack.c.h.b16 %v269
      %v1158 = vunpack.c.l.b16 %v270
      %v1159 = vunpack.c.h.b16 %v270
      %v1160 = vunpack.c.l.b16 %v271
      %v1161 = vunpack.c.h.b16 %v271
      %v1162 = vunpack.c.l.b16 %v272
      %v1163 = vunpack.c.h.b16 %v272
      %v1164 = vunpack.c.l.b16 %v273
      %v1165 = vunpack.c.h.b16 %v273
      %v1166 = vunpack.c.l.b16 %v274
      %v1167 = vunpack.c.h.b16 %v274
      %v1168 = vunpack.c.l.b16 %v275
      %v1169 = vunpack.c.h.b16 %v275
      %v1170 = vunpack.c.l.b16 %v276
      %v1171 = vunpack.c.h.b16 %v276
      %v1172 = vunpack.c.l.b16 %v277
      %v1173 = vunpack.c.h.b16 %v277
      %v1174 = vunpack.c.l.b16 %v278
      %v1175 = vunpack.c.h.b16 %v278
      %v1176 = vunpack.c.l.b16 %v279
      %v1177 = vunpack.c.h.b16 %v279
      %v1178 = vunpack.c.l.b16 %v280
      %v1179 = vunpack.c.h.b16 %v280
      %v1180 = vunpack.c.l.b16 %v281
      %v1181 = vunpack.c.h.b16 %v281
      %v1182 = vunpack.c.l.b16 %v282
      %v1183 = vunpack.c.h.b16 %v282
      %v1184 = vunpack.c.l.b16 %v283
      %v1185 = vunpack.c.h.b16 %v283
      %v1186 = vunpack.c.l.b16 %v284
      %v1187 = vunpack.c.h.b16 %v284
      %v1188 = vunpack.c.l.b16 %v285
      %v1189 = vunpack.c.h.b16 %v285
      %v1190 = vunpack.c.l.b16 %v286
      %v1191 = vunpack.c.h.b16 %v286
      %v1192 = vunpack.c.l.b16 %v287
      %v1193 = vunpack.c.h.b16 %v287
      %v1194 = vunpack.c.l.b16 %v288
      %v1195 = vunpack.c.h.b16 %v288
      %v1196 = vunpack.c.l.b16 %v289
      %v1197 = vunpack.c.h.b16 %v289
      %v1198 = vunpack.c.l.b16 %v290
      %v1199 = vunpack.c.h.b16 %v290
      %v1200 = vunpack.c.l.b16 %v291
      %v1201 = vunpack.c.h.b16 %v291
      %v1202 = vunpack.c.l.b16 %v292
      %v1203 = vunpack.c.h.b16 %v292
      %v1204 = vunpack.c.l.b16 %v293
      %v1205 = vunpack.c.h.b16 %v293
      %v1206 = vunpack.c.l.b16 %v294
      %v1207 = vunpack.c.h.b16 %v294
      %v1208 = vunpack.c.l.b16 %v295
      %v1209 = vunpack.c.h.b16 %v295
      %v1210 = vunpack.c.l.b16 %v296
      %v1211 = vunpack.c.h.b16 %v296
      %v1212 = vunpack.c.l.b16 %v297
      %v1213 = vunpack.c.h.b16 %v297
      %v1214 = vunpack.c.l.b16 %v298
      %v1215 = vunpack.c.h.b16 %v298
      %v1216 = vunpack.c.l.b16 %v299
      %v1217 = vunpack.c.h.b16 %v299
      %v1218 = vunpack.c.l.b16 %v300
      %v1219 = vunpack.c.h.b16 %v300
      %v1220 = vunpack.c.l.b16 %v301
      %v1221 = vunpack.c.h.b16 %v301
      %v1222 = vunpack.c.l.b16 %v302
      %v1223 = vunpack.c.h.b16 %v302
      %v1224 = vunpack.c.l.b16 %v303
      %v1225 = vunpack.c.h.b16 %v303
      %v1226 = vunpack.c.l.b16 %v304
      %v1227 = vunpack.c.h.b16 %v304
      %v1228 = vunpack.c.l.b16 %v305
      %v1229 = vunpack.c.h.b16 %v305
      %v1230 = vunpack.c.l.b16 %v306
      %v1231 = vunpack.c.h.b16 %v306
      %v1232 = vunpack.c.l.b16 %v307
      %v1233 = vunpack.c.h.b16 %v307
      %v1234 = vunpack.c.l.b16 %v308
      %v1235 = vunpack.c.h.b16 %v308
      %v1236 = vunpack.c.l.b16 %v309
      %v1237 = vunpack.c.h.b16 %v309
      %v1238 = vunpack.c.l.b16 %v310
      %v1239 = vunpack.c.h.b16 %v310
      %v1240 = vunpack.c.l.b16 %v311
      %v1241 = vunpack.c.h.b16 %v311
      %v1242 = vunpack.c.l.b16 %v312
      %v1243 = vunpack.c.h.b16 %v312
      %v1244 = vunpack.c.l.b16 %v313
      %v1245 = vunpack.c.h.b16 %v313
      %v1246 = vunpack.c.l.b16 %v314
      %v1247 = vunpack.c.h.b16 %v314
      %v1248 = vunpack.c.l.b16 %v315
      %v1249 = vunpack.c.h.b16 %v315
      %v1250 = vunpack.c.l.b16 %v316
      %v1251 = vunpack.c.h.b16 %v316
      %v1252 = vunpack.c.l.b16 %v317
      %v1253 = vunpack.c.h.b16 %v317
      %v1254 = vunpack.c.l.b16 %v318
      %v1255 = vunpack.c.h.b16 %v318
      %v1256 = vunpack.c.l.b16 %v319
      %v1257 = vunpack.c.h.b16 %v319
      %v1258 = vunpack.c.l.b16 %v320
      %v1259 = vunpack.c.h.b16 %v320
      %v1260 = vunpack.c.l.b16 %v321
      %v1261 = vunpack.c.h.b16 %v321
      %v1262 = vunpack.c.l.b16 %v322
      %v1263 = vunpack.c.h.b16 %v322
      %v1264 = vunpack.c.l.b16 %v323
      %v1265 = vunpack.c.h.b16 %v323
      %v1266 = vunpack.c.l.b16 %v324
      %v1267 = vunpack.c.h.b16 %v324
      %v1268 = vunpack.c.l.b16 %v325
      %v1269 = vunpack.c.h.b16 %v325
      %v1270 = vunpack.c.l.b16 %v326
      %v1271 = vunpack.c.h.b16 %v326
      %v1272 = vunpack.c.l.b16 %v327
      %v1273 = vunpack.c.h.b16 %v327
      %v1274 = vunpack.c.l.b16 %v328
      %v1275 = vunpack.c.h.b16 %v328
      %v1276 = vunpack.c.l.b16 %v329
      %v1277 = vunpack.c.h.b16 %v329
      %v1278 = vunpack.c.l.b16 %v330
      %v1279 = vunpack.c.h.b16 %v330
      %v1280 = vunpack.c.l.b16 %v331
      %v1281 = vunpack.c.h.b16 %v331
      %v1282 = vunpack.c.l.b16 %v332
      %v1283 = vunpack.c.h.b16 %v332
      %v1284 = vunpack.c.l.b16 %v333
      %v1285 = vunpack.c.h.b16 %v333
      %v1286 = vunpack.c.l.b16 %v334
      %v1287 = vunpack.c.h.b16 %v334
      %v1288 = vunpack.c.l.b16 %v335
      %v1289 = vunpack.c.h.b16 %v335
      %v1290 = vunpack.c.l.b16 %v336
      %v1291 = vunpack.c.h.b16 %v336
      %v1292 = vunpack.c.l.b16 %v337
      %v1293 = vunpack.c.h.b16 %v337
      %v1294 = vunpack.c.l.b16 %v338
      %v1295 = vunpack.c.h.b16 %v338
      %v1296 = vunpack.c.l.b16 %v339
      %v1297 = vunpack.c.h.b16 %v339
      %v1298 = vunpack.c.l.b16 %v340
      %v1299 = vunpack.c.h.b16 %v340
      %v1300 = vunpack.c.l.b16 %v341
      %v1301 = vunpack.c.h.b16 %v341
      %v1302 = vunpack.c.l.b16 %v342
      %v1303 = vunpack.c.h.b16 %v342
      %v1304 = vunpack.c.l.b16 %v343
      %v1305 = vunpack.c.h.b16 %v343
      %v1306 = vunpack.c.l.b16 %v344
      %v1307 = vunpack.c.h.b16 %v344
      %v1308 = vunpack.c.l.b16 %v345
      %v1309 = vunpack.c.h.b16 %v345
      %v1310 = vunpack.c.l.b16 %v346
      %v1311 = vunpack.c.h.b16 %v346
      %v1312 = vunpack.c.l.b16 %v347
      %v1313 = vunpack.c.h.b16 %v347
      %v1314 = vunpack.c.l.b16 %v348
      %v1315 = vunpack.c.h.b16 %v348
      %v1316 = vunpack.c.l.b16 %v349
      %v1317 = vunpack.c.h.b16 %v349
      %v1318 = vunpack.c.l.b16 %v350
      %v1319 = vunpack.c.h.b16 %v350
      %v1320 = vunpack.c.l.b16 %v351
      %v1321 = vunpack.c.h.b16 %v351
      %v1322 = vunpack.c.l.b16 %v352
      %v1323 = vunpack.c.h.b16 %v352
      %v1324 = vunpack.c.l.b16 %v353
      %v1325 = vunpack.c.h.b16 %v353
      %v1326 = vunpack.c.l.b16 %v354
      %v1327 = vunpack.c.h.b16 %v354
      %v1328 = vunpack.c.l.b16 %v355
      %v1329 = vunpack.c.h.b16 %v355
      %v1330 = vunpack.c.l.b16 %v356
      %v1331 = vunpack.c.h.b16 %v356
      %v1332 = vunpack.c.l.b16 %v357
      %v1333 = vunpack.c.h.b16 %v357
      %v1334 = vunpack.c.l.b16 %v358
      %v1335 = vunpack.c.h.b16 %v358
      %v1336 = vunpack.c.l.b16 %v359
      %v1337 = vunpack.c.h.b16 %v359
      %v1338 = vunpack.c.l.b16 %v360
      %v1339 = vunpack.c.h.b16 %v360
      %v1340 = vunpack.c.l.b16 %v361
      %v1341 = vunpack.c.h.b16 %v361
      %v1342 = vunpack.c.l.b16 %v362
      %v1343 = vunpack.c.h.b16 %v362
      %v1344 = vunpack.c.l.b16 %v363
      %v1345 = vunpack.c.h.b16 %v363
      %v1346 = vunpack.c.l.b16 %v364
      %v1347 = vunpack.c.h.b16 %v364
      %v1348 = vunpack.c.l.b16 %v365
      %v1349 = vunpack.c.h.b16 %v365
      %v1350 = vunpack.c.l.b16 %v366
      %v1351 = vunpack.c.h.b16 %v366
      %v1352 = vunpack.c.l.b16 %v367
      %v1353 = vunpack.c.h.b16 %v367
      %v1354 = vunpack.c.l.b16 %v368
      %v1355 = vunpack.c.h.b16 %v368
      %v1356 = vunpack.c.l.b16 %v369
      %v1357 = vunpack.c.h.b16 %v369
      %v1358 = vunpack.c.l.b16 %v370
      %v1359 = vunpack.c.h.b16 %v370
      %v1360 = vunpack.c.l.b16 %v371
      %v1361 = vunpack.c.h.b16 %v371
      %v1362 = vunpack.c.l.b16 %v372
      %v1363 = vunpack.c.h.b16 %v372
      %v1364 = vunpack.c.l.b16 %v373
      %v1365 = vunpack.c.h.b16 %v373
      %v1366 = vunpack.c.l.b16 %v374
      %v1367 = vunpack.c.h.b16 %v374
      %v1368 = vunpack.c.l.b16 %v375
      %v1369 = vunpack.c.h.b16 %v375
      %v1370 = vunpack.c.l.b16 %v376
      %v1371 = vunpack.c.h.b16 %v376
      %v1372 = vunpack.c.l.b16 %v377
      %v1373 = vunpack.c.h.b16 %v377
      %v1374 = vunpack.c.l.b16 %v378
      %v1375 = vunpack.c.h.b16 %v378
      %v1376 = vunpack.c.l.b16 %v379
      %v1377 = vunpack.c.h.b16 %v379
      %v1378 = vunpack.c.l.b16 %v380
      %v1379 = vunpack.c.h.b16 %v380
      %v1380 = vunpack.c.l.b16 %v381
      %v1381 = vunpack.c.h.b16 %v381
      %v1382 = vunpack.c.l.b16 %v382
      %v1383 = vunpack.c.h.b16 %v382
      %v1384 = vunpack.c.l.b16 %v383
      %v1385 = vunpack.c.h.b16 %v383
      %v1386 = vunpack.c.l.b16 %v384
      %v1387 = vunpack.c.h.b16 %v384
      %v1388 = vunpack.c.l.b16 %v385
      %v1389 = vunpack.c.h.b16 %v385
      %v1390 = vunpack.c.l.b16 %v386
      %v1391 = vunpack.c.h.b16 %v386
      %v1392 = vunpack.c.l.b16 %v387
      %v1393 = vunpack.c.h.b16 %v387
      %v1394 = vunpack.c.l.b16 %v388
      %v1395 = vunpack.c.h.b16 %v388
      %v1396 = vunpack.c.l.b16 %v389
      %v1397 = vunpack.c.h.b16 %v389
      %v1398 = vunpack.c.l.b16 %v390
      %v1399 = vunpack.c.h.b16 %v390
      %v1400 = vunpack.c.l.b16 %v391
      %v1401 = vunpack.c.h.b16 %v391
      %v1402 = vunpack.c.l.b16 %v392
      %v1403 = vunpack.c.h.b16 %v392
      %v1404 = vunpack.c.l.b16 %v393
      %v1405 = vunpack.c.h.b16 %v393
      %v1406 = vunpack.c.l.b16 %v394
      %v1407 = vunpack.c.h.b16 %v394
      %v1408 = vunpack.c.l.b16 %v395
      %v1409 = vunpack.c.h.b16 %v395
      %v1410 = vunpack.c.l.b16 %v396
      %v1411 = vunpack.c.h.b16 %v396
      %v1412 = vunpack.c.l.b16 %v397
      %v1413 = vunpack.c.h.b16 %v397
      %v1414 = vunpack.c.l.b16 %v398
      %v1415 = vunpack.c.h.b16 %v398
      %v1416 = vunpack.c.l.b16 %v399
      %v1417 = vunpack.c.h.b16 %v399
      %v1418 = vunpack.c.l.b16 %v400
      %v1419 = vunpack.c.h.b16 %v400
      %v1420 = vunpack.c.l.b16 %v401
      %v1421 = vunpack.c.h.b16 %v401
      %v1422 = vunpack.c.l.b16 %v402
      %v1423 = vunpack.c.h.b16 %v402
      %v1424 = vunpack.c.l.b16 %v403
      %v1425 = vunpack.c.h.b16 %v403
      %v1426 = vunpack.c.l.b16 %v404
      %v1427 = vunpack.c.h.b16 %v404
      %v1428 = vunpack.c.l.b16 %v405
      %v1429 = vunpack.c.h.b16 %v405
      %v1430 = vunpack.c.l.b16 %v406
      %v1431 = vunpack.c.h.b16 %v406
      %v1432 = vunpack.c.l.b16 %v407
      %v1433 = vunpack.c.h.b16 %v407
      %v1434 = vunpack.c.l.b16 %v408
      %v1435 = vunpack.c.h.b16 %v408
      %v1436 = vunpack.c.l.b16 %v409
      %v1437 = vunpack.c.h.b16 %v409
      %v1438 = vunpack.c.l.b16 %v410
      %v1439 = vunpack.c.h.b16 %v410
      %v1440 = vunpack.c.l.b16 %v411
      %v1441 = vunpack.c.h.b16 %v411
      %v1442 = vunpack.c.l.b16 %v412
      %v1443 = vunpack.c.h.b16 %v412
      %v1444 = vunpack.c.l.b16 %v413
      %v1445 = vunpack.c.h.b16 %v413
      %v1446 = vunpack.c.l.b16 %v414
      %v1447 = vunpack.c.h.b16 %v414
      %v1448 = vunpack.c.l.b16 %v415
      %v1449 = vunpack.c.h.b16 %v415
      %v1450 = vunpack.c.l.b16 %v416
      %v1451 = vunpack.c.h.b16 %v416
      %v1452 = vunpack.c.l.b16 %v417
      %v1453 = vunpack.c.h.b16 %v417
      %v1454 = vunpack.c.l.b16 %v418
      %v1455 = vunpack.c.h.b16 %v418
      %v1456 = vunpack.c.l.b16 %v419
      %v1457 = vunpack.c.h.b16 %v419
      %v1458 = vunpack.c.l.b16 %v420
      %v1459 = vunpack.c.h.b16 %v420
      %v1460 = vunpack.c.l.b16 %v421
      %v1461 = vunpack.c.h.b16 %v421
      %v1462 = vunpack.c.l.b16 %v422
      %v1463 = vunpack.c.h.b16 %v422
      %v1464 = vunpack.c.l.b16 %v423
      %v1465 = vunpack.c.h.b16 %v423
      %v1466 = vunpack.c.l.b16 %v424
      %v1467 = vunpack.c.h.b16 %v424
      %v1468 = vunpack.c.l.b16 %v425
      %v1469 = vunpack.c.h.b16 %v425
      %v1470 = vunpack.c.l.b16 %v426
      %v1471 = vunpack.c.h.b16 %v426
      %v1472 = vunpack.c.l.b16 %v427
      %v1473 = vunpack.c.h.b16 %v427
      %v1474 = vunpack.c.l.b16 %v428
      %v1475 = vunpack.c.h.b16 %v428
      %v1476 = vunpack.c.l.b16 %v429
      %v1477 = vunpack.c.h.b16 %v429
      %v1478 = vunpack.c.l.b16 %v430
      %v1479 = vunpack.c.h.b16 %v430
      %v1480 = vunpack.c.l.b16 %v431
      %v1481 = vunpack.c.h.b16 %v431
      %v1482 = vunpack.c.l.b16 %v432
      %v1483 = vunpack.c.h.b16 %v432
      %v1484 = vunpack.c.l.b16 %v433
      %v1485 = vunpack.c.h.b16 %v433
      %v1486 = vunpack.c.l.b16 %v434
      %v1487 = vunpack.c.h.b16 %v434
      %v1488 = vunpack.c.l.b16 %v435
      %v1489 = vunpack.c.h.b16 %v435
      %v1490 = vunpack.c.l.b16 %v436
      %v1491 = vunpack.c.h.b16 %v436
      %v1492 = vunpack.c.l.b16 %v437
      %v1493 = vunpack.c.h.b16 %v437
      %v1494 = vunpack.c.l.b16 %v438
      %v1495 = vunpack.c.h.b16 %v438
      %v1496 = vunpack.c.l.b16 %v439
      %v1497 = vunpack.c.h.b16 %v439
      %v1498 = vunpack.c.l.b16 %v440
      %v1499 = vunpack.c.h.b16 %v440
      %v1500 = vunpack.c.l.b16 %v441
      %v1501 = vunpack.c.h.b16 %v441
      %v1502 = vunpack.c.l.b16 %v442
      %v1503 = vunpack.c.h.b16 %v442
      %v1504 = vunpack.c.l.b16 %v443
      %v1505 = vunpack.c.h.b16 %v443
      %v1506 = vunpack.c.l.b16 %v444
      %v1507 = vunpack.c.h.b16 %v444
      %v1508 = vunpack.c.l.b16 %v445
      %v1509 = vunpack.c.h.b16 %v445
      %v1510 = vunpack.c.l.b16 %v446
      %v1511 = vunpack.c.h.b16 %v446
      %v1512 = vunpack.c.l.b16 %v447
      %v1513 = vunpack.c.h.b16 %v447
      %v1514 = vunpack.c.l.b16 %v448
      %v1515 = vunpack.c.h.b16 %v448
      %v1516 = vunpack.c.l.b16 %v449
      %v1517 = vunpack.c.h.b16 %v449
      %v1518 = vunpack.c.l.b16 %v450
      %v1519 = vunpack.c.h.b16 %v450
      %v1520 = vunpack.c.l.b16 %v451
      %v1521 = vunpack.c.h.b16 %v451
      %v1522 = vunpack.c.l.b16 %v452
      %v1523 = vunpack.c.h.b16 %v452
      %v1524 = vunpack.c.l.b16 %v453
      %v1525 = vunpack.c.h.b16 %v453
      %v1526 = vunpack.c.l.b16 %v454
      %v1527 = vunpack.c.h.b16 %v454
      %v1528 = vunpack.c.l.b16 %v455
      %v1529 = vunpack.c.h.b16 %v455
      %v1530 = vunpack.c.l.b16 %v456
      %v1531 = vunpack.c.h.b16 %v456
      %v1532 = vunpack.c.l.b16 %v457
      %v1533 = vunpack.c.h.b16 %v457
      %v1534 = vunpack.c.l.b16 %v458
      %v1535 = vunpack.c.h.b16 %v458
      %v1536 = vunpack.c.l.b16 %v459
      %v1537 = vunpack.c.h.b16 %v459
      %v1538 = vunpack.c.l.b16 %v460
      %v1539 = vunpack.c.h.b16 %v460
      %v1540 = vunpack.c.l.b16 %v461
      %v1541 = vunpack.c.h.b16 %v461
      %v1542 = vunpack.c.l.b16 %v462
      %v1543 = vunpack.c.h.b16 %v462
      %v1544 = vunpack.c.l.b16 %v463
      %v1545 = vunpack.c.h.b16 %v463
      %v1546 = vunpack.c.l.b16 %v464
      %v1547 = vunpack.c.h.b16 %v464
      %v1548 = vunpack.c.l.b16 %v465
      %v1549 = vunpack.c.h.b16 %v465
      %v1550 = vunpack.c.l.b16 %v466
      %v1551 = vunpack.c.h.b16 %v466
      %v1552 = vunpack.c.l.b16 %v467
      %v1553 = vunpack.c.h.b16 %v467
      %v1554 = vunpack.c.l.b16 %v468
      %v1555 = vunpack.c.h.b16 %v468
      %v1556 = vunpack.c.l.b16 %v469
      %v1557 = vunpack.c.h.b16 %v469
      %v1558 = vunpack.c.l.b16 %v470
      %v1559 = vunpack.c.h.b16 %v470
      %v1560 = vunpack.c.l.b16 %v471
      %v1561 = vunpack.c.h.b16 %v471
      %v1562 = vunpack.c.l.b16 %v472
      %v1563 = vunpack.c.h.b16 %v472
      %v1564 = vunpack.c.l.b16 %v473
      %v1565 = vunpack.c.h.b16 %v473
      %v1566 = vunpack.c.l.b16 %v474
      %v1567 = vunpack.c.h.b16 %v474
      %v1568 = vunpack.c.l.b16 %v475
      %v1569 = vunpack.c.h.b16 %v475
      %v1570 = vunpack.c.l.b16 %v476
      %v1571 = vunpack.c.h.b16 %v476
      %v1572 = vunpack.c.l.b16 %v477
      %v1573 = vunpack.c.h.b16 %v477
      %v1574 = vunpack.c.l.b16 %v478
      %v1575 = vunpack.c.h.b16 %v478
      %v1576 = vunpack.c.l.b16 %v479
      %v1577 = vunpack.c.h.b16 %v479
      %v1578 = vunpack.c.l.b16 %v480
      %v1579 = vunpack.c.h.b16 %v480
      %v1580 = vunpack.c.l.b16 %v481
      %v1581 = vunpack.c.h.b16 %v481
      %v1582 = vunpack.c.l.b16 %v482
      %v1583 = vunpack.c.h.b16 %v482
      %v1584 = vunpack.c.l.b16 %v483
      %v1585 = vunpack.c.h.b16 %v483
      %v1586 = vunpack.c.l.b16 %v484
      %v1587 = vunpack.c.h.b16 %v484
      %v1588 = vunpack.c.l.b16 %v485
      %v1589 = vunpack.c.h.b16 %v485
      %v1590 = vunpack.c.l.b16 %v486
      %v1591 = vunpack.c.h.b16 %v486
      %v1592 = vunpack.c.l.b16 %v487
      %v1593 = vunpack.c.h.b16 %v487
      %v1594 = vunpack.c.l.b16 %v488
      %v1595 = vunpack.c.h.b16 %v488
      %v1596 = vunpack.c.l.b16 %v489
      %v1597 = vunpack.c.h.b16 %v489
      %v1598 = vunpack.c.l.b16 %v490
      %v1599 = vunpack.c.h.b16 %v490
      %v1600 = vunpack.c.l.b16 %v491
      %v1601 = vunpack.c.h.b16 %v491
      %v1602 = vunpack.c.l.b16 %v492
      %v1603 = vunpack.c.h.b16 %v492
      %v1604 = vunpack.c.l.b16 %v493
      %v1605 = vunpack.c.h.b16 %v493
      %v1606 = vunpack.c.l.b16 %v494
      %v1607 = vunpack.c.h.b16 %v494
      %v1608 = vunpack.c.l.b16 %v495
      %v1609 = vunpack.c.h.b16 %v495
      %v1610 = vunpack.c.l.b16 %v496
      %v1611 = vunpack.c.h.b16 %v496
      %v1612 = vunpack.c.l.b16 %v497
      %v1613 = vunpack.c.h.b16 %v497
      %v1614 = vunpack.c.l.b16 %v498
      %v1615 = vunpack.c.h.b16 %v498
      %v1616 = vunpack.c.l.b16 %v499
      %v1617 = vunpack.c.h.b16 %v499
      %v1618 = vunpack.c.l.b16 %v500
      %v1619 = vunpack.c.h.b16 %v500
      %v1620 = vunpack.c.l.b16 %v501
      %v1621 = vunpack.c.h.b16 %v501
      %v1622 = vunpack.c.l.b16 %v502
      %v1623 = vunpack.c.h.b16 %v502
      %v1624 = vunpack.c.l.b16 %v503
      %v1625 = vunpack.c.h.b16 %v503
      %v1626 = vunpack.c.l.b16 %v504
      %v1627 = vunpack.c.h.b16 %v504
      %v1628 = vunpack.c.l.b16 %v505
      %v1629 = vunpack.c.h.b16 %v505
      %v1630 = vunpack.c.l.b16 %v506
      %v1631 = vunpack.c.h.b16 %v506
      %v1632 = vunpack.c.l.b16 %v507
      %v1633 = vunpack.c.h.b16 %v507
      %v1634 = vunpack.c.l.b16 %v508
      %v1635 = vunpack.c.h.b16 %v508
      %v1636 = vunpack.c.l.b16 %v509
      %v1637 = vunpack.c.h.b16 %v509
      %v1638 = vunpack.c.l.b16 %v510
      %v1639 = vunpack.c.h.b16 %v510
      %v1640 = vunpack.c.l.b16 %v511
      %v1641 = vunpack.c.h.b16 %v511
      %v1642 = vunpack.c.l.b16 %v512
      %v1643 = vunpack.c.h.b16 %v512
      %v1644 = vunpack.c.l.b16 %v513
      %v1645 = vunpack.c.h.b16 %v513
      %v1646 = vunpack.c.l.b16 %v514
      %v1647 = vunpack.c.h.b16 %v514
      %v1648 = vunpack.c.l.b16 %v515
      %v1649 = vunpack.c.h.b16 %v515
      %v1650 = vunpack.c.l.b16 %v516
      %v1651 = vunpack.c.h.b16 %v516
      %v1652 = vunpack.c.l.b16 %v517
      %v1653 = vunpack.c.h.b16 %v517
      %v1654 = vunpack.c.l.b16 %v518
      %v1655 = vunpack.c.h.b16 %v518
      %v1656 = vunpack.c.l.b16 %v519
      %v1657 = vunpack.c.h.b16 %v519
      %v1658 = vunpack.c.l.b16 %v520
      %v1659 = vunpack.c.h.b16 %v520
      %v1660 = vunpack.c.l.b16 %v521
      %v1661 = vunpack.c.h.b16 %v521
      %v1662 = vunpack.c.l.b16 %v522
      %v1663 = vunpack.c.h.b16 %v522
      %v1664 = vunpack.c.l.b16 %v523
      %v1665 = vunpack.c.h.b16 %v523
      %v1666 = vunpack.c.l.b16 %v524
      %v1667 = vunpack.c.h.b16 %v524
      %v1668 = vunpack.c.l.b16 %v525
      %v1669 = vunpack.c.h.b16 %v525
      %v1670 = vunpack.c.l.b16 %v526
      %v1671 = vunpack.c.h.b16 %v526
      %v1672 = vunpack.c.l.b16 %v527
      %v1673 = vunpack.c.h.b16 %v527
      %v1674 = vunpack.c.l.b16 %v528
      %v1675 = vunpack.c.h.b16 %v528
      %v1676 = vunpack.c.l.b16 %v529
      %v1677 = vunpack.c.h.b16 %v529
      %v1678 = vunpack.c.l.b16 %v530
      %v1679 = vunpack.c.h.b16 %v530
      %v1680 = vunpack.c.l.b16 %v531
      %v1681 = vunpack.c.h.b16 %v531
      %v1682 = vunpack.c.l.b16 %v532
      %v1683 = vunpack.c.h.b16 %v532
      %v1684 = vunpack.c.l.b16 %v533
      %v1685 = vunpack.c.h.b16 %v533
      %v1686 = vunpack.c.l.b16 %v534
      %v1687 = vunpack.c.h.b16 %v534
      %v1688 = vunpack.c.l.b16 %v535
      %v1689 = vunpack.c.h.b16 %v535
      %v1690 = vunpack.c.l.b16 %v536
      %v1691 = vunpack.c.h.b16 %v536
      %v1692 = vunpack.c.l.b16 %v537
      %v1693 = vunpack.c.h.b16 %v537
      %v1694 = vunpack.c.l.b16 %v538
      %v1695 = vunpack.c.h.b16 %v538
      %v1696 = vunpack.c.l.b16 %v539
      %v1697 = vunpack.c.h.b16 %v539
      %v1698 = vunpack.c.l.b16 %v540
      %v1699 = vunpack.c.h.b16 %v540
      %v1700 = vunpack.c.l.b16 %v541
      %v1701 = vunpack.c.h.b16 %v541
      %v1702 = vunpack.c.l.b16 %v542
      %v1703 = vunpack.c.h.b16 %v542
      %v1704 = vunpack.c.l.b16 %v543
      %v1705 = vunpack.c.h.b16 %v543
      %v1706 = vunpack.c.l.b16 %v544
      %v1707 = vunpack.c.h.b16 %v544
      %v1708 = vunpack.c.l.b16 %v545
      %v1709 = vunpack.c.h.b16 %v545
      %v1710 = vunpack.c.l.b16 %v546
      %v1711 = vunpack.c.h.b16 %v546
      %v1712 = vunpack.c.l.b16 %v547
      %v1713 = vunpack.c.h.b16 %v547
      %v1714 = vunpack.c.l.b16 %v548
      %v1715 = vunpack.c.h.b16 %v548
      %v1716 = vunpack.c.l.b16 %v549
      %v1717 = vunpack.c.h.b16 %v549
      %v1718 = vunpack.c.l.b16 %v550
      %v1719 = vunpack.c.h.b16 %v550
      %v1720 = vunpack.c.l.b16 %v551
      %v1721 = vunpack.c.h.b16 %v551
      %v1722 = vunpack.c.l.b16 %v552
      %v1723 = vunpack.c.h.b16 %v552
      %v1724 = vunpack.c.l.b16 %v553
      %v1725 = vunpack.c.h.b16 %v553
      %v1726 = vunpack.c.l.b16 %v554
      %v1727 = vunpack.c.h.b16 %v554
      %v1728 = vunpack.c.l.b16 %v555
      %v1729 = vunpack.c.h.b16 %v555
      %v1730 = vunpack.c.l.b16 %v556
      %v1731 = vunpack.c.h.b16 %v556
      %v1732 = vunpack.c.l.b16 %v557
      %v1733 = vunpack.c.h.b16 %v557
      %v1734 = vunpack.c.l.b16 %v558
      %v1735 = vunpack.c.h.b16 %v558
      %v1736 = vunpack.c.l.b16 %v559
      %v1737 = vunpack.c.h.b16 %v559
      %v1738 = vunpack.c.l.b16 %v560
      %v1739 = vunpack.c.h.b16 %v560
      %v1740 = vunpack.c.l.b16 %v561
      %v1741 = vunpack.c.h.b16 %v561
      %v1742 = vunpack.c.l.b16 %v562
      %v1743 = vunpack.c.h.b16 %v562
      %v1744 = vunpack.c.l.b16 %v563
      %v1745 = vunpack.c.h.b16 %v563
      %v1746 = vunpack.c.l.b16 %v564
      %v1747 = vunpack.c.h.b16 %v564
      %v1748 = vunpack.c.l.b16 %v565
      %v1749 = vunpack.c.h.b16 %v565
      %v1750 = vunpack.c.l.b16 %v566
      %v1751 = vunpack.c.h.b16 %v566
      %v1752 = vunpack.c.l.b16 %v567
      %v1753 = vunpack.c.h.b16 %v567
      %v1754 = vunpack.c.l.b16 %v568
      %v1755 = vunpack.c.h.b16 %v568
      %v1756 = vunpack.c.l.b16 %v569
      %v1757 = vunpack.c.h.b16 %v569
      %v1758 = vunpack.c.l.b16 %v570
      %v1759 = vunpack.c.h.b16 %v570
      %v1760 = vunpack.c.l.b16 %v571
      %v1761 = vunpack.c.h.b16 %v571
      %v1762 = vunpack.c.l.b16 %v572
      %v1763 = vunpack.c.h.b16 %v572
      %v1764 = vunpack.c.l.b16 %v573
      %v1765 = vunpack.c.h.b16 %v573
      %v1766 = vunpack.c.l.b16 %v574
      %v1767 = vunpack.c.h.b16 %v574
      %v1768 = vunpack.c.l.b16 %v575
      %v1769 = vunpack.c.h.b16 %v575
      %v1770 = vunpack.c.l.b16 %v576
      %v1771 = vunpack.c.h.b16 %v576
      %v1772 = vunpack.c.l.b16 %v577
      %v1773 = vunpack.c.h.b16 %v577
      %v1774 = vunpack.c.l.b16 %v578
      %v1775 = vunpack.c.h.b16 %v578
      %v1776 = vunpack.c.l.b16 %v579
      %v1777 = vunpack.c.h.b16 %v579
      %v1778 = vunpack.c.l.b16 %v580
      %v1779 = vunpack.c.h.b16 %v580
      %v1780 = vunpack.c.l.b16 %v581
      %v1781 = vunpack.c.h.b16 %v581
      %v1782 = vunpack.c.l.b16 %v582
      %v1783 = vunpack.c.h.b16 %v582
      %v1784 = vunpack.c.l.b16 %v583
      %v1785 = vunpack.c.h.b16 %v583
      %v1786 = vunpack.c.l.b16 %v584
      %v1787 = vunpack.c.h.b16 %v584
      %v1788 = vunpack.c.l.b16 %v585
      %v1789 = vunpack.c.h.b16 %v585
      %v1790 = vunpack.c.l.b16 %v586
      %v1791 = vunpack.c.h.b16 %v586
      %v1792 = vunpack.c.l.b16 %v587
      %v1793 = vunpack.c.h.b16 %v587
      %v1794 = vunpack.c.l.b16 %v588
      %v1795 = vunpack.c.h.b16 %v588
      %v1796 = vunpack.c.l.b16 %v589
      %v1797 = vunpack.c.h.b16 %v589
      %v1798 = vunpack.c.l.b16 %v590
      %v1799 = vunpack.c.h.b16 %v590
      %v1800 = vunpack.c.l.b16 %v591
      %v1801 = vunpack.c.h.b16 %v591
      %v1802 = vunpack.c.l.b16 %v592
      %v1803 = vunpack.c.h.b16 %v592
      %v1804 = vunpack.c.l.b16 %v593
      %v1805 = vunpack.c.h.b16 %v593
      %v1806 = vunpack.c.l.b16 %v594
      %v1807 = vunpack.c.h.b16 %v594
      %v1808 = vunpack.c.l.b16 %v595
      %v1809 = vunpack.c.h.b16 %v595
      %v1810 = vunpack.c.l.b16 %v596
      %v1811 = vunpack.c.h.b16 %v596
      %v1812 = vunpack.c.l.b16 %v597
      %v1813 = vunpack.c.h.b16 %v597
      %v1814 = vunpack.c.l.b16 %v598
      %v1815 = vunpack.c.h.b16 %v598
      %v1816 = vunpack.c.l.b16 %v599
      %v1817 = vunpack.c.h.b16 %v599
      %v1818 = vunpack.c.l.b16 %v600
      %v1819 = vunpack.c.h.b16 %v600
      %v1820 = vunpack.c.l.b16 %v601
      %v1821 = vunpack.c.h.b16 %v601
      %v1822 = vunpack.c.l.b16 %v602
      %v1823 = vunpack.c.h.b16 %v602
      %v1824 = vunpack.c.l.b16 %v603
      %v1825 = vunpack.c.h.b16 %v603
      %v1826 = vunpack.c.l.b16 %v604
      %v1827 = vunpack.c.h.b16 %v604
      %v1828 = vunpack.c.l.b16 %v605
      %v1829 = vunpack.c.h.b16 %v605
      %v1830 = vunpack.c.l.b16 %v606
      %v1831 = vunpack.c.h.b16 %v606
      %v1832 = vunpack.c.l.b16 %v607
      %v1833 = vunpack.c.h.b16 %v607
      %v1834 = vunpack.c.l.b16 %v608
      %v1835 = vunpack.c.h.b16 %v608
      %v1836 = vunpack.c.l.b16 %v609
      %v1837 = vunpack.c.h.b16 %v609
      %v1838 = vunpack.c.l.b16 %v610
      %v1839 = vunpack.c.h.b16 %v610
      %v1840 = vunpack.c.l.b16 %v611
      %v1841 = vunpack.c.h.b16 %v611
      %v1842 = vunpack.c.l.b16 %v612
      %v1843 = vunpack.c.h.b16 %v612
      %v1844 = vunpack.c.l.b16 %v613
      %v1845 = vunpack.c.h.b16 %v613
      %v1846 = vunpack.c.l.b16 %v614
      %v1847 = vunpack.c.h.b16 %v614
      %v1848 = vunpack.c.l.b16 %v615
      %v1849 = vunpack.c.h.b16 %v615
      %v1850 = vpack.c.b16 %v1140, %v1130
      %v1851 = vpack.c.b16 %v1141, %v1131
      %v1852 = vpack.c.b16 %v1142, %v1132
      %v1853 = vpack.c.b16 %v1143, %v1133
      %v1854 = vpack.c.b16 %v1144, %v1134
      %v1855 = vpack.c.b16 %v1145, %v1135
      %v1856 = vpack.c.b16 %v1146, %v1136
      %v1857 = vpack.c.b16 %v1147, %v1137
      %v1858 = vpack.c.b16 %v1148, %v1138
      %v1859 = vpack.c.b16 %v1149, %v1139
      %v1860 = vpack.c.b16 %v1160, %v1150
      %v1861 = vpack.c.b16 %v1161, %v1151
      %v1862 = vpack.c.b16 %v1162, %v1152
      %v1863 = vpack.c.b16 %v1163, %v1153
      %v1864 = vpack.c.b16 %v1164, %v1154
      %v1865 = vpack.c.b16 %v1165, %v1155
      %v1866 = vpack.c.b16 %v1166, %v1156
      %v1867 = vpack.c.b16 %v1167, %v1157
      %v1868 = vpack.c.b16 %v1168, %v1158
      %v1869 = vpack.c.b16 %v1169, %v1159
      %v1870 = vpack.c.b16 %v1180, %v1170
      %v1871 = vpack.c.b16 %v1181, %v1171
      %v1872 = vpack.c.b16 %v1182, %v1172
      %v1873 = vpack.c.b16 %v1183, %v1173
      %v1874 = vpack.c.b16 %v1184, %v1174
      %v1875 = vpack.c.b16 %v1185, %v1175
      %v1876 = vpack.c.b16 %v1186, %v1176
      %v1877 = vpack.c.b16 %v1187, %v1177
      %v1878 = vpack.c.b16 %v1188, %v1178
      %v1879 = vpack.c.b16 %v1189, %v1179
      %v1880 = vpack.c.b16 %v1200, %v1190
      %v1881 = vpack.c.b16 %v1201, %v1191
      %v1882 = vpack.c.b16 %v1202, %v1192
      %v1883 = vpack.c.b16 %v1203, %v1193
      %v1884 = vpack.c.b16 %v1204, %v1194
      %v1885 = vpack.c.b16 %v1205, %v1195
      %v1886 = vpack.c.b16 %v1206, %v1196
      %v1887 = vpack.c.b16 %v1207, %v1197
      %v1888 = vpack.c.b16 %v1208, %v1198
      %v1889 = vpack.c.b16 %v1209, %v1199
      %v1890 = vpack.c.b16 %v1220, %v1210
      %v1891 = vpack.c.b16 %v1221, %v1211
      %v1892 = vpack.c.b16 %v1222, %v1212
      %v1893 = vpack.c.b16 %v1223, %v1213
      %v1894 = vpack.c.b16 %v1224, %v1214
      %v1895 = vpack.c.b16 %v1225, %v1215
      %v1896 = vpack.c.b16 %v1226, %v1216
      %v1897 = vpack.c.b16 %v1227, %v1217
      %v1898 = vpack.c.b16 %v1228, %v1218
      %v1899 = vpack.c.b16 %v1229, %v1219
      %v1900 = vpack.c.b16 %v1240, %v1230
      %v1901 = vpack.c.b16 %v1241, %v1231
      %v1902 = vpack.c.b16 %v1242, %v1232
      %v1903 = vpack.c.b16 %v1243, %v1233
      %v1904 = vpack.c.b16 %v1244, %v1234
      %v1905 = vpack.c.b16 %v1245, %v1235
      %v1906 = vpack.c.b16 %v1246, %v1236
      %v1907 = vpack.c.b16 %v1247, %v1237
      %v1908 = vpack.c.b16 %v1248, %v1238
      %v1909 = vpack.c.b16 %v1249, %v1239
      %v1910 = vpack.c.b16 %v1260, %v1250
      %v1911 = vpack.c.b16 %v1261, %v1251
      %v1912 = vpack.c.b16 %v1262, %v1252
      %v1913 = vpack.c.b16 %v1263, %v1253
      %v1914 = vpack.c.b16 %v1264, %v1254
      %v1915 = vpack.c.b16 %v1265, %v1255
      %v1916 = vpack.c.b16 %v1266, %v1256
      %v1917 = vpack.c.b16 %v1267, %v1257
      %v1918 = vpack.c.b16 %v1268, %v1258
      %v1919 = vpack.c.b16 %v1269, %v1259
      %v1920 = vpack.c.b16 %v1280, %v1270
      %v1921 = vpack.c.b16 %v1281, %v1271
      %v1922 = vpack.c.b16 %v1282, %v1272
      %v1923 = vpack.c.b16 %v1283, %v1273
      %v1924 = vpack.c.b16 %v1284, %v1274
      %v1925 = vpack.c.b16 %v1285, %v1275
      %v1926 = vpack.c.b16 %v1286, %v1276
      %v1927 = vpack.c.b16 %v1287, %v1277
      %v1928 = vpack.c.b16 %v1288, %v1278
      %v1929 = vpack.c.b16 %v1289, %v1279
      %v1930 = vpack.c.b16 %v1300, %v1290
      %v1931 = vpack.c.b16 %v1301, %v1291
      %v1932 = vpack.c.b16 %v1302, %v1292
      %v1933 = vpack.c.b16 %v1303, %v1293
      %v1934 = vpack.c.b16 %v1304, %v1294
      %v1935 = vpack.c.b16 %v1305, %v1295
      %v1936 = vpack.c.b16 %v1306, %v1296
      %v1937 = vpack.c.b16 %v1307, %v1297
      %v1938 = vpack.c.b16 %v1308, %v1298
      %v1939 = vpack.c.b16 %v1309, %v1299
      %v1940 = vpack.c.b16 %v1320, %v1310
      %v1941 = vpack.c.b16 %v1321, %v1311
      %v1942 = vpack.c.b16 %v1322, %v1312
      %v1943 = vpack.c.b16 %v1323, %v1313
      %v1944 = vpack.c.b16 %v1324, %v1314
      %v1945 = vpack.c.b16 %v1325, %v1315
      %v1946 = vpack.c.b16 %v1326, %v1316
      %v1947 = vpack.c.b16 %v1327, %v1317
      %v1948 = vpack.c.b16 %v1328, %v1318
      %v1949 = vpack.c.b16 %v1329, %v1319
      %v1950 = vpack.c.b16 %v1340, %v1330
      %v1951 = vpack.c.b16 %v1341, %v1331
      %v1952 = vpack.c.b16 %v1342, %v1332
      %v1953 = vpack.c.b16 %v1343, %v1333
      %v1954 = vpack.c.b16 %v1344, %v1334
      %v1955 = vpack.c.b16 %v1345, %v1335
      %v1956 = vpack.c.b16 %v1346, %v1336
      %v1957 = vpack.c.b16 %v1347, %v1337
      %v1958 = vpack.c.b16 %v1348, %v1338
      %v1959 = vpack.c.b16 %v1349, %v1339
      %v1960 = vpack.c.b16 %v1360, %v1350
      %v1961 = vpack.c.b16 %v1361, %v1351
      %v1962 = vpack.c.b16 %v1362, %v1352
      %v1963 = vpack.c.b16 %v1363, %v1353
      %v1964 = vpack.c.b16 %v1364, %v1354
      %v1965 = vpack.c.b16 %v1365, %v1355
      %v1966 = vpack.c.b16 %v1366, %v1356
      %v1967 = vpack.c.b16 %v1367, %v1357
      %v1968 = vpack.c.b16 %v1368, %v1358
      %v1969 = vpack.c.b16 %v1369, %v1359
      %v1970 = vpack.c.b16 %v1380, %v1370
      %v1971 = vpack.c.b16 %v1381, %v1371
      %v1972 = vpack.c.b16 %v1382, %v1372
      %v1973 = vpack.c.b16 %v1383, %v1373
      %v1974 = vpack.c.b16 %v1384, %v1374
      %v1975 = vpack.c.b16 %v1385, %v1375
      %v1976 = vpack.c.b16 %v1386, %v1376
      %v1977 = vpack.c.b16 %v1387, %v1377
      %v1978 = vpack.c.b16 %v1388, %v1378
      %v1979 = vpack.c.b16 %v1389, %v1379
      %v1980 = vpack.c.b16 %v1400, %v1390
      %v1981 = vpack.c.b16 %v1401, %v1391
      %v1982 = vpack.c.b16 %v1402, %v1392
      %v1983 = vpack.c.b16 %v1403, %v1393
      %v1984 = vpack.c.b16 %v1404, %v1394
      %v1985 = vpack.c.b16 %v1405, %v1395
      %v1986 = vpack.c.b16 %v1406, %v1396
      %v1987 = vpack.c.b16 %v1407, %v1397
      %v1988 = vpack.c.b16 %v1408, %v1398
      %v1989 = vpack.c.b16 %v1409, %v1399
      %v1990 = vpack.c.b16 %v1420, %v1410
      %v1991 = vpack.c.b16 %v1421, %v1411
      %v1992 = vpack.c.b16 %v1422, %v1412
      %v1993 = vpack.c.b16 %v1423, %v1413
      %v1994 = vpack.c.b16 %v1424, %v1414
      %v1995 = vpack.c.b16 %v1425, %v1415
      %v1996 = vpack.c.b16 %v1426, %v1416
      %v1997 = vpack.c.b16 %v1427, %v1417
      %v1998 = vpack.c.b16 %v1428, %v1418
      %v1999 = vpack.c.b16 %v1429, %v1419
      %v2000 = vpack.c.b16 %v1440, %v1430
      %v2001 = vpack.c.b16 %v1441, %v1431
      %v2002 = vpack.c.b16 %v1442, %v1432
      %v2003 = vpack.c.b16 %v1443, %v1433
      %v2004 = vpack.c.b16 %v1444, %v1434
      %v2005 = vpack.c.b16 %v1445, %v1435
      %v2006 = vpack.c.b16 %v1446, %v1436
      %v2007 = vpack.c.b16 %v1447, %v1437
      %v2008 = vpack.c.b16 %v1448, %v1438
      %v2009 = vpack.c.b16 %v1449, %v1439
      %v2010 = vpack.c.b16 %v1460, %v1450
      %v2011 = vpack.c.b16 %v1461, %v1451
      %v2012 = vpack.c.b16 %v1462, %v1452
      %v2013 = vpack.c.b16 %v1463, %v1453
      %v2014 = vpack.c.b16 %v1464, %v1454
      %v2015 = vpack.c.b16 %v1465, %v1455
      %v2016 = vpack.c.b16 %v1466, %v1456
      %v2017 = vpack.c.b16 %v1467, %v1457
      %v2018 = vpack.c.b16 %v1468, %v1458
      %v2019 = vpack.c.b16 %v1469, %v1459
      %v2020 = vpack.c.b16 %v1480, %v1470
      %v2021 = vpack.c.b16 %v1481, %v1471
      %v2022 = vpack.c.b16 %v1482, %v1472
      %v2023 = vpack.c.b16 %v1483, %v1473
      %v2024 = vpack.c.b16 %v1484, %v1474
      %v2025 = vpack.c.b16 %v1485, %v1475
      %v2026 = vpack.c.b16 %v1486, %v1476
      %v2027 = vpack.c.b16 %v1487, %v1477
      %v2028 = vpack.c.b16 %v1488, %v1478
      %v2029 = vpack.c.b16 %v1489, %v1479
      %v2030 = vpack.c.b16 %v1500, %v1490
      %v2031 = vpack.c.b16 %v1501, %v1491
      %v2032 = vpack.c.b16 %v1502, %v1492
      %v2033 = vpack.c.b16 %v1503, %v1493
      %v2034 = vpack.c.b16 %v1504, %v1494
      %v2035 = vpack.c.b16 %v1505, %v1495
      %v2036 = vpack.c.b16 %v1506, %v1496
      %v2037 = vpack.c.b16 %v1507, %v1497
      %v2038 = vpack.c.b16 %v1508, %v1498
      %v2039 = vpack.c.b16 %v1509, %v1499
      %v2040 = vpack.c.b16 %v1520, %v1510
      %v2041 = vpack.c.b16 %v1521, %v1511
      %v2042 = vpack.c.b16 %v1522, %v1512
      %v2043 = vpack.c.b16 %v1523, %v1513
      %v2044 = vpack.c.b16 %v1524, %v1514
      %v2045 = vpack.c.b16 %v1525, %v1515
      %v2046 = vpack.c.b16 %v1526, %v1516
      %v2047 = vpack.c.b16 %v1527, %v1517
      %v2048 = vpack.c.b16 %v1528, %v1518
      %v2049 = vpack.c.b16 %v1529, %v1519
      %v2050 = vpack.c.b16 %v1540, %v1530
      %v2051 = vpack.c.b16 %v1541, %v1531
      %v2052 = vpack.c.b16 %v1542, %v1532
      %v2053 = vpack.c.b16 %v1543, %v1533
      %v2054 = vpack.c.b16 %v1544, %v1534
      %v2055 = vpack.c.b16 %v1545, %v1535
      %v2056 = vpack.c.b16 %v1546, %v1536
      %v2057 = vpack.c.b16 %v1547, %v1537
      %v2058 = vpack.c.b16 %v1548, %v1538
      %v2059 = vpack.c.b16 %v1549, %v1539
      %v2060 = vpack.c.b16 %v1560, %v1550
      %v2061 = vpack.c.b16 %v1561, %v1551
      %v2062 = vpack.c.b16 %v1562, %v1552
      %v2063 = vpack.c.b16 %v1563, %v1553
      %v2064 = vpack.c.b16 %v1564, %v1554
      %v2065 = vpack.c.b16 %v1565, %v1555
      %v2066 = vpack.c.b16 %v1566, %v1556
      %v2067 = vpack.c.b16 %v1567, %v1557
      %v2068 = vpack.c.b16 %v1568, %v1558
      %v2069 = vpack.c.b16 %v1569, %v1559
      %v2070 = vpack.c.b16 %v1580, %v1570
      %v2071 = vpack.c.b16 %v1581, %v1571
      %v2072 = vpack.c.b16 %v1582, %v1572
      %v2073 = vpack.c.b16 %v1583, %v1573
      %v2074 = vpack.c.b16 %v1584, %v1574
      %v2075 = vpack.c.b16 %v1585, %v1575
      %v2076 = vpack.c.b16 %v1586, %v1576
      %v2077 = vpack.c.b16 %v1587, %v1577
      %v2078 = vpack.c.b16 %v1588, %v1578
      %v2079 = vpack.c.b16 %v1589, %v1579
      %v2080 = vpack.c.b16 %v1600, %v1590
      %v2081 = vpack.c.b16 %v1601, %v1591
      %v2082 = vpack.c.b16 %v1602, %v1592
      %v2083 = vpack.c.b16 %v1603, %v1593
      %v2084 = vpack.c.b16 %v1604, %v1594
      %v2085 = vpack.c.b16 %v1605, %v1595
      %v2086 = vpack.c.b16 %v1606, %v1596
      %v2087 = vpack.c.b16 %v1607, %v1597
      %v2088 = vpack.c.b16 %v1608, %v1598
      %v2089 = vpack.c.b16 %v1609, %v1599
      %v2090 = vpack.c.b16 %v1620, %v1610
      %v2091 = vpack.c.b16 %v1621, %v1611
      %v2092 = vpack.c.b16 %v1622, %v1612
      %v2093 = vpack.c.b16 %v1623, %v1613
      %v2094 = vpack.c.b16 %v1624, %v1614
      %v2095 = vpack.c.b16 %v1625, %v1615
      %v2096 = vpack.c.b16 %v1626, %v1616
      %v2097 = vpack.c.b16 %v1627, %v1617
      %v2098 = vpack.c.b16 %v1628, %v1618
      %v2099 = vpack.c.b16 %v1629, %v1619
      %v2100 = vpack.c.b16 %v1640, %v1630
      %v2101 = vpack.c.b16 %v1641, %v1631
      %v2102 = vpack.c.b16 %v1642, %v1632
      %v2103 = vpack.c.b16 %v1643, %v1633
      %v2104 = vpack.c.b16 %v1644, %v1634
      %v2105 = vpack.c.b16 %v1645, %v1635
      %v2106 = vpack.c.b16 %v1646, %v1636
      %v2107 = vpack.c.b16 %v1647, %v1637
      %v2108 = vpack.c.b16 %v1648, %v1638
      %v2109 = vpack.c.b16 %v1649, %v1639
      %v2110 = vpack.c.b16 %v1660, %v1650
      %v2111 = vpack.c.b16 %v1661, %v1651
      %v2112 = vpack.c.b16 %v1662, %v1652
      %v2113 = vpack.c.b16 %v1663, %v1653
      %v2114 = vpack.c.b16 %v1664, %v1654
      %v2115 = vpack.c.b16 %v1665, %v1655
      %v2116 = vpack.c.b16 %v1666, %v1656
      %v2117 = vpack.c.b16 %v1667, %v1657
      %v2118 = vpack.c.b16 %v1668, %v1658
      %v2119 = vpack.c.b16 %v1669, %v1659
      %v2120 = vpack.c.b16 %v1680, %v1670
      %v2121 = vpack.c.b16 %v1681, %v1671
      %v2122 = vpack.c.b16 %v1682, %v1672
      %v2123 = vpack.c.b16 %v1683, %v1673
      %v2124 = vpack.c.b16 %v1684, %v1674
      %v2125 = vpack.c.b16 %v1685, %v1675
      %v2126 = vpack.c.b16 %v1686, %v1676
      %v2127 = vpack.c.b16 %v1687, %v1677
      %v2128 = vpack.c.b16 %v1688, %v1678
      %v2129 = vpack.c.b16 %v1689, %v1679
      %v2130 = vpack.c.b16 %v1700, %v1690
      %v2131 = vpack.c.b16 %v1701, %v1691
      %v2132 = vpack.c.b16 %v1702, %v1692
      %v2133 = vpack.c.b16 %v1703, %v1693
      %v2134 = vpack.c.b16 %v1704, %v1694
      %v2135 = vpack.c.b16 %v1705, %v1695
      %v2136 = vpack.c.b16 %v1706, %v1696
      %v2137 = vpack.c.b16 %v1707, %v1697
      %v2138 = vpack.c.b16 %v1708, %v1698
      %v2139 = vpack.c.b16 %v1709, %v1699
      %v2140 = vpack.c.b16 %v1720, %v1710
      %v2141 = vpack.c.b16 %v1721, %v1711
      %v2142 = vpack.c.b16 %v1722, %v1712
      %v2143 = vpack.c.b16 %v1723, %v1713
      %v2144 = vpack.c.b16 %v1724, %v1714
      %v2145 = vpack.c.b16 %v1725, %v1715
      %v2146 = vpack.c.b16 %v1726, %v1716
      %v2147 = vpack.c.b16 %v1727, %v1717
      %v2148 = vpack.c.b16 %v1728, %v1718
      %v2149 = vpack.c.b16 %v1729, %v1719
      %v2150 = vpack.c.b16 %v1740, %v1730
      %v2151 = vpack.c.b16 %v1741, %v1731
      %v2152 = vpack.c.b16 %v1742, %v1732
      %v2153 = vpack.c.b16 %v1743, %v1733
      %v2154 = vpack.c.b16 %v1744, %v1734
      %v2155 = vpack.c.b16 %v1745, %v1735
      %v2156 = vpack.c.b16 %v1746, %v1736
      %v2157 = vpack.c.b16 %v1747, %v1737
      %v2158 = vpack.c.b16 %v1748, %v1738
      %v2159 = vpack.c.b16 %v1749, %v1739
      %v2160 = vpack.c.b16 %v1760, %v1750
      %v2161 = vpack.c.b16 %v1761, %v1751
      %v2162 = vpack.c.b16 %v1762, %v1752
      %v2163 = vpack.c.b16 %v1763, %v1753
      %v2164 = vpack.c.b16 %v1764, %v1754
      %v2165 = vpack.c.b16 %v1765, %v1755
      %v2166 = vpack.c.b16 %v1766, %v1756
      %v2167 = vpack.c.b16 %v1767, %v1757
      %v2168 = vpack.c.b16 %v1768, %v1758
      %v2169 = vpack.c.b16 %v1769, %v1759
      %v2170 = vpack.c.b16 %v1780, %v1770
      %v2171 = vpack.c.b16 %v1781, %v1771
      %v2172 = vpack.c.b16 %v1782, %v1772
      %v2173 = vpack.c.b16 %v1783, %v1773
      %v2174 = vpack.c.b16 %v1784, %v1774
      %v2175 = vpack.c.b16 %v1785, %v1775
      %v2176 = vpack.c.b16 %v1786, %v1776
      %v2177 = vpack.c.b16 %v1787, %v1777
      %v2178 = vpack.c.b16 %v1788, %v1778
      %v2179 = vpack.c.b16 %v1789, %v1779
      %v2180 = vpack.c.b16 %v1800, %v1790
      %v2181 = vpack.c.b16 %v1801, %v1791
      %v2182 = vpack.c.b16 %v1802, %v1792
      %v2183 = vpack.c.b16 %v1803, %v1793
      %v2184 = vpack.c.b16 %v1804, %v1794
      %v2185 = vpack.c.b16 %v1805, %v1795
      %v2186 = vpack.c.b16 %v1806, %v1796
      %v2187 = vpack.c.b16 %v1807, %v1797
      %v2188 = vpack.c.b16 %v1808, %v1798
      %v2189 = vpack.c.b16 %v1809, %v1799
      %v2190 = vpack.c.b16 %v1820, %v1810
      %v2191 = vpack.c.b16 %v1821, %v1811
      %v2192 = vpack.c.b16 %v1822, %v1812
      %v2193 = vpack.c.b16 %v1823, %v1813
      %v2194 = vpack.c.b16 %v1824, %v1814
      %v2195 = vpack.c.b16 %v1825, %v1815
      %v2196 = vpack.c.b16 %v1826, %v1816
      %v2197 = vpack.c.b16 %v1827, %v1817
      %v2198 = vpack.c.b16 %v1828, %v1818
      %v2199 = vpack.c.b16 %v1829, %v1819
      %v2200 = vpack.c.b16 %v1840, %v1830
      %v2201 = vpack.c.b16 %v1841, %v1831
      %v2202 = vpack.c.b16 %v1842, %v1832
      %v2203 = vpack.c.b16 %v1843, %v1833
      %v2204 = vpack.c.b16 %v1844, %v1834
      %v2205 = vpack.c.b16 %v1845, %v1835
      %v2206 = vpack.c.b16 %v1846, %v1836
      %v2207 = vpack.c.b16 %v1847, %v1837
      %v2208 = vpack.c.b16 %v1848, %v1838
      %v2209 = vpack.c.b16 %v1849, %v1839
      %vm2570 = vcmask 523264
      %v2572 = vsel %vm2570, %v738, 0
      %v2575 = vsel %vm2570, %v743, 0
      %v2578 = vsel %vm2570, %v748, 0
      %v2581 = vsel %vm2570, %v753, 0
      %2583 = vmatprep.subr.bf16.mxu0 %v1851
      %2584 = vmatpush1.bf16.msra.mxu0 %v1850
      %2585 = vmatprep.subr.bf16.mxu0 %v1861
      %2586 = vmatpush1.bf16.msra.mxu0 %v1860
      %2587 = vmatprep.subr.bf16.mxu0 %v1871
      %2588 = vmatpush1.bf16.msra.mxu0 %v1870
      %2589 = vmatprep.subr.bf16.mxu0 %v1881
      %2590 = vmatpush1.bf16.msra.mxu0 %v1880
      %2591 = vmatprep.subr.bf16.mxu0 %v1891
      %2592 = vmatpush1.bf16.msra.mxu0 %v1890
      %2593 = vmatprep.subr.bf16.mxu0 %v1901
      %2594 = vmatpush1.bf16.msra.mxu0 %v1900
      %2595 = vmatprep.subr.bf16.mxu0 %v1911
      %2596 = vmatpush1.bf16.msra.mxu0 %v1910
      %2597 = vmatprep.subr.bf16.mxu0 %v1921
      %2598 = vmatpush1.bf16.msra.mxu0 %v1920
      %2599 = vmatprep.subr.bf16.mxu0 %v1931
      %2600 = vmatpush1.bf16.msra.mxu0 %v1930
      %2601 = vmatprep.subr.bf16.mxu0 %v1941
      %2602 = vmatpush1.bf16.msra.mxu0 %v1940
      %2603 = vmatprep.subr.bf16.mxu0 %v1951
      %2604 = vmatpush1.bf16.msra.mxu0 %v1950
      %2605 = vmatprep.subr.bf16.mxu0 %v1961
      %2606 = vmatpush1.bf16.msra.mxu0 %v1960
      %2607 = vmatprep.subr.bf16.mxu0 %v1971
      %2608 = vmatpush1.bf16.msra.mxu0 %v1970
      %2609 = vmatprep.subr.bf16.mxu0 %v1981
      %2610 = vmatpush1.bf16.msra.mxu0 %v1980
      %2611 = vmatprep.subr.bf16.mxu0 %v1991
      %2612 = vmatpush1.bf16.msra.mxu0 %v1990
      %2613 = vmatprep.subr.bf16.mxu0 %v2001
      %2614 = vmatpush1.bf16.msra.mxu0 %v2000
      %2615 = vmatprep.mubr.bf16.mxu0 %v735
      %2616 = vmatmul.mubr.bf16.gmra.mrb[0].mxu0 %v734
      %v2617 = vpop.f32.mrb[0].mxu0
      %v2618 = vadd.f32 %v623, %v2617
      %v2619 = vpop.f32.mrb[0].mxu0
      %v2620 = vadd.f32 %v627, %v2619
      %v2621 = vpop.f32.mrb[0].mxu0
      %v2622 = vadd.f32 %v623, %v2621
      %v2623 = vpop.f32.mrb[0].mxu0
      %v2624 = vadd.f32 %v627, %v2623
      %2625 = vmatprep.mubr.bf16.mxu0 %v740
      %2626 = vmatmul.mubr.bf16.gmra.mrb[0].mxu0 %v739
      %v2627 = vpop.f32.mrb[0].mxu0
      %v2628 = vadd.f32 %v623, %v2627
      %v2629 = vpop.f32.mrb[0].mxu0
      %v2630 = vadd.f32 %v627, %v2629
      %v2631 = vpop.f32.mrb[0].mxu0
      %v2632 = vadd.f32 %v623, %v2631
      %v2633 = vpop.f32.mrb[0].mxu0
      %v2634 = vadd.f32 %v627, %v2633
      %2635 = vmatprep.mubr.bf16.mxu0 %v745
      %2636 = vmatmul.mubr.bf16.gmra.mrb[0].mxu0 %v744
      %v2637 = vpop.f32.mrb[0].mxu0
      %v2638 = vadd.f32 %v623, %v2637
      %v2639 = vpop.f32.mrb[0].mxu0
      %v2640 = vadd.f32 %v627, %v2639
      %v2641 = vpop.f32.mrb[0].mxu0
      %v2642 = vadd.f32 %v623, %v2641
      %v2643 = vpop.f32.mrb[0].mxu0
      %v2644 = vadd.f32 %v627, %v2643
      %2645 = vmatprep.mubr.bf16.mxu0 %v750
      %2646 = vmatmul.mubr.bf16.gmra.mrb[0].mxu0 %v749
      %v2647 = vpop.f32.mrb[0].mxu0
      %v2648 = vadd.f32 %v623, %v2647
      %v2649 = vpop.f32.mrb[0].mxu0
      %v2650 = vadd.f32 %v627, %v2649
      %v2651 = vpop.f32.mrb[0].mxu0
      %v2652 = vadd.f32 %v623, %v2651
      %v2653 = vpop.f32.mrb[0].mxu0
      %v2654 = vadd.f32 %v627, %v2653
      %2655 = vdwg.mxu0
      %2656 = vmatprep.subr.bf16.mxu0 %v2011
      %2657 = vmatpush1.bf16.msra.mxu0 %v2010
      %2658 = vmatprep.subr.bf16.mxu0 %v2021
      %2659 = vmatpush1.bf16.msra.mxu0 %v2020
      %2660 = vmatprep.subr.bf16.mxu0 %v2031
      %2661 = vmatpush1.bf16.msra.mxu0 %v2030
      %2662 = vmatprep.subr.bf16.mxu0 %v2041
      %2663 = vmatpush1.bf16.msra.mxu0 %v2040
      %2664 = vmatprep.subr.bf16.mxu0 %v2051
      %2665 = vmatpush1.bf16.msra.mxu0 %v2050
      %2666 = vmatprep.subr.bf16.mxu0 %v2061
      %2667 = vmatpush1.bf16.msra.mxu0 %v2060
      %2668 = vmatprep.subr.bf16.mxu0 %v2071
      %2669 = vmatpush1.bf16.msra.mxu0 %v2070
      %2670 = vmatprep.subr.bf16.mxu0 %v2081
      %2671 = vmatpush1.bf16.msra.mxu0 %v2080
      %2672 = vmatprep.subr.bf16.mxu0 %v2091
      %2673 = vmatpush1.bf16.msra.mxu0 %v2090
      %2674 = vmatprep.subr.bf16.mxu0 %v2101
      %2675 = vmatpush1.bf16.msra.mxu0 %v2100
      %2676 = vmatprep.subr.bf16.mxu0 %v2111
      %2677 = vmatpush1.bf16.msra.mxu0 %v2110
      %2678 = vmatprep.subr.bf16.mxu0 %v2121
      %2679 = vmatpush1.bf16.msra.mxu0 %v2120
      %2680 = vmatprep.subr.bf16.mxu0 %v2131
      %2681 = vmatpush1.bf16.msra.mxu0 %v2130
      %2682 = vmatprep.subr.bf16.mxu0 %v2141
      %2683 = vmatpush1.bf16.msra.mxu0 %v2140
      %2684 = vmatprep.subr.bf16.mxu0 %v2151
      %2685 = vmatpush1.bf16.msra.mxu0 %v2150
      %2686 = vmatprep.subr.bf16.mxu0 %v2161
      %2687 = vmatpush1.bf16.msra.mxu0 %v2160
      %2688 = vmatprep.mubr.bf16.mxu0 %v737
      %2689 = vmatmul.mubr.bf16.gmra.mrb[0].mxu0 %v736
      %v2690 = vpop.f32.mrb[0].mxu0
      %v2691 = vadd.f32 %v2618, %v2690
      %v2692 = vpop.f32.mrb[0].mxu0
      %v2693 = vadd.f32 %v2620, %v2692
      %v2694 = vpop.f32.mrb[0].mxu0
      %v2695 = vadd.f32 %v2622, %v2694
      %v2696 = vpop.f32.mrb[0].mxu0
      %v2697 = vadd.f32 %v2624, %v2696
      %2698 = vmatprep.mubr.bf16.mxu0 %v742
      %2699 = vmatmul.mubr.bf16.gmra.mrb[0].mxu0 %v741
      %v2700 = vpop.f32.mrb[0].mxu0
      %v2701 = vadd.f32 %v2628, %v2700
      %v2702 = vpop.f32.mrb[0].mxu0
      %v2703 = vadd.f32 %v2630, %v2702
      %v2704 = vpop.f32.mrb[0].mxu0
      %v2705 = vadd.f32 %v2632, %v2704
      %v2706 = vpop.f32.mrb[0].mxu0
      %v2707 = vadd.f32 %v2634, %v2706
      %2708 = vmatprep.mubr.bf16.mxu0 %v747
      %2709 = vmatmul.mubr.bf16.gmra.mrb[0].mxu0 %v746
      %v2710 = vpop.f32.mrb[0].mxu0
      %v2711 = vadd.f32 %v2638, %v2710
      %v2712 = vpop.f32.mrb[0].mxu0
      %v2713 = vadd.f32 %v2640, %v2712
      %v2714 = vpop.f32.mrb[0].mxu0
      %v2715 = vadd.f32 %v2642, %v2714
      %v2716 = vpop.f32.mrb[0].mxu0
      %v2717 = vadd.f32 %v2644, %v2716
      %2718 = vmatprep.mubr.bf16.mxu0 %v752
      %2719 = vmatmul.mubr.bf16.gmra.mrb[0].mxu0 %v751
      %v2720 = vpop.f32.mrb[0].mxu0
      %v2721 = vadd.f32 %v2648, %v2720
      %v2722 = vpop.f32.mrb[0].mxu0
      %v2723 = vadd.f32 %v2650, %v2722
      %v2724 = vpop.f32.mrb[0].mxu0
      %v2725 = vadd.f32 %v2652, %v2724
      %v2726 = vpop.f32.mrb[0].mxu0
      %v2727 = vadd.f32 %v2654, %v2726
      %2728 = vdwg.mxu0
      %2729 = vmatprep.subr.bf16.mxu0 %v2171
      %2730 = vmatpush1.bf16.msra.mxu0 %v2170
      %2731 = vmatprep.subr.bf16.mxu0 %v2181
      %2732 = vmatpush1.bf16.msra.mxu0 %v2180
      %2733 = vmatprep.subr.bf16.mxu0 %v2191
      %2734 = vmatpush1.bf16.msra.mxu0 %v2190
      %2735 = vmatprep.subr.bf16.mxu0 %v2201
      %2736 = vmatpush1.bf16.msra.mxu0 %v2200
      %2737 = vmatprep.subr.bf16.mxu0 0
      %2738 = vmatpush1.bf16.msra.mxu0 0
      %2739 = vmatprep.subr.bf16.mxu0 0
      %2740 = vmatpush1.bf16.msra.mxu0 0
      %2741 = vmatprep.subr.bf16.mxu0 0
      %2742 = vmatpush1.bf16.msra.mxu0 0
      %2743 = vmatprep.subr.bf16.mxu0 0
      %2744 = vmatpush1.bf16.msra.mxu0 0
      %2745 = vmatprep.subr.bf16.mxu0 0
      %2746 = vmatpush1.bf16.msra.mxu0 0
      %2747 = vmatprep.subr.bf16.mxu0 0
      %2748 = vmatpush1.bf16.msra.mxu0 0
      %2749 = vmatprep.subr.bf16.mxu0 0
      %2750 = vmatpush1.bf16.msra.mxu0 0
      %2751 = vmatprep.subr.bf16.mxu0 0
      %2752 = vmatpush1.bf16.msra.mxu0 0
      %2753 = vmatprep.subr.bf16.mxu0 0
      %2754 = vmatpush1.bf16.msra.mxu0 0
      %2755 = vmatprep.subr.bf16.mxu0 0
      %2756 = vmatpush1.bf16.msra.mxu0 0
      %2757 = vmatprep.subr.bf16.mxu0 0
      %2758 = vmatpush1.bf16.msra.mxu0 0
      %2759 = vmatprep.subr.bf16.mxu0 0
      %2760 = vmatpush1.bf16.msra.mxu0 0
      %2761 = vmatprep.mubr.bf16.mxu0 0
      %2762 = vmatmul.mubr.bf16.gmra.mrb[0].mxu0 %v2572
      %v2763 = vpop.f32.mrb[0].mxu0
      %v2764 = vadd.f32 %v2691, %v2763
      %v2765 = vpop.f32.mrb[0].mxu0
      %v2766 = vadd.f32 %v2693, %v2765
      %v2767 = vpop.f32.mrb[0].mxu0
      %v2768 = vadd.f32 %v2695, %v2767
      %v2769 = vpop.f32.mrb[0].mxu0
      %v2770 = vadd.f32 %v2697, %v2769
      %2771 = vmatprep.mubr.bf16.mxu0 0
      %2772 = vmatmul.mubr.bf16.gmra.mrb[0].mxu0 %v2575
      %v2773 = vpop.f32.mrb[0].mxu0
      %v2774 = vadd.f32 %v2701, %v2773
      %v2775 = vpop.f32.mrb[0].mxu0
      %v2776 = vadd.f32 %v2703, %v2775
      %v2777 = vpop.f32.mrb[0].mxu0
      %v2778 = vadd.f32 %v2705, %v2777
      %v2779 = vpop.f32.mrb[0].mxu0
      %v2780 = vadd.f32 %v2707, %v2779
      %2781 = vmatprep.mubr.bf16.mxu0 0
      %2782 = vmatmul.mubr.bf16.gmra.mrb[0].mxu0 %v2578
      %v2783 = vpop.f32.mrb[0].mxu0
      %v2784 = vadd.f32 %v2711, %v2783
      %v2785 = vpop.f32.mrb[0].mxu0
      %v2786 = vadd.f32 %v2713, %v2785
      %v2787 = vpop.f32.mrb[0].mxu0
      %v2788 = vadd.f32 %v2715, %v2787
      %v2789 = vpop.f32.mrb[0].mxu0
      %v2790 = vadd.f32 %v2717, %v2789
      %2791 = vmatprep.mubr.bf16.mxu0 0
      %2792 = vmatmul.mubr.bf16.gmra.mrb[0].mxu0 %v2581
      %v2793 = vpop.f32.mrb[0].mxu0
      %v2794 = vadd.f32 %v2721, %v2793
      %v2795 = vpop.f32.mrb[0].mxu0
      %v2796 = vadd.f32 %v2723, %v2795
      %v2797 = vpop.f32.mrb[0].mxu0
      %v2798 = vadd.f32 %v2725, %v2797
      %v2799 = vpop.f32.mrb[0].mxu0
      %v2800 = vadd.f32 %v2727, %v2799
      %2801 = vdwg.mxu0
      %2802 = vmatprep.subr.bf16.mxu0 %v1853
      %2803 = vmatpush1.bf16.msra.mxu0 %v1852
      %2804 = vmatprep.subr.bf16.mxu0 %v1863
      %2805 = vmatpush1.bf16.msra.mxu0 %v1862
      %2806 = vmatprep.subr.bf16.mxu0 %v1873
      %2807 = vmatpush1.bf16.msra.mxu0 %v1872
      %2808 = vmatprep.subr.bf16.mxu0 %v1883
      %2809 = vmatpush1.bf16.msra.mxu0 %v1882
      %2810 = vmatprep.subr.bf16.mxu0 %v1893
      %2811 = vmatpush1.bf16.msra.mxu0 %v1892
      %2812 = vmatprep.subr.bf16.mxu0 %v1903
      %2813 = vmatpush1.bf16.msra.mxu0 %v1902
      %2814 = vmatprep.subr.bf16.mxu0 %v1913
      %2815 = vmatpush1.bf16.msra.mxu0 %v1912
      %2816 = vmatprep.subr.bf16.mxu0 %v1923
      %2817 = vmatpush1.bf16.msra.mxu0 %v1922
      %2818 = vmatprep.subr.bf16.mxu0 %v1933
      %2819 = vmatpush1.bf16.msra.mxu0 %v1932
      %2820 = vmatprep.subr.bf16.mxu0 %v1943
      %2821 = vmatpush1.bf16.msra.mxu0 %v1942
      %2822 = vmatprep.subr.bf16.mxu0 %v1953
      %2823 = vmatpush1.bf16.msra.mxu0 %v1952
      %2824 = vmatprep.subr.bf16.mxu0 %v1963
      %2825 = vmatpush1.bf16.msra.mxu0 %v1962
      %2826 = vmatprep.subr.bf16.mxu0 %v1973
      %2827 = vmatpush1.bf16.msra.mxu0 %v1972
      %2828 = vmatprep.subr.bf16.mxu0 %v1983
      %2829 = vmatpush1.bf16.msra.mxu0 %v1982
      %2830 = vmatprep.subr.bf16.mxu0 %v1993
      %2831 = vmatpush1.bf16.msra.mxu0 %v1992
      %2832 = vmatprep.subr.bf16.mxu0 %v2003
      %2833 = vmatpush1.bf16.msra.mxu0 %v2002
      %2834 = vmatprep.mubr.bf16.mxu0 %v735
      %2835 = vmatmul.mubr.bf16.gmra.mrb[0].mxu0 %v734
      %v2836 = vpop.f32.mrb[0].mxu0
      %v2837 = vadd.f32 %v631, %v2836
      %v2838 = vpop.f32.mrb[0].mxu0
      %v2839 = vadd.f32 %v635, %v2838
      %v2840 = vpop.f32.mrb[0].mxu0
      %v2841 = vadd.f32 %v631, %v2840
      %v2842 = vpop.f32.mrb[0].mxu0
      %v2843 = vadd.f32 %v635, %v2842
      %2844 = vmatprep.mubr.bf16.mxu0 %v740
      %2845 = vmatmul.mubr.bf16.gmra.mrb[0].mxu0 %v739
      %v2846 = vpop.f32.mrb[0].mxu0
      %v2847 = vadd.f32 %v631, %v2846
      %v2848 = vpop.f32.mrb[0].mxu0
      %v2849 = vadd.f32 %v635, %v2848
      %v2850 = vpop.f32.mrb[0].mxu0
      %v2851 = vadd.f32 %v631, %v2850
      %v2852 = vpop.f32.mrb[0].mxu0
      %v2853 = vadd.f32 %v635, %v2852
      %2854 = vmatprep.mubr.bf16.mxu0 %v745
      %2855 = vmatmul.mubr.bf16.gmra.mrb[0].mxu0 %v744
      %v2856 = vpop.f32.mrb[0].mxu0
      %v2857 = vadd.f32 %v631, %v2856
      %v2858 = vpop.f32.mrb[0].mxu0
      %v2859 = vadd.f32 %v635, %v2858
      %v2860 = vpop.f32.mrb[0].mxu0
      %v2861 = vadd.f32 %v631, %v2860
      %v2862 = vpop.f32.mrb[0].mxu0
      %v2863 = vadd.f32 %v635, %v2862
      %2864 = vmatprep.mubr.bf16.mxu0 %v750
      %2865 = vmatmul.mubr.bf16.gmra.mrb[0].mxu0 %v749
      %v2866 = vpop.f32.mrb[0].mxu0
      %v2867 = vadd.f32 %v631, %v2866
      %v2868 = vpop.f32.mrb[0].mxu0
      %v2869 = vadd.f32 %v635, %v2868
      %v2870 = vpop.f32.mrb[0].mxu0
      %v2871 = vadd.f32 %v631, %v2870
      %v2872 = vpop.f32.mrb[0].mxu0
      %v2873 = vadd.f32 %v635, %v2872
      %2874 = vdwg.mxu0
      %2875 = vmatprep.subr.bf16.mxu0 %v2013
      %2876 = vmatpush1.bf16.msra.mxu0 %v2012
      %2877 = vmatprep.subr.bf16.mxu0 %v2023
      %2878 = vmatpush1.bf16.msra.mxu0 %v2022
      %2879 = vmatprep.subr.bf16.mxu0 %v2033
      %2880 = vmatpush1.bf16.msra.mxu0 %v2032
      %2881 = vmatprep.subr.bf16.mxu0 %v2043
      %2882 = vmatpush1.bf16.msra.mxu0 %v2042
      %2883 = vmatprep.subr.bf16.mxu0 %v2053
      %2884 = vmatpush1.bf16.msra.mxu0 %v2052
      %2885 = vmatprep.subr.bf16.mxu0 %v2063
      %2886 = vmatpush1.bf16.msra.mxu0 %v2062
      %2887 = vmatprep.subr.bf16.mxu0 %v2073
      %2888 = vmatpush1.bf16.msra.mxu0 %v2072
      %2889 = vmatprep.subr.bf16.mxu0 %v2083
      %2890 = vmatpush1.bf16.msra.mxu0 %v2082
      %2891 = vmatprep.subr.bf16.mxu0 %v2093
      %2892 = vmatpush1.bf16.msra.mxu0 %v2092
      %2893 = vmatprep.subr.bf16.mxu0 %v2103
      %2894 = vmatpush1.bf16.msra.mxu0 %v2102
      %2895 = vmatprep.subr.bf16.mxu0 %v2113
      %2896 = vmatpush1.bf16.msra.mxu0 %v2112
      %2897 = vmatprep.subr.bf16.mxu0 %v2123
      %2898 = vmatpush1.bf16.msra.mxu0 %v2122
      %2899 = vmatprep.subr.bf16.mxu0 %v2133
      %2900 = vmatpush1.bf16.msra.mxu0 %v2132
      %2901 = vmatprep.subr.bf16.mxu0 %v2143
      %2902 = vmatpush1.bf16.msra.mxu0 %v2142
      %2903 = vmatprep.subr.bf16.mxu0 %v2153
      %2904 = vmatpush1.bf16.msra.mxu0 %v2152
      %2905 = vmatprep.subr.bf16.mxu0 %v2163
      %2906 = vmatpush1.bf16.msra.mxu0 %v2162
      %2907 = vmatprep.mubr.bf16.mxu0 %v737
      %2908 = vmatmul.mubr.bf16.gmra.mrb[0].mxu0 %v736
      %v2909 = vpop.f32.mrb[0].mxu0
      %v2910 = vadd.f32 %v2837, %v2909
      %v2911 = vpop.f32.mrb[0].mxu0
      %v2912 = vadd.f32 %v2839, %v2911
      %v2913 = vpop.f32.mrb[0].mxu0
      %v2914 = vadd.f32 %v2841, %v2913
      %v2915 = vpop.f32.mrb[0].mxu0
      %v2916 = vadd.f32 %v2843, %v2915
      %2917 = vmatprep.mubr.bf16.mxu0 %v742
      %2918 = vmatmul.mubr.bf16.gmra.mrb[0].mxu0 %v741
      %v2919 = vpop.f32.mrb[0].mxu0
      %v2920 = vadd.f32 %v2847, %v2919
      %v2921 = vpop.f32.mrb[0].mxu0
      %v2922 = vadd.f32 %v2849, %v2921
      %v2923 = vpop.f32.mrb[0].mxu0
      %v2924 = vadd.f32 %v2851, %v2923
      %v2925 = vpop.f32.mrb[0].mxu0
      %v2926 = vadd.f32 %v2853, %v2925
      %2927 = vmatprep.mubr.bf16.mxu0 %v747
      %2928 = vmatmul.mubr.bf16.gmra.mrb[0].mxu0 %v746
      %v2929 = vpop.f32.mrb[0].mxu0
      %v2930 = vadd.f32 %v2857, %v2929
      %v2931 = vpop.f32.mrb[0].mxu0
      %v2932 = vadd.f32 %v2859, %v2931
      %v2933 = vpop.f32.mrb[0].mxu0
      %v2934 = vadd.f32 %v2861, %v2933
      %v2935 = vpop.f32.mrb[0].mxu0
      %v2936 = vadd.f32 %v2863, %v2935
      %2937 = vmatprep.mubr.bf16.mxu0 %v752
      %2938 = vmatmul.mubr.bf16.gmra.mrb[0].mxu0 %v751
      %v2939 = vpop.f32.mrb[0].mxu0
      %v2940 = vadd.f32 %v2867, %v2939
      %v2941 = vpop.f32.mrb[0].mxu0
      %v2942 = vadd.f32 %v2869, %v2941
      %v2943 = vpop.f32.mrb[0].mxu0
      %v2944 = vadd.f32 %v2871, %v2943
      %v2945 = vpop.f32.mrb[0].mxu0
      %v2946 = vadd.f32 %v2873, %v2945
      %2947 = vdwg.mxu0
      %2948 = vmatprep.subr.bf16.mxu0 %v2173
      %2949 = vmatpush1.bf16.msra.mxu0 %v2172
      %2950 = vmatprep.subr.bf16.mxu0 %v2183
      %2951 = vmatpush1.bf16.msra.mxu0 %v2182
      %2952 = vmatprep.subr.bf16.mxu0 %v2193
      %2953 = vmatpush1.bf16.msra.mxu0 %v2192
      %2954 = vmatprep.subr.bf16.mxu0 %v2203
      %2955 = vmatpush1.bf16.msra.mxu0 %v2202
      %2956 = vmatprep.subr.bf16.mxu0 0
      %2957 = vmatpush1.bf16.msra.mxu0 0
      %2958 = vmatprep.subr.bf16.mxu0 0
      %2959 = vmatpush1.bf16.msra.mxu0 0
      %2960 = vmatprep.subr.bf16.mxu0 0
      %2961 = vmatpush1.bf16.msra.mxu0 0
      %2962 = vmatprep.subr.bf16.mxu0 0
      %2963 = vmatpush1.bf16.msra.mxu0 0
      %2964 = vmatprep.subr.bf16.mxu0 0
      %2965 = vmatpush1.bf16.msra.mxu0 0
      %2966 = vmatprep.subr.bf16.mxu0 0
      %2967 = vmatpush1.bf16.msra.mxu0 0
      %2968 = vmatprep.subr.bf16.mxu0 0
      %2969 = vmatpush1.bf16.msra.mxu0 0
      %2970 = vmatprep.subr.bf16.mxu0 0
      %2971 = vmatpush1.bf16.msra.mxu0 0
      %2972 = vmatprep.subr.bf16.mxu0 0
      %2973 = vmatpush1.bf16.msra.mxu0 0
      %2974 = vmatprep.subr.bf16.mxu0 0
      %2975 = vmatpush1.bf16.msra.mxu0 0
      %2976 = vmatprep.subr.bf16.mxu0 0
      %2977 = vmatpush1.bf16.msra.mxu0 0
      %2978 = vmatprep.subr.bf16.mxu0 0
      %2979 = vmatpush1.bf16.msra.mxu0 0
      %2980 = vmatprep.mubr.bf16.mxu0 0
      %2981 = vmatmul.mubr.bf16.gmra.mrb[0].mxu0 %v2572
      %v2982 = vpop.f32.mrb[0].mxu0
      %v2983 = vadd.f32 %v2910, %v2982
      %v2984 = vpop.f32.mrb[0].mxu0
      %v2985 = vadd.f32 %v2912, %v2984
      %v2986 = vpop.f32.mrb[0].mxu0
      %v2987 = vadd.f32 %v2914, %v2986
      %v2988 = vpop.f32.mrb[0].mxu0
      %v2989 = vadd.f32 %v2916, %v2988
      %2990 = vmatprep.mubr.bf16.mxu0 0
      %2991 = vmatmul.mubr.bf16.gmra.mrb[0].mxu0 %v2575
      %v2992 = vpop.f32.mrb[0].mxu0
      %v2993 = vadd.f32 %v2920, %v2992
      %v2994 = vpop.f32.mrb[0].mxu0
      %v2995 = vadd.f32 %v2922, %v2994
      %v2996 = vpop.f32.mrb[0].mxu0
      %v2997 = vadd.f32 %v2924, %v2996
      %v2998 = vpop.f32.mrb[0].mxu0
      %v2999 = vadd.f32 %v2926, %v2998
      %3000 = vmatprep.mubr.bf16.mxu0 0
      %3001 = vmatmul.mubr.bf16.gmra.mrb[0].mxu0 %v2578
      %v3002 = vpop.f32.mrb[0].mxu0
      %v3003 = vadd.f32 %v2930, %v3002
      %v3004 = vpop.f32.mrb[0].mxu0
      %v3005 = vadd.f32 %v2932, %v3004
      %v3006 = vpop.f32.mrb[0].mxu0
      %v3007 = vadd.f32 %v2934, %v3006
      %v3008 = vpop.f32.mrb[0].mxu0
      %v3009 = vadd.f32 %v2936, %v3008
      %3010 = vmatprep.mubr.bf16.mxu0 0
      %3011 = vmatmul.mubr.bf16.gmra.mrb[0].mxu0 %v2581
      %v3012 = vpop.f32.mrb[0].mxu0
      %v3013 = vadd.f32 %v2940, %v3012
      %v3014 = vpop.f32.mrb[0].mxu0
      %v3015 = vadd.f32 %v2942, %v3014
      %v3016 = vpop.f32.mrb[0].mxu0
      %v3017 = vadd.f32 %v2944, %v3016
      %v3018 = vpop.f32.mrb[0].mxu0
      %v3019 = vadd.f32 %v2946, %v3018
      %3020 = vdwg.mxu0
      %3021 = vmatprep.subr.bf16.mxu0 %v1855
      %3022 = vmatpush1.bf16.msra.mxu0 %v1854
      %3023 = vmatprep.subr.bf16.mxu0 %v1865
      %3024 = vmatpush1.bf16.msra.mxu0 %v1864
      %3025 = vmatprep.subr.bf16.mxu0 %v1875
      %3026 = vmatpush1.bf16.msra.mxu0 %v1874
      %3027 = vmatprep.subr.bf16.mxu0 %v1885
      %3028 = vmatpush1.bf16.msra.mxu0 %v1884
      %3029 = vmatprep.subr.bf16.mxu0 %v1895
      %3030 = vmatpush1.bf16.msra.mxu0 %v1894
      %3031 = vmatprep.subr.bf16.mxu0 %v1905
      %3032 = vmatpush1.bf16.msra.mxu0 %v1904
      %3033 = vmatprep.subr.bf16.mxu0 %v1915
      %3034 = vmatpush1.bf16.msra.mxu0 %v1914
      %3035 = vmatprep.subr.bf16.mxu0 %v1925
      %3036 = vmatpush1.bf16.msra.mxu0 %v1924
      %3037 = vmatprep.subr.bf16.mxu0 %v1935
      %3038 = vmatpush1.bf16.msra.mxu0 %v1934
      %3039 = vmatprep.subr.bf16.mxu0 %v1945
      %3040 = vmatpush1.bf16.msra.mxu0 %v1944
      %3041 = vmatprep.subr.bf16.mxu0 %v1955
      %3042 = vmatpush1.bf16.msra.mxu0 %v1954
      %3043 = vmatprep.subr.bf16.mxu0 %v1965
      %3044 = vmatpush1.bf16.msra.mxu0 %v1964
      %3045 = vmatprep.subr.bf16.mxu0 %v1975
      %3046 = vmatpush1.bf16.msra.mxu0 %v1974
      %3047 = vmatprep.subr.bf16.mxu0 %v1985
      %3048 = vmatpush1.bf16.msra.mxu0 %v1984
      %3049 = vmatprep.subr.bf16.mxu0 %v1995
      %3050 = vmatpush1.bf16.msra.mxu0 %v1994
      %3051 = vmatprep.subr.bf16.mxu0 %v2005
      %3052 = vmatpush1.bf16.msra.mxu0 %v2004
      %3053 = vmatprep.mubr.bf16.mxu0 %v735
      %3054 = vmatmul.mubr.bf16.gmra.mrb[0].mxu0 %v734
      %v3055 = vpop.f32.mrb[0].mxu0
      %v3056 = vadd.f32 %v639, %v3055
      %v3057 = vpop.f32.mrb[0].mxu0
      %v3058 = vadd.f32 %v643, %v3057
      %v3059 = vpop.f32.mrb[0].mxu0
      %v3060 = vadd.f32 %v639, %v3059
      %v3061 = vpop.f32.mrb[0].mxu0
      %v3062 = vadd.f32 %v643, %v3061
      %3063 = vmatprep.mubr.bf16.mxu0 %v740
      %3064 = vmatmul.mubr.bf16.gmra.mrb[0].mxu0 %v739
      %v3065 = vpop.f32.mrb[0].mxu0
      %v3066 = vadd.f32 %v639, %v3065
      %v3067 = vpop.f32.mrb[0].mxu0
      %v3068 = vadd.f32 %v643, %v3067
      %v3069 = vpop.f32.mrb[0].mxu0
      %v3070 = vadd.f32 %v639, %v3069
      %v3071 = vpop.f32.mrb[0].mxu0
      %v3072 = vadd.f32 %v643, %v3071
      %3073 = vmatprep.mubr.bf16.mxu0 %v745
      %3074 = vmatmul.mubr.bf16.gmra.mrb[0].mxu0 %v744
      %v3075 = vpop.f32.mrb[0].mxu0
      %v3076 = vadd.f32 %v639, %v3075
      %v3077 = vpop.f32.mrb[0].mxu0
      %v3078 = vadd.f32 %v643, %v3077
      %v3079 = vpop.f32.mrb[0].mxu0
      %v3080 = vadd.f32 %v639, %v3079
      %v3081 = vpop.f32.mrb[0].mxu0
      %v3082 = vadd.f32 %v643, %v3081
      %3083 = vmatprep.mubr.bf16.mxu0 %v750
      %3084 = vmatmul.mubr.bf16.gmra.mrb[0].mxu0 %v749
      %v3085 = vpop.f32.mrb[0].mxu0
      %v3086 = vadd.f32 %v639, %v3085
      %v3087 = vpop.f32.mrb[0].mxu0
      %v3088 = vadd.f32 %v643, %v3087
      %v3089 = vpop.f32.mrb[0].mxu0
      %v3090 = vadd.f32 %v639, %v3089
      %v3091 = vpop.f32.mrb[0].mxu0
      %v3092 = vadd.f32 %v643, %v3091
      %3093 = vdwg.mxu0
      %3094 = vmatprep.subr.bf16.mxu0 %v2015
      %3095 = vmatpush1.bf16.msra.mxu0 %v2014
      %3096 = vmatprep.subr.bf16.mxu0 %v2025
      %3097 = vmatpush1.bf16.msra.mxu0 %v2024
      %3098 = vmatprep.subr.bf16.mxu0 %v2035
      %3099 = vmatpush1.bf16.msra.mxu0 %v2034
      %3100 = vmatprep.subr.bf16.mxu0 %v2045
      %3101 = vmatpush1.bf16.msra.mxu0 %v2044
      %3102 = vmatprep.subr.bf16.mxu0 %v2055
      %3103 = vmatpush1.bf16.msra.mxu0 %v2054
      %3104 = vmatprep.subr.bf16.mxu0 %v2065
      %3105 = vmatpush1.bf16.msra.mxu0 %v2064
      %3106 = vmatprep.subr.bf16.mxu0 %v2075
      %3107 = vmatpush1.bf16.msra.mxu0 %v2074
      %3108 = vmatprep.subr.bf16.mxu0 %v2085
      %3109 = vmatpush1.bf16.msra.mxu0 %v2084
      %3110 = vmatprep.subr.bf16.mxu0 %v2095
      %3111 = vmatpush1.bf16.msra.mxu0 %v2094
      %3112 = vmatprep.subr.bf16.mxu0 %v2105
      %3113 = vmatpush1.bf16.msra.mxu0 %v2104
      %3114 = vmatprep.subr.bf16.mxu0 %v2115
      %3115 = vmatpush1.bf16.msra.mxu0 %v2114
      %3116 = vmatprep.subr.bf16.mxu0 %v2125
      %3117 = vmatpush1.bf16.msra.mxu0 %v2124
      %3118 = vmatprep.subr.bf16.mxu0 %v2135
      %3119 = vmatpush1.bf16.msra.mxu0 %v2134
      %3120 = vmatprep.subr.bf16.mxu0 %v2145
      %3121 = vmatpush1.bf16.msra.mxu0 %v2144
      %3122 = vmatprep.subr.bf16.mxu0 %v2155
      %3123 = vmatpush1.bf16.msra.mxu0 %v2154
      %3124 = vmatprep.subr.bf16.mxu0 %v2165
      %3125 = vmatpush1.bf16.msra.mxu0 %v2164
      %3126 = vmatprep.mubr.bf16.mxu0 %v737
      %3127 = vmatmul.mubr.bf16.gmra.mrb[0].mxu0 %v736
      %v3128 = vpop.f32.mrb[0].mxu0
      %v3129 = vadd.f32 %v3056, %v3128
      %v3130 = vpop.f32.mrb[0].mxu0
      %v3131 = vadd.f32 %v3058, %v3130
      %v3132 = vpop.f32.mrb[0].mxu0
      %v3133 = vadd.f32 %v3060, %v3132
      %v3134 = vpop.f32.mrb[0].mxu0
      %v3135 = vadd.f32 %v3062, %v3134
      %3136 = vmatprep.mubr.bf16.mxu0 %v742
      %3137 = vmatmul.mubr.bf16.gmra.mrb[0].mxu0 %v741
      %v3138 = vpop.f32.mrb[0].mxu0
      %v3139 = vadd.f32 %v3066, %v3138
      %v3140 = vpop.f32.mrb[0].mxu0
      %v3141 = vadd.f32 %v3068, %v3140
      %v3142 = vpop.f32.mrb[0].mxu0
      %v3143 = vadd.f32 %v3070, %v3142
      %v3144 = vpop.f32.mrb[0].mxu0
      %v3145 = vadd.f32 %v3072, %v3144
      %3146 = vmatprep.mubr.bf16.mxu0 %v747
      %3147 = vmatmul.mubr.bf16.gmra.mrb[0].mxu0 %v746
      %v3148 = vpop.f32.mrb[0].mxu0
      %v3149 = vadd.f32 %v3076, %v3148
      %v3150 = vpop.f32.mrb[0].mxu0
      %v3151 = vadd.f32 %v3078, %v3150
      %v3152 = vpop.f32.mrb[0].mxu0
      %v3153 = vadd.f32 %v3080, %v3152
      %v3154 = vpop.f32.mrb[0].mxu0
      %v3155 = vadd.f32 %v3082, %v3154
      %3156 = vmatprep.mubr.bf16.mxu0 %v752
      %3157 = vmatmul.mubr.bf16.gmra.mrb[0].mxu0 %v751
      %v3158 = vpop.f32.mrb[0].mxu0
      %v3159 = vadd.f32 %v3086, %v3158
      %v3160 = vpop.f32.mrb[0].mxu0
      %v3161 = vadd.f32 %v3088, %v3160
      %v3162 = vpop.f32.mrb[0].mxu0
      %v3163 = vadd.f32 %v3090, %v3162
      %v3164 = vpop.f32.mrb[0].mxu0
      %v3165 = vadd.f32 %v3092, %v3164
      %3166 = vdwg.mxu0
      %3167 = vmatprep.subr.bf16.mxu0 %v2175
      %3168 = vmatpush1.bf16.msra.mxu0 %v2174
      %3169 = vmatprep.subr.bf16.mxu0 %v2185
      %3170 = vmatpush1.bf16.msra.mxu0 %v2184
      %3171 = vmatprep.subr.bf16.mxu0 %v2195
      %3172 = vmatpush1.bf16.msra.mxu0 %v2194
      %3173 = vmatprep.subr.bf16.mxu0 %v2205
      %3174 = vmatpush1.bf16.msra.mxu0 %v2204
      %3175 = vmatprep.subr.bf16.mxu0 0
      %3176 = vmatpush1.bf16.msra.mxu0 0
      %3177 = vmatprep.subr.bf16.mxu0 0
      %3178 = vmatpush1.bf16.msra.mxu0 0
      %3179 = vmatprep.subr.bf16.mxu0 0
      %3180 = vmatpush1.bf16.msra.mxu0 0
      %3181 = vmatprep.subr.bf16.mxu0 0
      %3182 = vmatpush1.bf16.msra.mxu0 0
      %3183 = vmatprep.subr.bf16.mxu0 0
      %3184 = vmatpush1.bf16.msra.mxu0 0
      %3185 = vmatprep.subr.bf16.mxu0 0
      %3186 = vmatpush1.bf16.msra.mxu0 0
      %3187 = vmatprep.subr.bf16.mxu0 0
      %3188 = vmatpush1.bf16.msra.mxu0 0
      %3189 = vmatprep.subr.bf16.mxu0 0
      %3190 = vmatpush1.bf16.msra.mxu0 0
      %3191 = vmatprep.subr.bf16.mxu0 0
      %3192 = vmatpush1.bf16.msra.mxu0 0
      %3193 = vmatprep.subr.bf16.mxu0 0
      %3194 = vmatpush1.bf16.msra.mxu0 0
      %3195 = vmatprep.subr.bf16.mxu0 0
      %3196 = vmatpush1.bf16.msra.mxu0 0
      %3197 = vmatprep.subr.bf16.mxu0 0
      %3198 = vmatpush1.bf16.msra.mxu0 0
      %3199 = vmatprep.mubr.bf16.mxu0 0
      %3200 = vmatmul.mubr.bf16.gmra.mrb[0].mxu0 %v2572
      %v3201 = vpop.f32.mrb[0].mxu0
      %v3202 = vadd.f32 %v3129, %v3201
      %v3203 = vpop.f32.mrb[0].mxu0
      %v3204 = vadd.f32 %v3131, %v3203
      %v3205 = vpop.f32.mrb[0].mxu0
      %v3206 = vadd.f32 %v3133, %v3205
      %v3207 = vpop.f32.mrb[0].mxu0
      %v3208 = vadd.f32 %v3135, %v3207
      %3209 = vmatprep.mubr.bf16.mxu0 0
      %3210 = vmatmul.mubr.bf16.gmra.mrb[0].mxu0 %v2575
      %v3211 = vpop.f32.mrb[0].mxu0
      %v3212 = vadd.f32 %v3139, %v3211
      %v3213 = vpop.f32.mrb[0].mxu0
      %v3214 = vadd.f32 %v3141, %v3213
      %v3215 = vpop.f32.mrb[0].mxu0
      %v3216 = vadd.f32 %v3143, %v3215
      %v3217 = vpop.f32.mrb[0].mxu0
      %v3218 = vadd.f32 %v3145, %v3217
      %3219 = vmatprep.mubr.bf16.mxu0 0
      %3220 = vmatmul.mubr.bf16.gmra.mrb[0].mxu0 %v2578
      %v3221 = vpop.f32.mrb[0].mxu0
      %v3222 = vadd.f32 %v3149, %v3221
      %v3223 = vpop.f32.mrb[0].mxu0
      %v3224 = vadd.f32 %v3151, %v3223
      %v3225 = vpop.f32.mrb[0].mxu0
      %v3226 = vadd.f32 %v3153, %v3225
      %v3227 = vpop.f32.mrb[0].mxu0
      %v3228 = vadd.f32 %v3155, %v3227
      %3229 = vmatprep.mubr.bf16.mxu0 0
      %3230 = vmatmul.mubr.bf16.gmra.mrb[0].mxu0 %v2581
      %v3231 = vpop.f32.mrb[0].mxu0
      %v3232 = vadd.f32 %v3159, %v3231
      %v3233 = vpop.f32.mrb[0].mxu0
      %v3234 = vadd.f32 %v3161, %v3233
      %v3235 = vpop.f32.mrb[0].mxu0
      %v3236 = vadd.f32 %v3163, %v3235
      %v3237 = vpop.f32.mrb[0].mxu0
      %v3238 = vadd.f32 %v3165, %v3237
      %3239 = vdwg.mxu0
      %3240 = vmatprep.subr.bf16.mxu0 %v1857
      %3241 = vmatpush1.bf16.msra.mxu0 %v1856
      %3242 = vmatprep.subr.bf16.mxu0 %v1867
      %3243 = vmatpush1.bf16.msra.mxu0 %v1866
      %3244 = vmatprep.subr.bf16.mxu0 %v1877
      %3245 = vmatpush1.bf16.msra.mxu0 %v1876
      %3246 = vmatprep.subr.bf16.mxu0 %v1887
      %3247 = vmatpush1.bf16.msra.mxu0 %v1886
      %3248 = vmatprep.subr.bf16.mxu0 %v1897
      %3249 = vmatpush1.bf16.msra.mxu0 %v1896
      %3250 = vmatprep.subr.bf16.mxu0 %v1907
      %3251 = vmatpush1.bf16.msra.mxu0 %v1906
      %3252 = vmatprep.subr.bf16.mxu0 %v1917
      %3253 = vmatpush1.bf16.msra.mxu0 %v1916
      %3254 = vmatprep.subr.bf16.mxu0 %v1927
      %3255 = vmatpush1.bf16.msra.mxu0 %v1926
      %3256 = vmatprep.subr.bf16.mxu0 %v1937
      %3257 = vmatpush1.bf16.msra.mxu0 %v1936
      %3258 = vmatprep.subr.bf16.mxu0 %v1947
      %3259 = vmatpush1.bf16.msra.mxu0 %v1946
      %3260 = vmatprep.subr.bf16.mxu0 %v1957
      %3261 = vmatpush1.bf16.msra.mxu0 %v1956
      %3262 = vmatprep.subr.bf16.mxu0 %v1967
      %3263 = vmatpush1.bf16.msra.mxu0 %v1966
      %3264 = vmatprep.subr.bf16.mxu0 %v1977
      %3265 = vmatpush1.bf16.msra.mxu0 %v1976
      %3266 = vmatprep.subr.bf16.mxu0 %v1987
      %3267 = vmatpush1.bf16.msra.mxu0 %v1986
      %3268 = vmatprep.subr.bf16.mxu0 %v1997
      %3269 = vmatpush1.bf16.msra.mxu0 %v1996
      %3270 = vmatprep.subr.bf16.mxu0 %v2007
      %3271 = vmatpush1.bf16.msra.mxu0 %v2006
      %3272 = vmatprep.mubr.bf16.mxu0 %v735
      %3273 = vmatmul.mubr.bf16.gmra.mrb[0].mxu0 %v734
      %v3274 = vpop.f32.mrb[0].mxu0
      %v3275 = vadd.f32 %v647, %v3274
      %v3276 = vpop.f32.mrb[0].mxu0
      %v3277 = vadd.f32 %v651, %v3276
      %v3278 = vpop.f32.mrb[0].mxu0
      %v3279 = vadd.f32 %v647, %v3278
      %v3280 = vpop.f32.mrb[0].mxu0
      %v3281 = vadd.f32 %v651, %v3280
      %3282 = vmatprep.mubr.bf16.mxu0 %v740
      %3283 = vmatmul.mubr.bf16.gmra.mrb[0].mxu0 %v739
      %v3284 = vpop.f32.mrb[0].mxu0
      %v3285 = vadd.f32 %v647, %v3284
      %v3286 = vpop.f32.mrb[0].mxu0
      %v3287 = vadd.f32 %v651, %v3286
      %v3288 = vpop.f32.mrb[0].mxu0
      %v3289 = vadd.f32 %v647, %v3288
      %v3290 = vpop.f32.mrb[0].mxu0
      %v3291 = vadd.f32 %v651, %v3290
      %3292 = vmatprep.mubr.bf16.mxu0 %v745
      %3293 = vmatmul.mubr.bf16.gmra.mrb[0].mxu0 %v744
      %v3294 = vpop.f32.mrb[0].mxu0
      %v3295 = vadd.f32 %v647, %v3294
      %v3296 = vpop.f32.mrb[0].mxu0
      %v3297 = vadd.f32 %v651, %v3296
      %v3298 = vpop.f32.mrb[0].mxu0
      %v3299 = vadd.f32 %v647, %v3298
      %v3300 = vpop.f32.mrb[0].mxu0
      %v3301 = vadd.f32 %v651, %v3300
      %3302 = vmatprep.mubr.bf16.mxu0 %v750
      %3303 = vmatmul.mubr.bf16.gmra.mrb[0].mxu0 %v749
      %v3304 = vpop.f32.mrb[0].mxu0
      %v3305 = vadd.f32 %v647, %v3304
      %v3306 = vpop.f32.mrb[0].mxu0
      %v3307 = vadd.f32 %v651, %v3306
      %v3308 = vpop.f32.mrb[0].mxu0
      %v3309 = vadd.f32 %v647, %v3308
      %v3310 = vpop.f32.mrb[0].mxu0
      %v3311 = vadd.f32 %v651, %v3310
      %3312 = vdwg.mxu0
      %3313 = vmatprep.subr.bf16.mxu0 %v2017
      %3314 = vmatpush1.bf16.msra.mxu0 %v2016
      %3315 = vmatprep.subr.bf16.mxu0 %v2027
      %3316 = vmatpush1.bf16.msra.mxu0 %v2026
      %3317 = vmatprep.subr.bf16.mxu0 %v2037
      %3318 = vmatpush1.bf16.msra.mxu0 %v2036
      %3319 = vmatprep.subr.bf16.mxu0 %v2047
      %3320 = vmatpush1.bf16.msra.mxu0 %v2046
      %3321 = vmatprep.subr.bf16.mxu0 %v2057
      %3322 = vmatpush1.bf16.msra.mxu0 %v2056
      %3323 = vmatprep.subr.bf16.mxu0 %v2067
      %3324 = vmatpush1.bf16.msra.mxu0 %v2066
      %3325 = vmatprep.subr.bf16.mxu0 %v2077
      %3326 = vmatpush1.bf16.msra.mxu0 %v2076
      %3327 = vmatprep.subr.bf16.mxu0 %v2087
      %3328 = vmatpush1.bf16.msra.mxu0 %v2086
      %3329 = vmatprep.subr.bf16.mxu0 %v2097
      %3330 = vmatpush1.bf16.msra.mxu0 %v2096
      %3331 = vmatprep.subr.bf16.mxu0 %v2107
      %3332 = vmatpush1.bf16.msra.mxu0 %v2106
      %3333 = vmatprep.subr.bf16.mxu0 %v2117
      %3334 = vmatpush1.bf16.msra.mxu0 %v2116
      %3335 = vmatprep.subr.bf16.mxu0 %v2127
      %3336 = vmatpush1.bf16.msra.mxu0 %v2126
      %3337 = vmatprep.subr.bf16.mxu0 %v2137
      %3338 = vmatpush1.bf16.msra.mxu0 %v2136
      %3339 = vmatprep.subr.bf16.mxu0 %v2147
      %3340 = vmatpush1.bf16.msra.mxu0 %v2146
      %3341 = vmatprep.subr.bf16.mxu0 %v2157
      %3342 = vmatpush1.bf16.msra.mxu0 %v2156
      %3343 = vmatprep.subr.bf16.mxu0 %v2167
      %3344 = vmatpush1.bf16.msra.mxu0 %v2166
      %3345 = vmatprep.mubr.bf16.mxu0 %v737
      %3346 = vmatmul.mubr.bf16.gmra.mrb[0].mxu0 %v736
      %v3347 = vpop.f32.mrb[0].mxu0
      %v3348 = vadd.f32 %v3275, %v3347
      %v3349 = vpop.f32.mrb[0].mxu0
      %v3350 = vadd.f32 %v3277, %v3349
      %v3351 = vpop.f32.mrb[0].mxu0
      %v3352 = vadd.f32 %v3279, %v3351
      %v3353 = vpop.f32.mrb[0].mxu0
      %v3354 = vadd.f32 %v3281, %v3353
      %3355 = vmatprep.mubr.bf16.mxu0 %v742
      %3356 = vmatmul.mubr.bf16.gmra.mrb[0].mxu0 %v741
      %v3357 = vpop.f32.mrb[0].mxu0
      %v3358 = vadd.f32 %v3285, %v3357
      %v3359 = vpop.f32.mrb[0].mxu0
      %v3360 = vadd.f32 %v3287, %v3359
      %v3361 = vpop.f32.mrb[0].mxu0
      %v3362 = vadd.f32 %v3289, %v3361
      %v3363 = vpop.f32.mrb[0].mxu0
      %v3364 = vadd.f32 %v3291, %v3363
      %3365 = vmatprep.mubr.bf16.mxu0 %v747
      %3366 = vmatmul.mubr.bf16.gmra.mrb[0].mxu0 %v746
      %v3367 = vpop.f32.mrb[0].mxu0
      %v3368 = vadd.f32 %v3295, %v3367
      %v3369 = vpop.f32.mrb[0].mxu0
      %v3370 = vadd.f32 %v3297, %v3369
      %v3371 = vpop.f32.mrb[0].mxu0
      %v3372 = vadd.f32 %v3299, %v3371
      %v3373 = vpop.f32.mrb[0].mxu0
      %v3374 = vadd.f32 %v3301, %v3373
      %3375 = vmatprep.mubr.bf16.mxu0 %v752
      %3376 = vmatmul.mubr.bf16.gmra.mrb[0].mxu0 %v751
      %v3377 = vpop.f32.mrb[0].mxu0
      %v3378 = vadd.f32 %v3305, %v3377
      %v3379 = vpop.f32.mrb[0].mxu0
      %v3380 = vadd.f32 %v3307, %v3379
      %v3381 = vpop.f32.mrb[0].mxu0
      %v3382 = vadd.f32 %v3309, %v3381
      %v3383 = vpop.f32.mrb[0].mxu0
      %v3384 = vadd.f32 %v3311, %v3383
      %3385 = vdwg.mxu0
      %3386 = vmatprep.subr.bf16.mxu0 %v2177
      %3387 = vmatpush1.bf16.msra.mxu0 %v2176
      %3388 = vmatprep.subr.bf16.mxu0 %v2187
      %3389 = vmatpush1.bf16.msra.mxu0 %v2186
      %3390 = vmatprep.subr.bf16.mxu0 %v2197
      %3391 = vmatpush1.bf16.msra.mxu0 %v2196
      %3392 = vmatprep.subr.bf16.mxu0 %v2207
      %3393 = vmatpush1.bf16.msra.mxu0 %v2206
      %3394 = vmatprep.subr.bf16.mxu0 0
      %3395 = vmatpush1.bf16.msra.mxu0 0
      %3396 = vmatprep.subr.bf16.mxu0 0
      %3397 = vmatpush1.bf16.msra.mxu0 0
      %3398 = vmatprep.subr.bf16.mxu0 0
      %3399 = vmatpush1.bf16.msra.mxu0 0
      %3400 = vmatprep.subr.bf16.mxu0 0
      %3401 = vmatpush1.bf16.msra.mxu0 0
      %3402 = vmatprep.subr.bf16.mxu0 0
      %3403 = vmatpush1.bf16.msra.mxu0 0
      %3404 = vmatprep.subr.bf16.mxu0 0
      %3405 = vmatpush1.bf16.msra.mxu0 0
      %3406 = vmatprep.subr.bf16.mxu0 0
      %3407 = vmatpush1.bf16.msra.mxu0 0
      %3408 = vmatprep.subr.bf16.mxu0 0
      %3409 = vmatpush1.bf16.msra.mxu0 0
      %3410 = vmatprep.subr.bf16.mxu0 0
      %3411 = vmatpush1.bf16.msra.mxu0 0
      %3412 = vmatprep.subr.bf16.mxu0 0
      %3413 = vmatpush1.bf16.msra.mxu0 0
      %3414 = vmatprep.subr.bf16.mxu0 0
      %3415 = vmatpush1.bf16.msra.mxu0 0
      %3416 = vmatprep.subr.bf16.mxu0 0
      %3417 = vmatpush1.bf16.msra.mxu0 0
      %3418 = vmatprep.mubr.bf16.mxu0 0
      %3419 = vmatmul.mubr.bf16.gmra.mrb[0].mxu0 %v2572
      %v3420 = vpop.f32.mrb[0].mxu0
      %v3421 = vadd.f32 %v3348, %v3420
      %v3422 = vpop.f32.mrb[0].mxu0
      %v3423 = vadd.f32 %v3350, %v3422
      %v3424 = vpop.f32.mrb[0].mxu0
      %v3425 = vadd.f32 %v3352, %v3424
      %v3426 = vpop.f32.mrb[0].mxu0
      %v3427 = vadd.f32 %v3354, %v3426
      %3428 = vmatprep.mubr.bf16.mxu0 0
      %3429 = vmatmul.mubr.bf16.gmra.mrb[0].mxu0 %v2575
      %v3430 = vpop.f32.mrb[0].mxu0
      %v3431 = vadd.f32 %v3358, %v3430
      %v3432 = vpop.f32.mrb[0].mxu0
      %v3433 = vadd.f32 %v3360, %v3432
      %v3434 = vpop.f32.mrb[0].mxu0
      %v3435 = vadd.f32 %v3362, %v3434
      %v3436 = vpop.f32.mrb[0].mxu0
      %v3437 = vadd.f32 %v3364, %v3436
      %3438 = vmatprep.mubr.bf16.mxu0 0
      %3439 = vmatmul.mubr.bf16.gmra.mrb[0].mxu0 %v2578
      %v3440 = vpop.f32.mrb[0].mxu0
      %v3441 = vadd.f32 %v3368, %v3440
      %v3442 = vpop.f32.mrb[0].mxu0
      %v3443 = vadd.f32 %v3370, %v3442
      %v3444 = vpop.f32.mrb[0].mxu0
      %v3445 = vadd.f32 %v3372, %v3444
      %v3446 = vpop.f32.mrb[0].mxu0
      %v3447 = vadd.f32 %v3374, %v3446
      %3448 = vmatprep.mubr.bf16.mxu0 0
      %3449 = vmatmul.mubr.bf16.gmra.mrb[0].mxu0 %v2581
      %v3450 = vpop.f32.mrb[0].mxu0
      %v3451 = vadd.f32 %v3378, %v3450
      %v3452 = vpop.f32.mrb[0].mxu0
      %v3453 = vadd.f32 %v3380, %v3452
      %v3454 = vpop.f32.mrb[0].mxu0
      %v3455 = vadd.f32 %v3382, %v3454
      %v3456 = vpop.f32.mrb[0].mxu0
      %v3457 = vadd.f32 %v3384, %v3456
      %3458 = vdwg.mxu0
      %3459 = vmatprep.subr.bf16.mxu0 %v1859
      %3460 = vmatpush1.bf16.msra.mxu0 %v1858
      %3461 = vmatprep.subr.bf16.mxu0 %v1869
      %3462 = vmatpush1.bf16.msra.mxu0 %v1868
      %3463 = vmatprep.subr.bf16.mxu0 %v1879
      %3464 = vmatpush1.bf16.msra.mxu0 %v1878
      %3465 = vmatprep.subr.bf16.mxu0 %v1889
      %3466 = vmatpush1.bf16.msra.mxu0 %v1888
      %3467 = vmatprep.subr.bf16.mxu0 %v1899
      %3468 = vmatpush1.bf16.msra.mxu0 %v1898
      %3469 = vmatprep.subr.bf16.mxu0 %v1909
      %3470 = vmatpush1.bf16.msra.mxu0 %v1908
      %3471 = vmatprep.subr.bf16.mxu0 %v1919
      %3472 = vmatpush1.bf16.msra.mxu0 %v1918
      %3473 = vmatprep.subr.bf16.mxu0 %v1929
      %3474 = vmatpush1.bf16.msra.mxu0 %v1928
      %3475 = vmatprep.subr.bf16.mxu0 %v1939
      %3476 = vmatpush1.bf16.msra.mxu0 %v1938
      %3477 = vmatprep.subr.bf16.mxu0 %v1949
      %3478 = vmatpush1.bf16.msra.mxu0 %v1948
      %3479 = vmatprep.subr.bf16.mxu0 %v1959
      %3480 = vmatpush1.bf16.msra.mxu0 %v1958
      %3481 = vmatprep.subr.bf16.mxu0 %v1969
      %3482 = vmatpush1.bf16.msra.mxu0 %v1968
      %3483 = vmatprep.subr.bf16.mxu0 %v1979
      %3484 = vmatpush1.bf16.msra.mxu0 %v1978
      %3485 = vmatprep.subr.bf16.mxu0 %v1989
      %3486 = vmatpush1.bf16.msra.mxu0 %v1988
      %3487 = vmatprep.subr.bf16.mxu0 %v1999
      %3488 = vmatpush1.bf16.msra.mxu0 %v1998
      %3489 = vmatprep.subr.bf16.mxu0 %v2009
      %3490 = vmatpush1.bf16.msra.mxu0 %v2008
      %3491 = vmatprep.mubr.bf16.mxu0 %v735
      %3492 = vmatmul.mubr.bf16.gmra.mrb[0].mxu0 %v734
      %v3493 = vpop.f32.mrb[0].mxu0
      %v3494 = vadd.f32 %v655, %v3493
      %v3495 = vpop.f32.mrb[0].mxu0
      %v3496 = vadd.f32 %v659, %v3495
      %v3497 = vpop.f32.mrb[0].mxu0
      %v3498 = vadd.f32 %v655, %v3497
      %v3499 = vpop.f32.mrb[0].mxu0
      %v3500 = vadd.f32 %v659, %v3499
      %3501 = vmatprep.mubr.bf16.mxu0 %v740
      %3502 = vmatmul.mubr.bf16.gmra.mrb[0].mxu0 %v739
      %v3503 = vpop.f32.mrb[0].mxu0
      %v3504 = vadd.f32 %v655, %v3503
      %v3505 = vpop.f32.mrb[0].mxu0
      %v3506 = vadd.f32 %v659, %v3505
      %v3507 = vpop.f32.mrb[0].mxu0
      %v3508 = vadd.f32 %v655, %v3507
      %v3509 = vpop.f32.mrb[0].mxu0
      %v3510 = vadd.f32 %v659, %v3509
      %3511 = vmatprep.mubr.bf16.mxu0 %v745
      %3512 = vmatmul.mubr.bf16.gmra.mrb[0].mxu0 %v744
      %v3513 = vpop.f32.mrb[0].mxu0
      %v3514 = vadd.f32 %v655, %v3513
      %v3515 = vpop.f32.mrb[0].mxu0
      %v3516 = vadd.f32 %v659, %v3515
      %v3517 = vpop.f32.mrb[0].mxu0
      %v3518 = vadd.f32 %v655, %v3517
      %v3519 = vpop.f32.mrb[0].mxu0
      %v3520 = vadd.f32 %v659, %v3519
      %3521 = vmatprep.mubr.bf16.mxu0 %v750
      %3522 = vmatmul.mubr.bf16.gmra.mrb[0].mxu0 %v749
      %v3523 = vpop.f32.mrb[0].mxu0
      %v3524 = vadd.f32 %v655, %v3523
      %v3525 = vpop.f32.mrb[0].mxu0
      %v3526 = vadd.f32 %v659, %v3525
      %v3527 = vpop.f32.mrb[0].mxu0
      %v3528 = vadd.f32 %v655, %v3527
      %v3529 = vpop.f32.mrb[0].mxu0
      %v3530 = vadd.f32 %v659, %v3529
      %3531 = vdwg.mxu0
      %3532 = vmatprep.subr.bf16.mxu0 %v2019
      %3533 = vmatpush1.bf16.msra.mxu0 %v2018
      %3534 = vmatprep.subr.bf16.mxu0 %v2029
      %3535 = vmatpush1.bf16.msra.mxu0 %v2028
      %3536 = vmatprep.subr.bf16.mxu0 %v2039
      %3537 = vmatpush1.bf16.msra.mxu0 %v2038
      %3538 = vmatprep.subr.bf16.mxu0 %v2049
      %3539 = vmatpush1.bf16.msra.mxu0 %v2048
      %3540 = vmatprep.subr.bf16.mxu0 %v2059
      %3541 = vmatpush1.bf16.msra.mxu0 %v2058
      %3542 = vmatprep.subr.bf16.mxu0 %v2069
      %3543 = vmatpush1.bf16.msra.mxu0 %v2068
      %3544 = vmatprep.subr.bf16.mxu0 %v2079
      %3545 = vmatpush1.bf16.msra.mxu0 %v2078
      %3546 = vmatprep.subr.bf16.mxu0 %v2089
      %3547 = vmatpush1.bf16.msra.mxu0 %v2088
      %3548 = vmatprep.subr.bf16.mxu0 %v2099
      %3549 = vmatpush1.bf16.msra.mxu0 %v2098
      %3550 = vmatprep.subr.bf16.mxu0 %v2109
      %3551 = vmatpush1.bf16.msra.mxu0 %v2108
      %3552 = vmatprep.subr.bf16.mxu0 %v2119
      %3553 = vmatpush1.bf16.msra.mxu0 %v2118
      %3554 = vmatprep.subr.bf16.mxu0 %v2129
      %3555 = vmatpush1.bf16.msra.mxu0 %v2128
      %3556 = vmatprep.subr.bf16.mxu0 %v2139
      %3557 = vmatpush1.bf16.msra.mxu0 %v2138
      %3558 = vmatprep.subr.bf16.mxu0 %v2149
      %3559 = vmatpush1.bf16.msra.mxu0 %v2148
      %3560 = vmatprep.subr.bf16.mxu0 %v2159
      %3561 = vmatpush1.bf16.msra.mxu0 %v2158
      %3562 = vmatprep.subr.bf16.mxu0 %v2169
      %3563 = vmatpush1.bf16.msra.mxu0 %v2168
      %3564 = vmatprep.mubr.bf16.mxu0 %v737
      %3565 = vmatmul.mubr.bf16.gmra.mrb[0].mxu0 %v736
      %v3566 = vpop.f32.mrb[0].mxu0
      %v3567 = vadd.f32 %v3494, %v3566
      %v3568 = vpop.f32.mrb[0].mxu0
      %v3569 = vadd.f32 %v3496, %v3568
      %v3570 = vpop.f32.mrb[0].mxu0
      %v3571 = vadd.f32 %v3498, %v3570
      %v3572 = vpop.f32.mrb[0].mxu0
      %v3573 = vadd.f32 %v3500, %v3572
      %3574 = vmatprep.mubr.bf16.mxu0 %v742
      %3575 = vmatmul.mubr.bf16.gmra.mrb[0].mxu0 %v741
      %v3576 = vpop.f32.mrb[0].mxu0
      %v3577 = vadd.f32 %v3504, %v3576
      %v3578 = vpop.f32.mrb[0].mxu0
      %v3579 = vadd.f32 %v3506, %v3578
      %v3580 = vpop.f32.mrb[0].mxu0
      %v3581 = vadd.f32 %v3508, %v3580
      %v3582 = vpop.f32.mrb[0].mxu0
      %v3583 = vadd.f32 %v3510, %v3582
      %3584 = vmatprep.mubr.bf16.mxu0 %v747
      %3585 = vmatmul.mubr.bf16.gmra.mrb[0].mxu0 %v746
      %v3586 = vpop.f32.mrb[0].mxu0
      %v3587 = vadd.f32 %v3514, %v3586
      %v3588 = vpop.f32.mrb[0].mxu0
      %v3589 = vadd.f32 %v3516, %v3588
      %v3590 = vpop.f32.mrb[0].mxu0
      %v3591 = vadd.f32 %v3518, %v3590
      %v3592 = vpop.f32.mrb[0].mxu0
      %v3593 = vadd.f32 %v3520, %v3592
      %3594 = vmatprep.mubr.bf16.mxu0 %v752
      %3595 = vmatmul.mubr.bf16.gmra.mrb[0].mxu0 %v751
      %v3596 = vpop.f32.mrb[0].mxu0
      %v3597 = vadd.f32 %v3524, %v3596
      %v3598 = vpop.f32.mrb[0].mxu0
      %v3599 = vadd.f32 %v3526, %v3598
      %v3600 = vpop.f32.mrb[0].mxu0
      %v3601 = vadd.f32 %v3528, %v3600
      %v3602 = vpop.f32.mrb[0].mxu0
      %v3603 = vadd.f32 %v3530, %v3602
      %3604 = vdwg.mxu0
      %3605 = vmatprep.subr.bf16.mxu0 %v2179
      %3606 = vmatpush1.bf16.msra.mxu0 %v2178
      %3607 = vmatprep.subr.bf16.mxu0 %v2189
      %3608 = vmatpush1.bf16.msra.mxu0 %v2188
      %3609 = vmatprep.subr.bf16.mxu0 %v2199
      %3610 = vmatpush1.bf16.msra.mxu0 %v2198
      %3611 = vmatprep.subr.bf16.mxu0 %v2209
      %3612 = vmatpush1.bf16.msra.mxu0 %v2208
      %3613 = vmatprep.subr.bf16.mxu0 0
      %3614 = vmatpush1.bf16.msra.mxu0 0
      %3615 = vmatprep.subr.bf16.mxu0 0
      %3616 = vmatpush1.bf16.msra.mxu0 0
      %3617 = vmatprep.subr.bf16.mxu0 0
      %3618 = vmatpush1.bf16.msra.mxu0 0
      %3619 = vmatprep.subr.bf16.mxu0 0
      %3620 = vmatpush1.bf16.msra.mxu0 0
      %3621 = vmatprep.subr.bf16.mxu0 0
      %3622 = vmatpush1.bf16.msra.mxu0 0
      %3623 = vmatprep.subr.bf16.mxu0 0
      %3624 = vmatpush1.bf16.msra.mxu0 0
      %3625 = vmatprep.subr.bf16.mxu0 0
      %3626 = vmatpush1.bf16.msra.mxu0 0
      %3627 = vmatprep.subr.bf16.mxu0 0
      %3628 = vmatpush1.bf16.msra.mxu0 0
      %3629 = vmatprep.subr.bf16.mxu0 0
      %3630 = vmatpush1.bf16.msra.mxu0 0
      %3631 = vmatprep.subr.bf16.mxu0 0
      %3632 = vmatpush1.bf16.msra.mxu0 0
      %3633 = vmatprep.subr.bf16.mxu0 0
      %3634 = vmatpush1.bf16.msra.mxu0 0
      %3635 = vmatprep.subr.bf16.mxu0 0
      %3636 = vmatpush1.bf16.msra.mxu0 0
      %3637 = vmatprep.mubr.bf16.mxu0 0
      %3638 = vmatmul.mubr.bf16.gmra.mrb[0].mxu0 %v2572
      %v3639 = vpop.f32.mrb[0].mxu0
      %v3640 = vadd.f32 %v3567, %v3639
      %v3641 = vpop.f32.mrb[0].mxu0
      %v3642 = vadd.f32 %v3569, %v3641
      %v3643 = vpop.f32.mrb[0].mxu0
      %v3644 = vadd.f32 %v3571, %v3643
      %v3645 = vpop.f32.mrb[0].mxu0
      %v3646 = vadd.f32 %v3573, %v3645
      %3647 = vmatprep.mubr.bf16.mxu0 0
      %3648 = vmatmul.mubr.bf16.gmra.mrb[0].mxu0 %v2575
      %v3649 = vpop.f32.mrb[0].mxu0
      %v3650 = vadd.f32 %v3577, %v3649
      %v3651 = vpop.f32.mrb[0].mxu0
      %v3652 = vadd.f32 %v3579, %v3651
      %v3653 = vpop.f32.mrb[0].mxu0
      %v3654 = vadd.f32 %v3581, %v3653
      %v3655 = vpop.f32.mrb[0].mxu0
      %v3656 = vadd.f32 %v3583, %v3655
      %3657 = vmatprep.mubr.bf16.mxu0 0
      %3658 = vmatmul.mubr.bf16.gmra.mrb[0].mxu0 %v2578
      %v3659 = vpop.f32.mrb[0].mxu0
      %v3660 = vadd.f32 %v3587, %v3659
      %v3661 = vpop.f32.mrb[0].mxu0
      %v3662 = vadd.f32 %v3589, %v3661
      %v3663 = vpop.f32.mrb[0].mxu0
      %v3664 = vadd.f32 %v3591, %v3663
      %v3665 = vpop.f32.mrb[0].mxu0
      %v3666 = vadd.f32 %v3593, %v3665
      %3667 = vmatprep.mubr.bf16.mxu0 0
      %3668 = vmatmul.mubr.bf16.gmra.mrb[0].mxu0 %v2581
      %v3669 = vpop.f32.mrb[0].mxu0
      %v3670 = vadd.f32 %v3597, %v3669
      %v3671 = vpop.f32.mrb[0].mxu0
      %v3672 = vadd.f32 %v3599, %v3671
      %v3673 = vpop.f32.mrb[0].mxu0
      %v3674 = vadd.f32 %v3601, %v3673
      %v3675 = vpop.f32.mrb[0].mxu0
      %v3676 = vadd.f32 %v3603, %v3675
      %3677 = vdwg.mxu0
      %v3678 = vmax.f32 %v2764, 0.0
      %v3679 = vmax.f32 %v2766, 0.0
      %v3680 = vmax.f32 %v2983, 0.0
      %v3681 = vmax.f32 %v2985, 0.0
      %v3682 = vmax.f32 %v3202, 0.0
      %v3683 = vmax.f32 %v3204, 0.0
      %v3684 = vmax.f32 %v3421, 0.0
      %v3685 = vmax.f32 %v3423, 0.0
      %v3686 = vmax.f32 %v3640, 0.0
      %v3687 = vmax.f32 %v3642, 0.0
      %v3688 = vmax.f32 %v2768, 0.0
      %v3689 = vmax.f32 %v2770, 0.0
      %v3690 = vmax.f32 %v2987, 0.0
      %v3691 = vmax.f32 %v2989, 0.0
      %v3692 = vmax.f32 %v3206, 0.0
      %v3693 = vmax.f32 %v3208, 0.0
      %v3694 = vmax.f32 %v3425, 0.0
      %v3695 = vmax.f32 %v3427, 0.0
      %v3696 = vmax.f32 %v3644, 0.0
      %v3697 = vmax.f32 %v3646, 0.0
      %v3698 = vmax.f32 %v2774, 0.0
      %v3699 = vmax.f32 %v2776, 0.0
      %v3700 = vmax.f32 %v2993, 0.0
      %v3701 = vmax.f32 %v2995, 0.0
      %v3702 = vmax.f32 %v3212, 0.0
      %v3703 = vmax.f32 %v3214, 0.0
      %v3704 = vmax.f32 %v3431, 0.0
      %v3705 = vmax.f32 %v3433, 0.0
      %v3706 = vmax.f32 %v3650, 0.0
      %v3707 = vmax.f32 %v3652, 0.0
      %v3708 = vmax.f32 %v2778, 0.0
      %v3709 = vmax.f32 %v2780, 0.0
      %v3710 = vmax.f32 %v2997, 0.0
      %v3711 = vmax.f32 %v2999, 0.0
      %v3712 = vmax.f32 %v3216, 0.0
      %v3713 = vmax.f32 %v3218, 0.0
      %v3714 = vmax.f32 %v3435, 0.0
      %v3715 = vmax.f32 %v3437, 0.0
      %v3716 = vmax.f32 %v3654, 0.0
      %v3717 = vmax.f32 %v3656, 0.0
      %v3718 = vmax.f32 %v2784, 0.0
      %v3719 = vmax.f32 %v2786, 0.0
      %v3720 = vmax.f32 %v3003, 0.0
      %v3721 = vmax.f32 %v3005, 0.0
      %v3722 = vmax.f32 %v3222, 0.0
      %v3723 = vmax.f32 %v3224, 0.0
      %v3724 = vmax.f32 %v3441, 0.0
      %v3725 = vmax.f32 %v3443, 0.0
      %v3726 = vmax.f32 %v3660, 0.0
      %v3727 = vmax.f32 %v3662, 0.0
      %v3728 = vmax.f32 %v2788, 0.0
      %v3729 = vmax.f32 %v2790, 0.0
      %v3730 = vmax.f32 %v3007, 0.0
      %v3731 = vmax.f32 %v3009, 0.0
      %v3732 = vmax.f32 %v3226, 0.0
      %v3733 = vmax.f32 %v3228, 0.0
      %v3734 = vmax.f32 %v3445, 0.0
      %v3735 = vmax.f32 %v3447, 0.0
      %v3736 = vmax.f32 %v3664, 0.0
      %v3737 = vmax.f32 %v3666, 0.0
      %v3738 = vmax.f32 %v2794, 0.0
      %v3739 = vmax.f32 %v2796, 0.0
      %v3740 = vmax.f32 %v3013, 0.0
      %v3741 = vmax.f32 %v3015, 0.0
      %v3742 = vmax.f32 %v3232, 0.0
      %v3743 = vmax.f32 %v3234, 0.0
      %v3744 = vmax.f32 %v3451, 0.0
      %v3745 = vmax.f32 %v3453, 0.0
      %v3746 = vmax.f32 %v3670, 0.0
      %v3747 = vmax.f32 %v3672, 0.0
      %v3748 = vmax.f32 %v2798, 0.0
      %v3749 = vmax.f32 %v2800, 0.0
      %v3750 = vmax.f32 %v3017, 0.0
      %v3751 = vmax.f32 %v3019, 0.0
      %v3752 = vmax.f32 %v3236, 0.0
      %v3753 = vmax.f32 %v3238, 0.0
      %v3754 = vmax.f32 %v3455, 0.0
      %v3755 = vmax.f32 %v3457, 0.0
      %v3756 = vmax.f32 %v3674, 0.0
      %v3757 = vmax.f32 %v3676, 0.0
      %v3758 = vpack.c.bf16 %v3688, %v3678
      %v3759 = vpack.c.bf16 %v3689, %v3679
      %v3760 = vpack.c.bf16 %v3690, %v3680
      %v3761 = vpack.c.bf16 %v3691, %v3681
      %v3762 = vpack.c.bf16 %v3692, %v3682
      %v3763 = vpack.c.bf16 %v3693, %v3683
      %v3764 = vpack.c.bf16 %v3694, %v3684
      %v3765 = vpack.c.bf16 %v3695, %v3685
      %v3766 = vpack.c.bf16 %v3696, %v3686
      %v3767 = vpack.c.bf16 %v3697, %v3687
      %v3768 = vpack.c.bf16 %v3708, %v3698
      %v3769 = vpack.c.bf16 %v3709, %v3699
      %v3770 = vpack.c.bf16 %v3710, %v3700
      %v3771 = vpack.c.bf16 %v3711, %v3701
      %v3772 = vpack.c.bf16 %v3712, %v3702
      %v3773 = vpack.c.bf16 %v3713, %v3703
      %v3774 = vpack.c.bf16 %v3714, %v3704
      %v3775 = vpack.c.bf16 %v3715, %v3705
      %v3776 = vpack.c.bf16 %v3716, %v3706
      %v3777 = vpack.c.bf16 %v3717, %v3707
      %v3778 = vpack.c.bf16 %v3728, %v3718
      %v3779 = vpack.c.bf16 %v3729, %v3719
      %v3780 = vpack.c.bf16 %v3730, %v3720
      %v3781 = vpack.c.bf16 %v3731, %v3721
      %v3782 = vpack.c.bf16 %v3732, %v3722
      %v3783 = vpack.c.bf16 %v3733, %v3723
      %v3784 = vpack.c.bf16 %v3734, %v3724
      %v3785 = vpack.c.bf16 %v3735, %v3725
      %v3786 = vpack.c.bf16 %v3736, %v3726
      %v3787 = vpack.c.bf16 %v3737, %v3727
      %v3788 = vpack.c.bf16 %v3748, %v3738
      %v3789 = vpack.c.bf16 %v3749, %v3739
      %v3790 = vpack.c.bf16 %v3750, %v3740
      %v3791 = vpack.c.bf16 %v3751, %v3741
      %v3792 = vpack.c.bf16 %v3752, %v3742
      %v3793 = vpack.c.bf16 %v3753, %v3743
      %v3794 = vpack.c.bf16 %v3754, %v3744
      %v3795 = vpack.c.bf16 %v3755, %v3745
      %v3796 = vpack.c.bf16 %v3756, %v3746
      %v3797 = vpack.c.bf16 %v3757, %v3747
      %v3798 = vld [vmem:[%s3] sm:$0xf]
      %v3799 = vld [vmem:[%s3 + $0x4] sm:$0xf]
      %v3800 = vld [vmem:[%s3 + $0x8] sm:$0xf]
      %v3801 = vld [vmem:[%s3 + $0xc] sm:$0xf]
      %v3802 = vld [vmem:[%s3 + $0x10] sm:$0xf]
      %v3803 = vld [vmem:[%s3 + $0x14] sm:$0xf]
      %v3804 = vld [vmem:[%s3 + $0x18] sm:$0xf]
      %v3805 = vld [vmem:[%s3 + $0x1c] sm:$0xf]
      %v3806 = vld [vmem:[%s3 + $0x20] sm:$0xf]
      %v3807 = vld [vmem:[%s3 + $0x24] sm:$0xf]
      %v3808 = vld [vmem:[%s3 + $0x28] sm:$0xf]
      %v3809 = vld [vmem:[%s3 + $0x2c] sm:$0xf]
      %v3810 = vld [vmem:[%s3 + $0x30] sm:$0xf]
      %v3811 = vld [vmem:[%s3 + $0x34] sm:$0xf]
      %v3812 = vld [vmem:[%s3 + $0x38] sm:$0xf]
      %v3813 = vld [vmem:[%s3 + $0x3c] sm:$0xf]
      %v3814 = vld [vmem:[%s3 + $0x40] sm:$0xf]
      %v3815 = vld [vmem:[%s3 + $0x44] sm:$0xf]
      %v3816 = vld [vmem:[%s3 + $0x48] sm:$0xf]
      %v3817 = vld [vmem:[%s3 + $0x4c] sm:$0xf]
      %v3818 = vld [vmem:[%s3 + $0x50] sm:$0xf]
      %v3819 = vld [vmem:[%s3 + $0x54] sm:$0xf]
      %v3820 = vld [vmem:[%s3 + $0x58] sm:$0xf]
      %v3821 = vld [vmem:[%s3 + $0x5c] sm:$0xf]
      %v3822 = vld [vmem:[%s3 + $0x60] sm:$0xf]
      %v3823 = vld [vmem:[%s3 + $0x64] sm:$0xf]
      %v3824 = vld [vmem:[%s3 + $0x68] sm:$0xf]
      %v3825 = vld [vmem:[%s3 + $0x6c] sm:$0xf]
      %v3826 = vld [vmem:[%s3 + $0x70] sm:$0xf]
      %v3827 = vld [vmem:[%s3 + $0x74] sm:$0xf]
      %v3828 = vld [vmem:[%s3 + $0x78] sm:$0xf]
      %v3829 = vld [vmem:[%s3 + $0x7c] sm:$0xf]
      %v3830 = vld [vmem:[%s3 + $0x80] sm:$0xf]
      %v3831 = vld [vmem:[%s3 + $0x84] sm:$0xf]
      %v3832 = vld [vmem:[%s3 + $0x88] sm:$0xf]
      %v3833 = vld [vmem:[%s3 + $0x8c] sm:$0xf]
      %v3834 = vld [vmem:[%s3 + $0x90] sm:$0xf]
      %v3835 = vld [vmem:[%s3 + $0x94] sm:$0xf]
      %v3836 = vld [vmem:[%s3 + $0x98] sm:$0xf]
      %v3837 = vld [vmem:[%s3 + $0x9c] sm:$0xf]
      %v3838 = vld [vmem:[%s3 + $0xa0] sm:$0xf]
      %v3839 = vld [vmem:[%s3 + $0xa4] sm:$0xf]
      %v3840 = vld [vmem:[%s3 + $0xa8] sm:$0xf]
      %v3841 = vld [vmem:[%s3 + $0xac] sm:$0xf]
      %v3842 = vld [vmem:[%s3 + $0xb0] sm:$0xf]
      %v3843 = vld [vmem:[%s3 + $0xb4] sm:$0xf]
      %v3844 = vld [vmem:[%s3 + $0xb8] sm:$0xf]
      %v3845 = vld [vmem:[%s3 + $0xbc] sm:$0xf]
      %v3846 = vld [vmem:[%s3 + $0xc0] sm:$0xf]
      %v3847 = vld [vmem:[%s3 + $0xc4] sm:$0xf]
      %v3848 = vld [vmem:[%s3 + $0xc8] sm:$0xf]
      %v3849 = vld [vmem:[%s3 + $0xcc] sm:$0xf]
      %v3850 = vld [vmem:[%s3 + $0xd0] sm:$0xf]
      %v3851 = vld [vmem:[%s3 + $0xd4] sm:$0xf]
      %v3852 = vld [vmem:[%s3 + $0xd8] sm:$0xf]
      %v3853 = vld [vmem:[%s3 + $0xdc] sm:$0xf]
      %v3854 = vld [vmem:[%s3 + $0xe0] sm:$0xf]
      %v3855 = vld [vmem:[%s3 + $0xe4] sm:$0xf]
      %v3856 = vld [vmem:[%s3 + $0xe8] sm:$0xf]
      %v3857 = vld [vmem:[%s3 + $0xec] sm:$0xf]
      %v3858 = vld [vmem:[%s3 + $0xf0] sm:$0xf]
      %v3859 = vld [vmem:[%s3 + $0xf4] sm:$0xf]
      %v3860 = vld [vmem:[%s3 + $0xf8] sm:$0xf]
      %v3861 = vld [vmem:[%s3 + $0xfc] sm:$0xf]
      %v3862 = vld [vmem:[%s3 + $0x100] sm:$0xf]
      %v3863 = vld [vmem:[%s3 + $0x104] sm:$0xf]
      %v3864 = vld [vmem:[%s3 + $0x108] sm:$0xf]
      %v3865 = vld [vmem:[%s3 + $0x10c] sm:$0xf]
      %v3866 = vld [vmem:[%s3 + $0x110] sm:$0xf]
      %v3867 = vld [vmem:[%s3 + $0x114] sm:$0xf]
      %v3868 = vld [vmem:[%s3 + $0x118] sm:$0xf]
      %v3869 = vld [vmem:[%s3 + $0x11c] sm:$0xf]
      %v3870 = vld [vmem:[%s3 + $0x120] sm:$0xf]
      %v3871 = vld [vmem:[%s3 + $0x124] sm:$0xf]
      %v3872 = vld [vmem:[%s3 + $0x128] sm:$0xf]
      %v3873 = vld [vmem:[%s3 + $0x12c] sm:$0xf]
      %v3874 = vld [vmem:[%s3 + $0x130] sm:$0xf]
      %v3875 = vld [vmem:[%s3 + $0x134] sm:$0xf]
      %v3876 = vld [vmem:[%s3 + $0x138] sm:$0xf]
      %v3877 = vld [vmem:[%s3 + $0x13c] sm:$0xf]
      %v3878 = vld [vmem:[%s3 + $0x140] sm:$0xf]
      %v3879 = vld [vmem:[%s3 + $0x144] sm:$0xf]
      %v3880 = vld [vmem:[%s3 + $0x148] sm:$0xf]
      %v3881 = vld [vmem:[%s3 + $0x14c] sm:$0xf]
      %v3882 = vld [vmem:[%s3 + $0x150] sm:$0xf]
      %v3883 = vld [vmem:[%s3 + $0x154] sm:$0xf]
      %v3884 = vld [vmem:[%s3 + $0x158] sm:$0xf]
      %v3885 = vld [vmem:[%s3 + $0x15c] sm:$0xf]
      %v3886 = vld [vmem:[%s3 + $0x160] sm:$0xf]
      %v3887 = vld [vmem:[%s3 + $0x164] sm:$0xf]
      %v3888 = vld [vmem:[%s3 + $0x168] sm:$0xf]
      %v3889 = vld [vmem:[%s3 + $0x16c] sm:$0xf]
      %v3890 = vld [vmem:[%s3 + $0x170] sm:$0xf]
      %v3891 = vld [vmem:[%s3 + $0x174] sm:$0xf]
      %v3892 = vld [vmem:[%s3 + $0x178] sm:$0xf]
      %v3893 = vld [vmem:[%s3 + $0x17c] sm:$0xf]
      %v3894 = vld [vmem:[%s3 + $0x180] sm:$0xf]
      %v3895 = vld [vmem:[%s3 + $0x184] sm:$0xf]
      %v3896 = vld [vmem:[%s3 + $0x188] sm:$0xf]
      %v3897 = vld [vmem:[%s3 + $0x18c] sm:$0xf]
      %v3898 = vld [vmem:[%s3 + $0x190] sm:$0xf]
      %v3899 = vld [vmem:[%s3 + $0x194] sm:$0xf]
      %v3900 = vld [vmem:[%s3 + $0x198] sm:$0xf]
      %v3901 = vld [vmem:[%s3 + $0x19c] sm:$0xf]
      %v3902 = vld [vmem:[%s3 + $0x1a0] sm:$0xf]
      %v3903 = vld [vmem:[%s3 + $0x1a4] sm:$0xf]
      %v3904 = vld [vmem:[%s3 + $0x1a8] sm:$0xf]
      %v3905 = vld [vmem:[%s3 + $0x1ac] sm:$0xf]
      %v3906 = vld [vmem:[%s3 + $0x1b0] sm:$0xf]
      %v3907 = vld [vmem:[%s3 + $0x1b4] sm:$0xf]
      %v3908 = vld [vmem:[%s3 + $0x1b8] sm:$0xf]
      %v3909 = vld [vmem:[%s3 + $0x1bc] sm:$0xf]
      %v3910 = vld [vmem:[%s3 + $0x1c0] sm:$0xf]
      %v3911 = vld [vmem:[%s3 + $0x1c4] sm:$0xf]
      %v3912 = vld [vmem:[%s3 + $0x1c8] sm:$0xf]
      %v3913 = vld [vmem:[%s3 + $0x1cc] sm:$0xf]
      %v3914 = vld [vmem:[%s3 + $0x1d0] sm:$0xf]
      %v3915 = vld [vmem:[%s3 + $0x1d4] sm:$0xf]
      %v3916 = vld [vmem:[%s3 + $0x1d8] sm:$0xf]
      %v3917 = vld [vmem:[%s3 + $0x1dc] sm:$0xf]
      %v3918 = vld [vmem:[%s3 + $0x1e0] sm:$0xf]
      %v3919 = vld [vmem:[%s3 + $0x1e4] sm:$0xf]
      %v3920 = vld [vmem:[%s3 + $0x1e8] sm:$0xf]
      %v3921 = vld [vmem:[%s3 + $0x1ec] sm:$0xf]
      %v3922 = vld [vmem:[%s3 + $0x1f0] sm:$0xf]
      %v3923 = vld [vmem:[%s3 + $0x1f4] sm:$0xf]
      %v3924 = vld [vmem:[%s3 + $0x1f8] sm:$0xf]
      %v3925 = vld [vmem:[%s3 + $0x1fc] sm:$0xf]
      %v3926 = vld [vmem:[%s3 + $0x200] sm:$0xf]
      %v3927 = vld [vmem:[%s3 + $0x204] sm:$0xf]
      %v3928 = vld [vmem:[%s3 + $0x208] sm:$0xf]
      %v3929 = vld [vmem:[%s3 + $0x20c] sm:$0xf]
      %v3930 = vld [vmem:[%s3 + $0x210] sm:$0xf]
      %v3931 = vld [vmem:[%s3 + $0x214] sm:$0xf]
      %v3932 = vld [vmem:[%s3 + $0x218] sm:$0xf]
      %v3933 = vld [vmem:[%s3 + $0x21c] sm:$0xf]
      %v3934 = vld [vmem:[%s3 + $0x220] sm:$0xf]
      %v3935 = vld [vmem:[%s3 + $0x224] sm:$0xf]
      %v3936 = vld [vmem:[%s3 + $0x228] sm:$0xf]
      %v3937 = vld [vmem:[%s3 + $0x22c] sm:$0xf]
      %v3938 = vld [vmem:[%s3 + $0x230] sm:$0xf]
      %v3939 = vld [vmem:[%s3 + $0x234] sm:$0xf]
      %v3940 = vld [vmem:[%s3 + $0x238] sm:$0xf]
      %v3941 = vld [vmem:[%s3 + $0x23c] sm:$0xf]
      %v3942 = vld [vmem:[%s3 + $0x240] sm:$0xf]
      %v3943 = vld [vmem:[%s3 + $0x244] sm:$0xf]
      %v3944 = vld [vmem:[%s3 + $0x248] sm:$0xf]
      %v3945 = vld [vmem:[%s3 + $0x24c] sm:$0xf]
      %v3946 = vld [vmem:[%s3 + $0x250] sm:$0xf]
      %v3947 = vld [vmem:[%s3 + $0x254] sm:$0xf]
      %v3948 = vld [vmem:[%s3 + $0x258] sm:$0xf]
      %v3949 = vld [vmem:[%s3 + $0x25c] sm:$0xf]
      %v3950 = vld [vmem:[%s3 + $0x260] sm:$0xf]
      %v3951 = vld [vmem:[%s3 + $0x264] sm:$0xf]
      %v3952 = vld [vmem:[%s3 + $0x268] sm:$0xf]
      %v3953 = vld [vmem:[%s3 + $0x26c] sm:$0xf]
      %v3954 = vld [vmem:[%s3 + $0x270] sm:$0xf]
      %v3955 = vld [vmem:[%s3 + $0x274] sm:$0xf]
      %v3956 = vld [vmem:[%s3 + $0x278] sm:$0xf]
      %v3957 = vld [vmem:[%s3 + $0x27c] sm:$0xf]
      %v3958 = vld [vmem:[%s4] sm:$0x1]
      %v3960 = vlaneseq
      %v3961 = vshrl.u32 %v3960, 7
      %v3962 = vsub.s32 0, %v3961
      %v3963 = vrot.slane %v3958, %v3962
      %v4125 = vunpack.c.l.b16 %v3798
      %v4126 = vunpack.c.l.b16 %v3799
      %v4127 = vunpack.c.l.b16 %v3800
      %v4128 = vunpack.c.l.b16 %v3801
      %v4129 = vunpack.c.l.b16 %v3802
      %v4130 = vunpack.c.l.b16 %v3803
      %v4131 = vunpack.c.l.b16 %v3804
      %v4132 = vunpack.c.l.b16 %v3805
      %v4133 = vunpack.c.l.b16 %v3806
      %v4134 = vunpack.c.l.b16 %v3807
      %v4135 = vunpack.c.l.b16 %v3808
      %v4136 = vunpack.c.l.b16 %v3809
      %v4137 = vunpack.c.l.b16 %v3810
      %v4138 = vunpack.c.l.b16 %v3811
      %v4139 = vunpack.c.l.b16 %v3812
      %v4140 = vunpack.c.l.b16 %v3813
      %v4141 = vunpack.c.l.b16 %v3814
      %v4142 = vunpack.c.l.b16 %v3815
      %v4143 = vunpack.c.l.b16 %v3816
      %v4144 = vunpack.c.l.b16 %v3817
      %v4145 = vunpack.c.l.b16 %v3818
      %v4146 = vunpack.c.l.b16 %v3819
      %v4147 = vunpack.c.l.b16 %v3820
      %v4148 = vunpack.c.l.b16 %v3821
      %v4149 = vunpack.c.l.b16 %v3822
      %v4150 = vunpack.c.l.b16 %v3823
      %v4151 = vunpack.c.l.b16 %v3824
      %v4152 = vunpack.c.l.b16 %v3825
      %v4153 = vunpack.c.l.b16 %v3826
      %v4154 = vunpack.c.l.b16 %v3827
      %v4155 = vunpack.c.l.b16 %v3828
      %v4156 = vunpack.c.l.b16 %v3829
      %v4157 = vunpack.c.l.b16 %v3830
      %v4158 = vunpack.c.l.b16 %v3831
      %v4159 = vunpack.c.l.b16 %v3832
      %v4160 = vunpack.c.l.b16 %v3833
      %v4161 = vunpack.c.l.b16 %v3834
      %v4162 = vunpack.c.l.b16 %v3835
      %v4163 = vunpack.c.l.b16 %v3836
      %v4164 = vunpack.c.l.b16 %v3837
      %v4165 = vunpack.c.l.b16 %v3838
      %v4166 = vunpack.c.l.b16 %v3839
      %v4167 = vunpack.c.l.b16 %v3840
      %v4168 = vunpack.c.l.b16 %v3841
      %v4169 = vunpack.c.l.b16 %v3842
      %v4170 = vunpack.c.l.b16 %v3843
      %v4171 = vunpack.c.l.b16 %v3844
      %v4172 = vunpack.c.l.b16 %v3845
      %v4173 = vunpack.c.l.b16 %v3846
      %v4174 = vunpack.c.l.b16 %v3847
      %v4175 = vunpack.c.l.b16 %v3848
      %v4176 = vunpack.c.l.b16 %v3849
      %v4177 = vunpack.c.l.b16 %v3850
      %v4178 = vunpack.c.l.b16 %v3851
      %v4179 = vunpack.c.l.b16 %v3852
      %v4180 = vunpack.c.l.b16 %v3853
      %v4181 = vunpack.c.l.b16 %v3854
      %v4182 = vunpack.c.l.b16 %v3855
      %v4183 = vunpack.c.l.b16 %v3856
      %v4184 = vunpack.c.l.b16 %v3857
      %v4185 = vunpack.c.l.b16 %v3858
      %v4186 = vunpack.c.l.b16 %v3859
      %v4187 = vunpack.c.l.b16 %v3860
      %v4188 = vunpack.c.l.b16 %v3861
      %v4189 = vunpack.c.l.b16 %v3862
      %v4190 = vunpack.c.l.b16 %v3863
      %v4191 = vunpack.c.l.b16 %v3864
      %v4192 = vunpack.c.l.b16 %v3865
      %v4193 = vunpack.c.l.b16 %v3866
      %v4194 = vunpack.c.l.b16 %v3867
      %v4195 = vunpack.c.l.b16 %v3868
      %v4196 = vunpack.c.l.b16 %v3869
      %v4197 = vunpack.c.l.b16 %v3870
      %v4198 = vunpack.c.l.b16 %v3871
      %v4199 = vunpack.c.l.b16 %v3872
      %v4200 = vunpack.c.l.b16 %v3873
      %v4201 = vunpack.c.l.b16 %v3874
      %v4202 = vunpack.c.l.b16 %v3875
      %v4203 = vunpack.c.l.b16 %v3876
      %v4204 = vunpack.c.l.b16 %v3877
      %v4205 = vunpack.c.l.b16 %v3878
      %v4206 = vunpack.c.l.b16 %v3879
      %v4207 = vunpack.c.l.b16 %v3880
      %v4208 = vunpack.c.l.b16 %v3881
      %v4209 = vunpack.c.l.b16 %v3882
      %v4210 = vunpack.c.l.b16 %v3883
      %v4211 = vunpack.c.l.b16 %v3884
      %v4212 = vunpack.c.l.b16 %v3885
      %v4213 = vunpack.c.l.b16 %v3886
      %v4214 = vunpack.c.l.b16 %v3887
      %v4215 = vunpack.c.l.b16 %v3888
      %v4216 = vunpack.c.l.b16 %v3889
      %v4217 = vunpack.c.l.b16 %v3890
      %v4218 = vunpack.c.l.b16 %v3891
      %v4219 = vunpack.c.l.b16 %v3892
      %v4220 = vunpack.c.l.b16 %v3893
      %v4221 = vunpack.c.l.b16 %v3894
      %v4222 = vunpack.c.l.b16 %v3895
      %v4223 = vunpack.c.l.b16 %v3896
      %v4224 = vunpack.c.l.b16 %v3897
      %v4225 = vunpack.c.l.b16 %v3898
      %v4226 = vunpack.c.l.b16 %v3899
      %v4227 = vunpack.c.l.b16 %v3900
      %v4228 = vunpack.c.l.b16 %v3901
      %v4229 = vunpack.c.l.b16 %v3902
      %v4230 = vunpack.c.l.b16 %v3903
      %v4231 = vunpack.c.l.b16 %v3904
      %v4232 = vunpack.c.l.b16 %v3905
      %v4233 = vunpack.c.l.b16 %v3906
      %v4234 = vunpack.c.l.b16 %v3907
      %v4235 = vunpack.c.l.b16 %v3908
      %v4236 = vunpack.c.l.b16 %v3909
      %v4237 = vunpack.c.l.b16 %v3910
      %v4238 = vunpack.c.l.b16 %v3911
      %v4239 = vunpack.c.l.b16 %v3912
      %v4240 = vunpack.c.l.b16 %v3913
      %v4241 = vunpack.c.l.b16 %v3914
      %v4242 = vunpack.c.l.b16 %v3915
      %v4243 = vunpack.c.l.b16 %v3916
      %v4244 = vunpack.c.l.b16 %v3917
      %v4245 = vunpack.c.l.b16 %v3918
      %v4246 = vunpack.c.l.b16 %v3919
      %v4247 = vunpack.c.l.b16 %v3920
      %v4248 = vunpack.c.l.b16 %v3921
      %v4249 = vunpack.c.l.b16 %v3922
      %v4250 = vunpack.c.l.b16 %v3923
      %v4251 = vunpack.c.l.b16 %v3924
      %v4252 = vunpack.c.l.b16 %v3925
      %v4253 = vunpack.c.l.b16 %v3926
      %v4254 = vunpack.c.l.b16 %v3927
      %v4255 = vunpack.c.l.b16 %v3928
      %v4256 = vunpack.c.l.b16 %v3929
      %v4257 = vunpack.c.l.b16 %v3930
      %v4258 = vunpack.c.l.b16 %v3931
      %v4259 = vunpack.c.l.b16 %v3932
      %v4260 = vunpack.c.l.b16 %v3933
      %v4261 = vunpack.c.l.b16 %v3934
      %v4262 = vunpack.c.l.b16 %v3935
      %v4263 = vunpack.c.l.b16 %v3936
      %v4264 = vunpack.c.l.b16 %v3937
      %v4265 = vunpack.c.l.b16 %v3938
      %v4266 = vunpack.c.l.b16 %v3939
      %v4267 = vunpack.c.l.b16 %v3940
      %v4268 = vunpack.c.l.b16 %v3941
      %v4269 = vunpack.c.l.b16 %v3942
      %v4270 = vunpack.c.l.b16 %v3943
      %v4271 = vunpack.c.l.b16 %v3944
      %v4272 = vunpack.c.l.b16 %v3945
      %v4273 = vunpack.c.l.b16 %v3946
      %v4274 = vunpack.c.l.b16 %v3947
      %v4275 = vunpack.c.l.b16 %v3948
      %v4276 = vunpack.c.l.b16 %v3949
      %v4277 = vunpack.c.l.b16 %v3950
      %v4278 = vunpack.c.l.b16 %v3951
      %v4279 = vunpack.c.l.b16 %v3952
      %v4280 = vunpack.c.l.b16 %v3953
      %v4281 = vunpack.c.l.b16 %v3954
      %v4282 = vunpack.c.l.b16 %v3955
      %v4283 = vunpack.c.l.b16 %v3956
      %v4284 = vunpack.c.l.b16 %v3957
      %v4285 = vpack.c.b16 %v4126, %v4125
      %v4286 = vpack.c.b16 %v4128, %v4127
      %v4287 = vpack.c.b16 %v4130, %v4129
      %v4288 = vpack.c.b16 %v4132, %v4131
      %v4289 = vpack.c.b16 %v4134, %v4133
      %v4290 = vpack.c.b16 %v4136, %v4135
      %v4291 = vpack.c.b16 %v4138, %v4137
      %v4292 = vpack.c.b16 %v4140, %v4139
      %v4293 = vpack.c.b16 %v4142, %v4141
      %v4294 = vpack.c.b16 %v4144, %v4143
      %v4295 = vpack.c.b16 %v4146, %v4145
      %v4296 = vpack.c.b16 %v4148, %v4147
      %v4297 = vpack.c.b16 %v4150, %v4149
      %v4298 = vpack.c.b16 %v4152, %v4151
      %v4299 = vpack.c.b16 %v4154, %v4153
      %v4300 = vpack.c.b16 %v4156, %v4155
      %v4301 = vpack.c.b16 %v4158, %v4157
      %v4302 = vpack.c.b16 %v4160, %v4159
      %v4303 = vpack.c.b16 %v4162, %v4161
      %v4304 = vpack.c.b16 %v4164, %v4163
      %v4305 = vpack.c.b16 %v4166, %v4165
      %v4306 = vpack.c.b16 %v4168, %v4167
      %v4307 = vpack.c.b16 %v4170, %v4169
      %v4308 = vpack.c.b16 %v4172, %v4171
      %v4309 = vpack.c.b16 %v4174, %v4173
      %v4310 = vpack.c.b16 %v4176, %v4175
      %v4311 = vpack.c.b16 %v4178, %v4177
      %v4312 = vpack.c.b16 %v4180, %v4179
      %v4313 = vpack.c.b16 %v4182, %v4181
      %v4314 = vpack.c.b16 %v4184, %v4183
      %v4315 = vpack.c.b16 %v4186, %v4185
      %v4316 = vpack.c.b16 %v4188, %v4187
      %v4317 = vpack.c.b16 %v4190, %v4189
      %v4318 = vpack.c.b16 %v4192, %v4191
      %v4319 = vpack.c.b16 %v4194, %v4193
      %v4320 = vpack.c.b16 %v4196, %v4195
      %v4321 = vpack.c.b16 %v4198, %v4197
      %v4322 = vpack.c.b16 %v4200, %v4199
      %v4323 = vpack.c.b16 %v4202, %v4201
      %v4324 = vpack.c.b16 %v4204, %v4203
      %v4325 = vpack.c.b16 %v4206, %v4205
      %v4326 = vpack.c.b16 %v4208, %v4207
      %v4327 = vpack.c.b16 %v4210, %v4209
      %v4328 = vpack.c.b16 %v4212, %v4211
      %v4329 = vpack.c.b16 %v4214, %v4213
      %v4330 = vpack.c.b16 %v4216, %v4215
      %v4331 = vpack.c.b16 %v4218, %v4217
      %v4332 = vpack.c.b16 %v4220, %v4219
      %v4333 = vpack.c.b16 %v4222, %v4221
      %v4334 = vpack.c.b16 %v4224, %v4223
      %v4335 = vpack.c.b16 %v4226, %v4225
      %v4336 = vpack.c.b16 %v4228, %v4227
      %v4337 = vpack.c.b16 %v4230, %v4229
      %v4338 = vpack.c.b16 %v4232, %v4231
      %v4339 = vpack.c.b16 %v4234, %v4233
      %v4340 = vpack.c.b16 %v4236, %v4235
      %v4341 = vpack.c.b16 %v4238, %v4237
      %v4342 = vpack.c.b16 %v4240, %v4239
      %v4343 = vpack.c.b16 %v4242, %v4241
      %v4344 = vpack.c.b16 %v4244, %v4243
      %v4345 = vpack.c.b16 %v4246, %v4245
      %v4346 = vpack.c.b16 %v4248, %v4247
      %v4347 = vpack.c.b16 %v4250, %v4249
      %v4348 = vpack.c.b16 %v4252, %v4251
      %v4349 = vpack.c.b16 %v4254, %v4253
      %v4350 = vpack.c.b16 %v4256, %v4255
      %v4351 = vpack.c.b16 %v4258, %v4257
      %v4352 = vpack.c.b16 %v4260, %v4259
      %v4353 = vpack.c.b16 %v4262, %v4261
      %v4354 = vpack.c.b16 %v4264, %v4263
      %v4355 = vpack.c.b16 %v4266, %v4265
      %v4356 = vpack.c.b16 %v4268, %v4267
      %v4357 = vpack.c.b16 %v4270, %v4269
      %v4358 = vpack.c.b16 %v4272, %v4271
      %v4359 = vpack.c.b16 %v4274, %v4273
      %v4360 = vpack.c.b16 %v4276, %v4275
      %v4361 = vpack.c.b16 %v4278, %v4277
      %v4362 = vpack.c.b16 %v4280, %v4279
      %v4363 = vpack.c.b16 %v4282, %v4281
      %v4364 = vpack.c.b16 %v4284, %v4283
      %4445 = vmatprep.subr.bf16.mxu0 0
      %4446 = vmatpush1.bf16.msra.mxu0 %v4285
      %4447 = vmatprep.subr.bf16.mxu0 0
      %4448 = vmatpush1.bf16.msra.mxu0 %v4286
      %4449 = vmatprep.subr.bf16.mxu0 0
      %4450 = vmatpush1.bf16.msra.mxu0 %v4287
      %4451 = vmatprep.subr.bf16.mxu0 0
      %4452 = vmatpush1.bf16.msra.mxu0 %v4288
      %4453 = vmatprep.subr.bf16.mxu0 0
      %4454 = vmatpush1.bf16.msra.mxu0 %v4289
      %4455 = vmatprep.subr.bf16.mxu0 0
      %4456 = vmatpush1.bf16.msra.mxu0 %v4290
      %4457 = vmatprep.subr.bf16.mxu0 0
      %4458 = vmatpush1.bf16.msra.mxu0 %v4291
      %4459 = vmatprep.subr.bf16.mxu0 0
      %4460 = vmatpush1.bf16.msra.mxu0 %v4292
      %4461 = vmatprep.subr.bf16.mxu0 0
      %4462 = vmatpush1.bf16.msra.mxu0 %v4293
      %4463 = vmatprep.subr.bf16.mxu0 0
      %4464 = vmatpush1.bf16.msra.mxu0 %v4294
      %4465 = vmatprep.subr.bf16.mxu0 0
      %4466 = vmatpush1.bf16.msra.mxu0 %v4295
      %4467 = vmatprep.subr.bf16.mxu0 0
      %4468 = vmatpush1.bf16.msra.mxu0 %v4296
      %4469 = vmatprep.subr.bf16.mxu0 0
      %4470 = vmatpush1.bf16.msra.mxu0 %v4297
      %4471 = vmatprep.subr.bf16.mxu0 0
      %4472 = vmatpush1.bf16.msra.mxu0 %v4298
      %4473 = vmatprep.subr.bf16.mxu0 0
      %4474 = vmatpush1.bf16.msra.mxu0 %v4299
      %4475 = vmatprep.subr.bf16.mxu0 0
      %4476 = vmatpush1.bf16.msra.mxu0 %v4300
      %4477 = vmatprep.mubr.bf16.mxu0 %v3759
      %4478 = vmatmul.mubr.bf16.gmra.mrb[0].mxu0 %v3758
      %v4479 = vpop.f32.mrb[0].mxu0
      %v4480 = vadd.f32 %v3963, %v4479
      %v4481 = vpop.f32.mrb[0].mxu0
      %v4482 = vpop.f32.mrb[0].mxu0
      %v4483 = vadd.f32 %v3963, %v4482
      %v4484 = vpop.f32.mrb[0].mxu0
      %4485 = vmatprep.mubr.bf16.mxu0 %v3769
      %4486 = vmatmul.mubr.bf16.gmra.mrb[0].mxu0 %v3768
      %v4487 = vpop.f32.mrb[0].mxu0
      %v4488 = vadd.f32 %v3963, %v4487
      %v4489 = vpop.f32.mrb[0].mxu0
      %v4490 = vpop.f32.mrb[0].mxu0
      %v4491 = vadd.f32 %v3963, %v4490
      %v4492 = vpop.f32.mrb[0].mxu0
      %4493 = vmatprep.mubr.bf16.mxu0 %v3779
      %4494 = vmatmul.mubr.bf16.gmra.mrb[0].mxu0 %v3778
      %v4495 = vpop.f32.mrb[0].mxu0
      %v4496 = vadd.f32 %v3963, %v4495
      %v4497 = vpop.f32.mrb[0].mxu0
      %v4498 = vpop.f32.mrb[0].mxu0
      %v4499 = vadd.f32 %v3963, %v4498
      %v4500 = vpop.f32.mrb[0].mxu0
      %4501 = vmatprep.mubr.bf16.mxu0 %v3789
      %4502 = vmatmul.mubr.bf16.gmra.mrb[0].mxu0 %v3788
      %v4503 = vpop.f32.mrb[0].mxu0
      %v4504 = vadd.f32 %v3963, %v4503
      %v4505 = vpop.f32.mrb[0].mxu0
      %v4506 = vpop.f32.mrb[0].mxu0
      %v4507 = vadd.f32 %v3963, %v4506
      %v4508 = vpop.f32.mrb[0].mxu0
      %4509 = vdwg.mxu0
      %4510 = vmatprep.subr.bf16.mxu0 0
      %4511 = vmatpush1.bf16.msra.mxu0 %v4301
      %4512 = vmatprep.subr.bf16.mxu0 0
      %4513 = vmatpush1.bf16.msra.mxu0 %v4302
      %4514 = vmatprep.subr.bf16.mxu0 0
      %4515 = vmatpush1.bf16.msra.mxu0 %v4303
      %4516 = vmatprep.subr.bf16.mxu0 0
      %4517 = vmatpush1.bf16.msra.mxu0 %v4304
      %4518 = vmatprep.subr.bf16.mxu0 0
      %4519 = vmatpush1.bf16.msra.mxu0 %v4305
      %4520 = vmatprep.subr.bf16.mxu0 0
      %4521 = vmatpush1.bf16.msra.mxu0 %v4306
      %4522 = vmatprep.subr.bf16.mxu0 0
      %4523 = vmatpush1.bf16.msra.mxu0 %v4307
      %4524 = vmatprep.subr.bf16.mxu0 0
      %4525 = vmatpush1.bf16.msra.mxu0 %v4308
      %4526 = vmatprep.subr.bf16.mxu0 0
      %4527 = vmatpush1.bf16.msra.mxu0 %v4309
      %4528 = vmatprep.subr.bf16.mxu0 0
      %4529 = vmatpush1.bf16.msra.mxu0 %v4310
      %4530 = vmatprep.subr.bf16.mxu0 0
      %4531 = vmatpush1.bf16.msra.mxu0 %v4311
      %4532 = vmatprep.subr.bf16.mxu0 0
      %4533 = vmatpush1.bf16.msra.mxu0 %v4312
      %4534 = vmatprep.subr.bf16.mxu0 0
      %4535 = vmatpush1.bf16.msra.mxu0 %v4313
      %4536 = vmatprep.subr.bf16.mxu0 0
      %4537 = vmatpush1.bf16.msra.mxu0 %v4314
      %4538 = vmatprep.subr.bf16.mxu0 0
      %4539 = vmatpush1.bf16.msra.mxu0 %v4315
      %4540 = vmatprep.subr.bf16.mxu0 0
      %4541 = vmatpush1.bf16.msra.mxu0 %v4316
      %4542 = vmatprep.mubr.bf16.mxu0 %v3761
      %4543 = vmatmul.mubr.bf16.gmra.mrb[0].mxu0 %v3760
      %v4544 = vpop.f32.mrb[0].mxu0
      %v4545 = vadd.f32 %v4480, %v4544
      %v4546 = vpop.f32.mrb[0].mxu0
      %v4547 = vpop.f32.mrb[0].mxu0
      %v4548 = vadd.f32 %v4483, %v4547
      %v4549 = vpop.f32.mrb[0].mxu0
      %4550 = vmatprep.mubr.bf16.mxu0 %v3771
      %4551 = vmatmul.mubr.bf16.gmra.mrb[0].mxu0 %v3770
      %v4552 = vpop.f32.mrb[0].mxu0
      %v4553 = vadd.f32 %v4488, %v4552
      %v4554 = vpop.f32.mrb[0].mxu0
      %v4555 = vpop.f32.mrb[0].mxu0
      %v4556 = vadd.f32 %v4491, %v4555
      %v4557 = vpop.f32.mrb[0].mxu0
      %4558 = vmatprep.mubr.bf16.mxu0 %v3781
      %4559 = vmatmul.mubr.bf16.gmra.mrb[0].mxu0 %v3780
      %v4560 = vpop.f32.mrb[0].mxu0
      %v4561 = vadd.f32 %v4496, %v4560
      %v4562 = vpop.f32.mrb[0].mxu0
      %v4563 = vpop.f32.mrb[0].mxu0
      %v4564 = vadd.f32 %v4499, %v4563
      %v4565 = vpop.f32.mrb[0].mxu0
      %4566 = vmatprep.mubr.bf16.mxu0 %v3791
      %4567 = vmatmul.mubr.bf16.gmra.mrb[0].mxu0 %v3790
      %v4568 = vpop.f32.mrb[0].mxu0
      %v4569 = vadd.f32 %v4504, %v4568
      %v4570 = vpop.f32.mrb[0].mxu0
      %v4571 = vpop.f32.mrb[0].mxu0
      %v4572 = vadd.f32 %v4507, %v4571
      %v4573 = vpop.f32.mrb[0].mxu0
      %4574 = vdwg.mxu0
      %4575 = vmatprep.subr.bf16.mxu0 0
      %4576 = vmatpush1.bf16.msra.mxu0 %v4317
      %4577 = vmatprep.subr.bf16.mxu0 0
      %4578 = vmatpush1.bf16.msra.mxu0 %v4318
      %4579 = vmatprep.subr.bf16.mxu0 0
      %4580 = vmatpush1.bf16.msra.mxu0 %v4319
      %4581 = vmatprep.subr.bf16.mxu0 0
      %4582 = vmatpush1.bf16.msra.mxu0 %v4320
      %4583 = vmatprep.subr.bf16.mxu0 0
      %4584 = vmatpush1.bf16.msra.mxu0 %v4321
      %4585 = vmatprep.subr.bf16.mxu0 0
      %4586 = vmatpush1.bf16.msra.mxu0 %v4322
      %4587 = vmatprep.subr.bf16.mxu0 0
      %4588 = vmatpush1.bf16.msra.mxu0 %v4323
      %4589 = vmatprep.subr.bf16.mxu0 0
      %4590 = vmatpush1.bf16.msra.mxu0 %v4324
      %4591 = vmatprep.subr.bf16.mxu0 0
      %4592 = vmatpush1.bf16.msra.mxu0 %v4325
      %4593 = vmatprep.subr.bf16.mxu0 0
      %4594 = vmatpush1.bf16.msra.mxu0 %v4326
      %4595 = vmatprep.subr.bf16.mxu0 0
      %4596 = vmatpush1.bf16.msra.mxu0 %v4327
      %4597 = vmatprep.subr.bf16.mxu0 0
      %4598 = vmatpush1.bf16.msra.mxu0 %v4328
      %4599 = vmatprep.subr.bf16.mxu0 0
      %4600 = vmatpush1.bf16.msra.mxu0 %v4329
      %4601 = vmatprep.subr.bf16.mxu0 0
      %4602 = vmatpush1.bf16.msra.mxu0 %v4330
      %4603 = vmatprep.subr.bf16.mxu0 0
      %4604 = vmatpush1.bf16.msra.mxu0 %v4331
      %4605 = vmatprep.subr.bf16.mxu0 0
      %4606 = vmatpush1.bf16.msra.mxu0 %v4332
      %4607 = vmatprep.mubr.bf16.mxu0 %v3763
      %4608 = vmatmul.mubr.bf16.gmra.mrb[0].mxu0 %v3762
      %v4609 = vpop.f32.mrb[0].mxu0
      %v4610 = vadd.f32 %v4545, %v4609
      %v4611 = vpop.f32.mrb[0].mxu0
      %v4612 = vpop.f32.mrb[0].mxu0
      %v4613 = vadd.f32 %v4548, %v4612
      %v4614 = vpop.f32.mrb[0].mxu0
      %4615 = vmatprep.mubr.bf16.mxu0 %v3773
      %4616 = vmatmul.mubr.bf16.gmra.mrb[0].mxu0 %v3772
      %v4617 = vpop.f32.mrb[0].mxu0
      %v4618 = vadd.f32 %v4553, %v4617
      %v4619 = vpop.f32.mrb[0].mxu0
      %v4620 = vpop.f32.mrb[0].mxu0
      %v4621 = vadd.f32 %v4556, %v4620
      %v4622 = vpop.f32.mrb[0].mxu0
      %4623 = vmatprep.mubr.bf16.mxu0 %v3783
      %4624 = vmatmul.mubr.bf16.gmra.mrb[0].mxu0 %v3782
      %v4625 = vpop.f32.mrb[0].mxu0
      %v4626 = vadd.f32 %v4561, %v4625
      %v4627 = vpop.f32.mrb[0].mxu0
      %v4628 = vpop.f32.mrb[0].mxu0
      %v4629 = vadd.f32 %v4564, %v4628
      %v4630 = vpop.f32.mrb[0].mxu0
      %4631 = vmatprep.mubr.bf16.mxu0 %v3793
      %4632 = vmatmul.mubr.bf16.gmra.mrb[0].mxu0 %v3792
      %v4633 = vpop.f32.mrb[0].mxu0
      %v4634 = vadd.f32 %v4569, %v4633
      %v4635 = vpop.f32.mrb[0].mxu0
      %v4636 = vpop.f32.mrb[0].mxu0
      %v4637 = vadd.f32 %v4572, %v4636
      %v4638 = vpop.f32.mrb[0].mxu0
      %4639 = vdwg.mxu0
      %4640 = vmatprep.subr.bf16.mxu0 0
      %4641 = vmatpush1.bf16.msra.mxu0 %v4333
      %4642 = vmatprep.subr.bf16.mxu0 0
      %4643 = vmatpush1.bf16.msra.mxu0 %v4334
      %4644 = vmatprep.subr.bf16.mxu0 0
      %4645 = vmatpush1.bf16.msra.mxu0 %v4335
      %4646 = vmatprep.subr.bf16.mxu0 0
      %4647 = vmatpush1.bf16.msra.mxu0 %v4336
      %4648 = vmatprep.subr.bf16.mxu0 0
      %4649 = vmatpush1.bf16.msra.mxu0 %v4337
      %4650 = vmatprep.subr.bf16.mxu0 0
      %4651 = vmatpush1.bf16.msra.mxu0 %v4338
      %4652 = vmatprep.subr.bf16.mxu0 0
      %4653 = vmatpush1.bf16.msra.mxu0 %v4339
      %4654 = vmatprep.subr.bf16.mxu0 0
      %4655 = vmatpush1.bf16.msra.mxu0 %v4340
      %4656 = vmatprep.subr.bf16.mxu0 0
      %4657 = vmatpush1.bf16.msra.mxu0 %v4341
      %4658 = vmatprep.subr.bf16.mxu0 0
      %4659 = vmatpush1.bf16.msra.mxu0 %v4342
      %4660 = vmatprep.subr.bf16.mxu0 0
      %4661 = vmatpush1.bf16.msra.mxu0 %v4343
      %4662 = vmatprep.subr.bf16.mxu0 0
      %4663 = vmatpush1.bf16.msra.mxu0 %v4344
      %4664 = vmatprep.subr.bf16.mxu0 0
      %4665 = vmatpush1.bf16.msra.mxu0 %v4345
      %4666 = vmatprep.subr.bf16.mxu0 0
      %4667 = vmatpush1.bf16.msra.mxu0 %v4346
      %4668 = vmatprep.subr.bf16.mxu0 0
      %4669 = vmatpush1.bf16.msra.mxu0 %v4347
      %4670 = vmatprep.subr.bf16.mxu0 0
      %4671 = vmatpush1.bf16.msra.mxu0 %v4348
      %4672 = vmatprep.mubr.bf16.mxu0 %v3765
      %4673 = vmatmul.mubr.bf16.gmra.mrb[0].mxu0 %v3764
      %v4674 = vpop.f32.mrb[0].mxu0
      %v4675 = vadd.f32 %v4610, %v4674
      %v4676 = vpop.f32.mrb[0].mxu0
      %v4677 = vpop.f32.mrb[0].mxu0
      %v4678 = vadd.f32 %v4613, %v4677
      %v4679 = vpop.f32.mrb[0].mxu0
      %4680 = vmatprep.mubr.bf16.mxu0 %v3775
      %4681 = vmatmul.mubr.bf16.gmra.mrb[0].mxu0 %v3774
      %v4682 = vpop.f32.mrb[0].mxu0
      %v4683 = vadd.f32 %v4618, %v4682
      %v4684 = vpop.f32.mrb[0].mxu0
      %v4685 = vpop.f32.mrb[0].mxu0
      %v4686 = vadd.f32 %v4621, %v4685
      %v4687 = vpop.f32.mrb[0].mxu0
      %4688 = vmatprep.mubr.bf16.mxu0 %v3785
      %4689 = vmatmul.mubr.bf16.gmra.mrb[0].mxu0 %v3784
      %v4690 = vpop.f32.mrb[0].mxu0
      %v4691 = vadd.f32 %v4626, %v4690
      %v4692 = vpop.f32.mrb[0].mxu0
      %v4693 = vpop.f32.mrb[0].mxu0
      %v4694 = vadd.f32 %v4629, %v4693
      %v4695 = vpop.f32.mrb[0].mxu0
      %4696 = vmatprep.mubr.bf16.mxu0 %v3795
      %4697 = vmatmul.mubr.bf16.gmra.mrb[0].mxu0 %v3794
      %v4698 = vpop.f32.mrb[0].mxu0
      %v4699 = vadd.f32 %v4634, %v4698
      %v4700 = vpop.f32.mrb[0].mxu0
      %v4701 = vpop.f32.mrb[0].mxu0
      %v4702 = vadd.f32 %v4637, %v4701
      %v4703 = vpop.f32.mrb[0].mxu0
      %4704 = vdwg.mxu0
      %4705 = vmatprep.subr.bf16.mxu0 0
      %4706 = vmatpush1.bf16.msra.mxu0 %v4349
      %4707 = vmatprep.subr.bf16.mxu0 0
      %4708 = vmatpush1.bf16.msra.mxu0 %v4350
      %4709 = vmatprep.subr.bf16.mxu0 0
      %4710 = vmatpush1.bf16.msra.mxu0 %v4351
      %4711 = vmatprep.subr.bf16.mxu0 0
      %4712 = vmatpush1.bf16.msra.mxu0 %v4352
      %4713 = vmatprep.subr.bf16.mxu0 0
      %4714 = vmatpush1.bf16.msra.mxu0 %v4353
      %4715 = vmatprep.subr.bf16.mxu0 0
      %4716 = vmatpush1.bf16.msra.mxu0 %v4354
      %4717 = vmatprep.subr.bf16.mxu0 0
      %4718 = vmatpush1.bf16.msra.mxu0 %v4355
      %4719 = vmatprep.subr.bf16.mxu0 0
      %4720 = vmatpush1.bf16.msra.mxu0 %v4356
      %4721 = vmatprep.subr.bf16.mxu0 0
      %4722 = vmatpush1.bf16.msra.mxu0 %v4357
      %4723 = vmatprep.subr.bf16.mxu0 0
      %4724 = vmatpush1.bf16.msra.mxu0 %v4358
      %4725 = vmatprep.subr.bf16.mxu0 0
      %4726 = vmatpush1.bf16.msra.mxu0 %v4359
      %4727 = vmatprep.subr.bf16.mxu0 0
      %4728 = vmatpush1.bf16.msra.mxu0 %v4360
      %4729 = vmatprep.subr.bf16.mxu0 0
      %4730 = vmatpush1.bf16.msra.mxu0 %v4361
      %4731 = vmatprep.subr.bf16.mxu0 0
      %4732 = vmatpush1.bf16.msra.mxu0 %v4362
      %4733 = vmatprep.subr.bf16.mxu0 0
      %4734 = vmatpush1.bf16.msra.mxu0 %v4363
      %4735 = vmatprep.subr.bf16.mxu0 0
      %4736 = vmatpush1.bf16.msra.mxu0 %v4364
      %4737 = vmatprep.mubr.bf16.mxu0 %v3767
      %4738 = vmatmul.mubr.bf16.gmra.mrb[0].mxu0 %v3766
      %v4739 = vpop.f32.mrb[0].mxu0
      %v4740 = vadd.f32 %v4675, %v4739
      %v4741 = vpop.f32.mrb[0].mxu0
      %v4742 = vpop.f32.mrb[0].mxu0
      %v4743 = vadd.f32 %v4678, %v4742
      %v4744 = vpop.f32.mrb[0].mxu0
      %4745 = vmatprep.mubr.bf16.mxu0 %v3777
      %4746 = vmatmul.mubr.bf16.gmra.mrb[0].mxu0 %v3776
      %v4747 = vpop.f32.mrb[0].mxu0
      %v4748 = vadd.f32 %v4683, %v4747
      %v4749 = vpop.f32.mrb[0].mxu0
      %v4750 = vpop.f32.mrb[0].mxu0
      %v4751 = vadd.f32 %v4686, %v4750
      %v4752 = vpop.f32.mrb[0].mxu0
      %4753 = vmatprep.mubr.bf16.mxu0 %v3787
      %4754 = vmatmul.mubr.bf16.gmra.mrb[0].mxu0 %v3786
      %v4755 = vpop.f32.mrb[0].mxu0
      %v4756 = vadd.f32 %v4691, %v4755
      %v4757 = vpop.f32.mrb[0].mxu0
      %v4758 = vpop.f32.mrb[0].mxu0
      %v4759 = vadd.f32 %v4694, %v4758
      %v4760 = vpop.f32.mrb[0].mxu0
      %4761 = vmatprep.mubr.bf16.mxu0 %v3797
      %4762 = vmatmul.mubr.bf16.gmra.mrb[0].mxu0 %v3796
      %v4763 = vpop.f32.mrb[0].mxu0
      %v4764 = vadd.f32 %v4699, %v4763
      %v4765 = vpop.f32.mrb[0].mxu0
      %v4766 = vpop.f32.mrb[0].mxu0
      %v4767 = vadd.f32 %v4702, %v4766
      %v4768 = vpop.f32.mrb[0].mxu0
      %4769 = vdwg.mxu0
      %4770 = vst [vmem:[%s229] sm:$0xff] %v4740
      %4771 = vst [vmem:[%s229 + $0x8] sm:$0xff] %v4743
      %4772 = vst [vmem:[%s229 + $0x10] sm:$0xff] %v4748
      %4773 = vst [vmem:[%s229 + $0x18] sm:$0xff] %v4751
      %4774 = vst [vmem:[%s229 + $0x20] sm:$0xff] %v4756
      %4775 = vst [vmem:[%s229 + $0x28] sm:$0xff] %v4759
      %4776 = vst [vmem:[%s229 + $0x30] sm:$0xff] %v4764
      %4777 = vst [vmem:[%s229 + $0x38] sm:$0xff] %v4767
      %s4778 = smul.u32 8, %s16
      %p4779 = scmp.lt.s32.totalorder %s4778, 15
      %s4780 = scalar_select %p4779, %s4778, 15
      %s4781 = smul.addr %s4780, 8
      %s4782 = scalar_lea.vmem %s5, %s4781
      // Predicated region
      $region41: #{rgb_branch_forward.5} parent=39 // pred_check
        %p4783 = pneg %p144
      $region42: #{rgb_branch_forward.5} parent=39 // pred_check_branch
        %4785 = sbr.rel (%p4783) target = $region44
      $region43: #{rgb_branch_forward.5} parent=39 // pred_region
        %s4786 = smul.u32 8, %s16
      $region44: #{rgb_branch_forward.5} parent=39 // pred_fallthru
        _
    $region40: #{rgb_branch_forward.5} parent=5 // pred_fallthru
      _
    %p4787 = scmp.le.s32.totalorder 2, %s11
    // Predicated region
    $region45: #{rgb_branch_forward.5} parent=5 // pred_check
      %p4788 = pneg %p4787
    $region46: #{rgb_branch_forward.5} parent=5 // pred_check_branch
      %4790 = sbr.rel (%p4788) target = $region48
    $region47: #{rgb_branch_forward.5} parent=5 // pred_region
      %s4791 = ssub.s32 %s11, 2
      // Predicated region
      $region49: #{rgb_branch_forward.5} parent=47 // pred_check
        %p4792 = pneg %p150
      $region50: #{rgb_branch_forward.5} parent=47 // pred_check_branch
        %4794 = sbr.rel (%p4792) target = $region52
      $region51: #{rgb_branch_forward.5} parent=47 // pred_region
        %s4795 = smul.u32 8, %s17
        %p4796 = scmp.lt.s32.totalorder %s4795, 15
        %s4797 = scalar_select %p4796, %s4795, 15
        %s4798 = smul.addr %s4797, 8
        %s4799 = scalar_lea.vmem %s5, %s4798
      $region52: #{rgb_branch_forward.5} parent=47 // pred_fallthru
        _
    $region48: #{rgb_branch_forward.5} parent=5 // pred_fallthru
      _
  $region6: #{rgb_branch_forward.5} parent=0 // loop_footer
    %s15 = sadd.s32 1, %s11
  $region7: #{rgb_branch_forward.5} parent=0 // loop_footer_branch
    %10 = sbr.rel target = $region3
  $region8: #{rgb_branch_forward.5} parent=0 // loop_exit
    _

</llo_original>
